<compile_context>
chip_gen: v6e
topology: v6e:2x2x1
jax: 0.10.0
libtpu: 0.0.40
codegen_flags: <defaults>
</compile_context>

<pallas_src>
import math
import numpy as np
import jax
import jax.numpy as jnp
from jax.experimental import pallas as pl
from jax.experimental.pallas import tpu as pltpu

# ----------------------------- configuration --------------------------------
B          = 2
IN_CHANS   = 3
T          = 4
IMG        = 16
PATCH      = 8
TUBELET    = 2
EMBED_DIM  = 32
DEPTH      = 2
NUM_HEADS  = 4
MLP_RATIO  = 4.0
HEAD_DIM   = EMBED_DIM // NUM_HEADS
SCALE      = HEAD_DIM ** (-0.5)
LN_EPS     = 1e-5                                                  # nn.LayerNorm default
NUM_PATCHES = (IMG // PATCH) * (IMG // PATCH) * (T // TUBELET)     # 8
PATCH_DIM   = IN_CHANS * TUBELET * PATCH * PATCH                   # 384
MLP_HIDDEN  = int(EMBED_DIM * MLP_RATIO)                           # 128


# ----------------------------- in-kernel helpers -----------------------------
def _layernorm(x, g, b):
    mu = jnp.mean(x, axis=-1, keepdims=True)
    var = jnp.mean(jnp.square(x - mu), axis=-1, keepdims=True)
    return (x - mu) * jax.lax.rsqrt(var + LN_EPS) * g + b


def _erf(x):
    # Abramowitz & Stegun 7.1.26 (max abs err ~1.5e-7): exact-erf GELU semantics at f32
    # precision using only ops (abs/where/exp/mul/add/div) guaranteed to lower in Mosaic.
    a1, a2, a3, a4, a5 = 0.254829592, -0.284496736, 1.421413741, -1.453152027, 1.061405429
    p = 0.3275911
    sgn = jnp.where(x >= 0.0, 1.0, -1.0)
    ax = jnp.abs(x)
    t = 1.0 / (1.0 + p * ax)
    poly = ((((a5 * t + a4) * t + a3) * t + a2) * t + a1) * t
    return sgn * (1.0 - poly * jnp.exp(-ax * ax))


def _gelu_exact(x):
    return 0.5 * x * (1.0 + _erf(x * (1.0 / math.sqrt(2.0))))


# ----------------------------- fused Pallas kernel ---------------------------
def _encoder_kernel(patches_ref, patches_vis_ref, pos_vis_ref, bias_ref,
                    w_patch_ref, b_patch_ref,
                    n1_g_ref, n1_b_ref, wq_ref, wk_ref, wv_ref, wp_ref, bp_ref,
                    n2_g_ref, n2_b_ref, w1_ref, b1_ref, w2_ref, b2_ref,
                    norm_g_ref, norm_b_ref,
                    xvis_out_ref, emb_out_ref):
    f32 = jnp.float32

    # ---- patch embedding for ALL tokens -> `embedded_patch` output (no pos added,
    #      matching the reference which returns the raw patch embedding) -------------
    emb_out_ref[...] = (jnp.dot(patches_ref[...], w_patch_ref[...],
                                preferred_element_type=f32) + b_patch_ref[...])

    # ---- visible-token stream: embed + sinusoid pos (rows pre-gathered host-side) --
    x = (jnp.dot(patches_vis_ref[...], w_patch_ref[...], preferred_element_type=f32)
         + b_patch_ref[...] + pos_vis_ref[...])                    # (B*n_vis, E)

    nv = x.shape[0]
    bias = bias_ref[...]                                           # (nv, nv) block-diag

    for d in range(DEPTH):                                         # depth unrolled
        # -------- attention: all heads + both samples batched in single einsums -----
        h = _layernorm(x, n1_g_ref[d], n1_b_ref[d])                # (nv, E)
        hb = jnp.broadcast_to(h, (NUM_HEADS, nv, EMBED_DIM))       # cheap major-dim bcast
        q = jnp.einsum('hne,hed->hnd', hb, wq_ref[d], preferred_element_type=f32) * SCALE
        k = jnp.einsum('hne,hed->hnd', hb, wk_ref[d], preferred_element_type=f32)
        v = jnp.einsum('hne,hed->hnd', hb, wv_ref[d], preferred_element_type=f32)

        s = jnp.einsum('hqd,hkd->hqk', q, k, preferred_element_type=f32) + bias
        s = s - jnp.max(s, axis=-1, keepdims=True)
        p = jnp.exp(s)
        p = p * pl.reciprocal(jnp.sum(p, axis=-1, keepdims=True), approx=True)   # EUP
        o = jnp.einsum('hqk,hkd->hqd', p, v, preferred_element_type=f32)         # (H,nv,D)

        # output projection folded per head (no lane concat): sum_h o_h @ Wp_h
        proj = jnp.einsum('hqd,hde->hqe', o, wp_ref[d], preferred_element_type=f32)
        x = x + jnp.sum(proj, axis=0) + bp_ref[d]

        # ------------------------------------ MLP -----------------------------------
        m = _layernorm(x, n2_g_ref[d], n2_b_ref[d])
        m = jnp.dot(m, w1_ref[d], preferred_element_type=f32) + b1_ref[d]
        m = _gelu_exact(m)                                         # exact-erf GELU
        m = jnp.dot(m, w2_ref[d], preferred_element_type=f32) + b2_ref[d]
        x = x + m

    # ---- final LayerNorm; head == Identity (num_classes = 0) -----------------------
    xvis_out_ref[...] = _layernorm(x, norm_g_ref[...], norm_b_ref[...])


# ----------------------------- host-side wrapper ------------------------------
def frils_encoder_forward(x, mask_np, params):
    """x: (B, C, T, H, W) float32; mask_np: host numpy bool (B, num_patches), True = masked."""
    Bb = x.shape[0]

    # Conv3d(kernel==stride) patch embedding == host-side patchify (layout glue) +
    # in-kernel matmul (+bias).
    xr = x.reshape(Bb, IN_CHANS, T // TUBELET, TUBELET,
                   IMG // PATCH, PATCH, IMG // PATCH, PATCH)
    xr = xr.transpose(0, 2, 4, 6, 1, 3, 5, 7)            # B, t', h', w', c, dt, dh, dw
    patches = xr.reshape(Bb * NUM_PATCHES, PATCH_DIM)    # (B*N, 384)

    # Visible-token bookkeeping: mask is host-static numpy -> indices are Python
    # constants (same equal-count-per-row constraint as the reference's reshape).
    vis_local = [np.nonzero(~mask_np[bb])[0] for bb in range(Bb)]
    n_vis = int(vis_local[0].shape[0])
    assert all(v.shape[0] == n_vis for v in vis_local)
    vis_rows = np.concatenate([bb * NUM_PATCHES + vis_local[bb] for bb in range(Bb)])
    n_tot = Bb * n_vis

    # Patch-embed + pos-add are row-wise, so x[~mask] commutes with them: pre-gather
    # the raw patch rows host-side (static-index gather, pure layout glue).
    patches_vis = patches[vis_rows]                      # (B*n_vis, 384)

    # Host-constant pos rows for the visible tokens + block-diagonal attention bias
    # that keeps the batch samples (folded into one row dimension) independent.
    pos_np = get_sinusoid_encoding_table(NUM_PATCHES, EMBED_DIM)
    pos_vis = jnp.asarray(
        np.concatenate([pos_np[vis_local[bb]] for bb in range(Bb)], axis=0))
    sample_id = np.repeat(np.arange(Bb), n_vis)
    attn_bias = jnp.asarray(np.where(sample_id[:, None] == sample_id[None, :],
                                     0.0, -1e9).astype(np.float32))

    kernel_inputs = (patches, patches_vis, pos_vis, attn_bias,
                     params['patch_w_t'], params['patch_b'],
                     params['n1_g'], params['n1_b'],
                     params['wq'], params['wk'], params['wv'],
                     params['wp_h'], params['bp'],
                     params['n2_g'], params['n2_b'],
                     params['w1_t'], params['b1'], params['w2_t'], params['b2'],
                     params['norm_g'], params['norm_b'])

    vmem = pl.BlockSpec(memory_space=pltpu.MemorySpace.VMEM)   # whole array, VMEM-resident
    x_vis_flat, emb_flat = pl.pallas_call(
        _encoder_kernel,
        out_shape=(jax.ShapeDtypeStruct((n_tot, EMBED_DIM), jnp.float32),
                   jax.ShapeDtypeStruct((Bb * NUM_PATCHES, EMBED_DIM), jnp.float32)),
        in_specs=[vmem] * len(kernel_inputs),
        out_specs=(vmem, vmem),
    )(*kernel_inputs)

    return (x_vis_flat.reshape(Bb, n_vis, EMBED_DIM),
            emb_flat.reshape(Bb, NUM_PATCHES, EMBED_DIM))


# ----------------------------- parameter init --------------------------------
def get_sinusoid_encoding_table(n_position, d_hid):
    def get_position_angle_vec(position):
        return [position / np.power(10000, 2 * (hid_j // 2) / d_hid)
                for hid_j in range(d_hid)]
    tbl = np.array([get_position_angle_vec(p) for p in range(n_position)])
    tbl[:, 0::2] = np.sin(tbl[:, 0::2])
    tbl[:, 1::2] = np.cos(tbl[:, 1::2])
    return tbl.astype(np.float32)                                  # numpy (N, d)


def xavier_uniform(key, out_f, in_f):
    a = math.sqrt(6.0 / (in_f + out_f))
    return jax.random.uniform(key, (out_f, in_f), jnp.float32, -a, a)


def init_params(key):
    keys = jax.random.split(key, 2 + 4 * DEPTH)
    ki = iter(keys)
    # PatchEmbed Conv3d (torch default init; not touched by _init_weights)
    bound = 1.0 / math.sqrt(PATCH_DIM)
    conv_w = jax.random.uniform(next(ki), (EMBED_DIM, IN_CHANS, TUBELET, PATCH, PATCH),
                                jnp.float32, -bound, bound)
    conv_b = jax.random.uniform(next(ki), (EMBED_DIM,), jnp.float32, -bound, bound)

    # Transformer blocks (_init_weights: xavier_uniform, zero bias, LN w=1 b=0).
    wq, wk, wv, wp, w1, w2 = [], [], [], [], [], []
    for _ in range(DEPTH):
        wqkv_t = xavier_uniform(next(ki), 3 * EMBED_DIM, EMBED_DIM).T      # (E, 3E)
        wq.append(wqkv_t[:, 0:EMBED_DIM]
                  .reshape(EMBED_DIM, NUM_HEADS, HEAD_DIM).transpose(1, 0, 2))  # (H,E,D)
        wk.append(wqkv_t[:, EMBED_DIM:2 * EMBED_DIM]
                  .reshape(EMBED_DIM, NUM_HEADS, HEAD_DIM).transpose(1, 0, 2))
        wv.append(wqkv_t[:, 2 * EMBED_DIM:]
                  .reshape(EMBED_DIM, NUM_HEADS, HEAD_DIM).transpose(1, 0, 2))
        wp.append(xavier_uniform(next(ki), EMBED_DIM, EMBED_DIM).T
                  .reshape(NUM_HEADS, HEAD_DIM, EMBED_DIM))                # (H, D, E)
        w1.append(xavier_uniform(next(ki), MLP_HIDDEN, EMBED_DIM).T)       # (E, 4E)
        w2.append(xavier_uniform(next(ki), EMBED_DIM, MLP_HIDDEN).T)       # (4E, E)

    return {
        'patch_w_t': conv_w.reshape(EMBED_DIM, PATCH_DIM).T,               # (K, E)
        'patch_b':   conv_b.reshape(1, EMBED_DIM),
        'n1_g': jnp.ones((DEPTH, 1, EMBED_DIM), jnp.float32),
        'n1_b': jnp.zeros((DEPTH, 1, EMBED_DIM), jnp.float32),
        'wq': jnp.stack(wq), 'wk': jnp.stack(wk), 'wv': jnp.stack(wv),     # (DEPTH,H,E,D)
        'wp_h': jnp.stack(wp),                                             # (DEPTH,H,D,E)
        'bp': jnp.zeros((DEPTH, 1, EMBED_DIM), jnp.float32),
        'n2_g': jnp.ones((DEPTH, 1, EMBED_DIM), jnp.float32),
        'n2_b': jnp.zeros((DEPTH, 1, EMBED_DIM), jnp.float32),
        'w1_t': jnp.stack(w1),
        'b1': jnp.zeros((DEPTH, 1, MLP_HIDDEN), jnp.float32),
        'w2_t': jnp.stack(w2),
        'b2': jnp.zeros((DEPTH, 1, EMBED_DIM), jnp.float32),
        'norm_g': jnp.ones((1, EMBED_DIM), jnp.float32),
        'norm_b': jnp.zeros((1, EMBED_DIM), jnp.float32),
    }


# ----------------------------- main ------------------------------------------
if __name__ == "__main__":
    key = jax.random.PRNGKey(0)
    k_param, k_x = jax.random.split(key)
    params = init_params(k_param)

    x = jax.random.normal(k_x, (B, IN_CHANS, T, IMG, IMG), jnp.float32)
    # deterministic mask: mask even-index tokens, keep odd ones (4 visible / sample)
    mask = np.zeros((B, NUM_PATCHES), dtype=bool)
    mask[:, 0::2] = True

    fwd = jax.jit(lambda xv, p: frils_encoder_forward(xv, mask, p))
    out, embedded = fwd(x, params)
    jax.block_until_ready((out, embedded))

    assert out.shape == (B, NUM_PATCHES // 2, EMBED_DIM)
    assert embedded.shape == (B, NUM_PATCHES, EMBED_DIM)
    assert bool(jnp.all(jnp.isfinite(out)))
    assert bool(jnp.all(jnp.isfinite(embedded)))
    print("KERNEL_OK")
</pallas_src>

<mosaic_0001>
module attributes {stable_mosaic.version = 11 : i64} {
  func.func @_encoder_kernel(%arg0: memref<16x384xf32, #tpu.memory_space<vmem>>, %arg1: memref<8x384xf32, #tpu.memory_space<vmem>>, %arg2: memref<8x32xf32, #tpu.memory_space<vmem>>, %arg3: memref<8x8xf32, #tpu.memory_space<vmem>>, %arg4: memref<384x32xf32, #tpu.memory_space<vmem>>, %arg5: memref<1x32xf32, #tpu.memory_space<vmem>>, %arg6: memref<2x1x32xf32, #tpu.memory_space<vmem>>, %arg7: memref<2x1x32xf32, #tpu.memory_space<vmem>>, %arg8: memref<2x4x32x8xf32, #tpu.memory_space<vmem>>, %arg9: memref<2x4x32x8xf32, #tpu.memory_space<vmem>>, %arg10: memref<2x4x32x8xf32, #tpu.memory_space<vmem>>, %arg11: memref<2x4x8x32xf32, #tpu.memory_space<vmem>>, %arg12: memref<2x1x32xf32, #tpu.memory_space<vmem>>, %arg13: memref<2x1x32xf32, #tpu.memory_space<vmem>>, %arg14: memref<2x1x32xf32, #tpu.memory_space<vmem>>, %arg15: memref<2x32x128xf32, #tpu.memory_space<vmem>>, %arg16: memref<2x1x128xf32, #tpu.memory_space<vmem>>, %arg17: memref<2x128x32xf32, #tpu.memory_space<vmem>>, %arg18: memref<2x1x32xf32, #tpu.memory_space<vmem>>, %arg19: memref<1x32xf32, #tpu.memory_space<vmem>>, %arg20: memref<1x32xf32, #tpu.memory_space<vmem>>, %arg21: memref<8x32xf32, #tpu.memory_space<vmem>>, %arg22: memref<16x32xf32, #tpu.memory_space<vmem>>) attributes {dimension_semantics = [], scalar_prefetch = 0 : i64, scratch_operands = 0 : i64, tpu.core_type = #tpu.core_type<tc>} {
    %c0 = arith.constant 0 : index
    %c0_0 = arith.constant 0 : index
    %0 = vector.load %arg0[%c0, %c0_0] : memref<16x384xf32, #tpu.memory_space<vmem>>, vector<16x384xf32>
    %c0_1 = arith.constant 0 : index
    %c0_2 = arith.constant 0 : index
    %1 = vector.load %arg4[%c0_1, %c0_2] : memref<384x32xf32, #tpu.memory_space<vmem>>, vector<384x32xf32>
    %cst = arith.constant dense<0.000000e+00> : vector<16x32xf32>
    %2 = tpu.matmul %0, %1, %cst {dimension_numbers = #tpu.dot_dimension_numbers<[1], [0], [0], [1], [0, 0, 1, 1], [], []>} : vector<16x384xf32>, vector<384x32xf32>, vector<16x32xf32> -> vector<16x32xf32>
    %c0_3 = arith.constant 0 : index
    %c0_4 = arith.constant 0 : index
    %3 = vector.load %arg5[%c0_3, %c0_4] : memref<1x32xf32, #tpu.memory_space<vmem>>, vector<1x32xf32>
    %4 = vector.broadcast %3 : vector<1x32xf32> to vector<16x32xf32>
    %5 = arith.addf %2, %4 : vector<16x32xf32>
    %c0_5 = arith.constant 0 : index
    %c0_6 = arith.constant 0 : index
    %6 = vector.load %arg22[%c0_5, %c0_6] : memref<16x32xf32, #tpu.memory_space<vmem>>, vector<16x32xf32>
    tpu.vector_store %arg22[%c0_5, %c0_6], %5 {strides = array<i32>} : memref<16x32xf32, #tpu.memory_space<vmem>>, vector<16x32xf32>,
    %c0_7 = arith.constant 0 : index
    %c0_8 = arith.constant 0 : index
    %7 = vector.load %arg1[%c0_7, %c0_8] : memref<8x384xf32, #tpu.memory_space<vmem>>, vector<8x384xf32>
    %c0_9 = arith.constant 0 : index
    %c0_10 = arith.constant 0 : index
    %8 = vector.load %arg4[%c0_9, %c0_10] : memref<384x32xf32, #tpu.memory_space<vmem>>, vector<384x32xf32>
    %cst_11 = arith.constant dense<0.000000e+00> : vector<8x32xf32>
    %9 = tpu.matmul %7, %8, %cst_11 {dimension_numbers = #tpu.dot_dimension_numbers<[1], [0], [0], [1], [0, 0, 1, 1], [], []>} : vector<8x384xf32>, vector<384x32xf32>, vector<8x32xf32> -> vector<8x32xf32>
    %c0_12 = arith.constant 0 : index
    %c0_13 = arith.constant 0 : index
    %10 = vector.load %arg5[%c0_12, %c0_13] : memref<1x32xf32, #tpu.memory_space<vmem>>, vector<1x32xf32>
    %11 = vector.broadcast %10 : vector<1x32xf32> to vector<8x32xf32>
    %12 = arith.addf %9, %11 : vector<8x32xf32>
    %c0_14 = arith.constant 0 : index
    %c0_15 = arith.constant 0 : index
    %13 = vector.load %arg2[%c0_14, %c0_15] : memref<8x32xf32, #tpu.memory_space<vmem>>, vector<8x32xf32>
    %14 = arith.addf %12, %13 : vector<8x32xf32>
    %c0_16 = arith.constant 0 : index
    %c0_17 = arith.constant 0 : index
    %15 = vector.load %arg3[%c0_16, %c0_17] : memref<8x8xf32, #tpu.memory_space<vmem>>, vector<8x8xf32>
    %c0_18 = arith.constant 0 : index
    %c0_19 = arith.constant 0 : index
    %c0_20 = arith.constant 0 : index
    %16 = vector.load %arg6[%c0_18, %c0_19, %c0_20] : memref<2x1x32xf32, #tpu.memory_space<vmem>>, vector<1x1x32xf32>
    %17 = vector.shape_cast %16 : vector<1x1x32xf32> to vector<1x32xf32>
    %c0_21 = arith.constant 0 : index
    %c0_22 = arith.constant 0 : index
    %c0_23 = arith.constant 0 : index
    %18 = vector.load %arg7[%c0_21, %c0_22, %c0_23] : memref<2x1x32xf32, #tpu.memory_space<vmem>>, vector<1x1x32xf32>
    %19 = vector.shape_cast %18 : vector<1x1x32xf32> to vector<1x32xf32>
    %cst_24 = arith.constant dense<0.000000e+00> : vector<8xf32>
    %20 = vector.multi_reduction <add>, %14, %cst_24 [1] : vector<8x32xf32> to vector<8xf32>
    %21 = vector.shape_cast %20 : vector<8xf32> to vector<8x1xf32>
    %cst_25 = arith.constant 3.200000e+01 : f32
    %22 = vector.broadcast %cst_25 : f32 to vector<8x1xf32>
    %23 = arith.divf %21, %22 : vector<8x1xf32>
    %24 = vector.broadcast %23 : vector<8x1xf32> to vector<8x32xf32>
    %25 = arith.subf %14, %24 : vector<8x32xf32>
    %26 = arith.mulf %25, %25 : vector<8x32xf32>
    %cst_26 = arith.constant dense<0.000000e+00> : vector<8xf32>
    %27 = vector.multi_reduction <add>, %26, %cst_26 [1] : vector<8x32xf32> to vector<8xf32>
    %28 = vector.shape_cast %27 : vector<8xf32> to vector<8x1xf32>
    %cst_27 = arith.constant 3.200000e+01 : f32
    %29 = vector.broadcast %cst_27 : f32 to vector<8x1xf32>
    %30 = arith.divf %28, %29 : vector<8x1xf32>
    %31 = vector.broadcast %23 : vector<8x1xf32> to vector<8x32xf32>
    %32 = arith.subf %14, %31 : vector<8x32xf32>
    %cst_28 = arith.constant 9.99999974E-6 : f32
    %33 = vector.broadcast %cst_28 : f32 to vector<8x1xf32>
    %34 = arith.addf %30, %33 : vector<8x1xf32>
    %35 = math.rsqrt %34 : vector<8x1xf32>
    %36 = vector.broadcast %35 : vector<8x1xf32> to vector<8x32xf32>
    %37 = arith.mulf %32, %36 : vector<8x32xf32>
    %38 = vector.broadcast %17 : vector<1x32xf32> to vector<8x32xf32>
    %39 = arith.mulf %37, %38 : vector<8x32xf32>
    %40 = vector.broadcast %19 : vector<1x32xf32> to vector<8x32xf32>
    %41 = arith.addf %39, %40 : vector<8x32xf32>
    %42 = vector.shape_cast %41 : vector<8x32xf32> to vector<1x8x32xf32>
    %43 = vector.broadcast %42 : vector<1x8x32xf32> to vector<4x8x32xf32>
    %c0_29 = arith.constant 0 : index
    %c0_30 = arith.constant 0 : index
    %c0_31 = arith.constant 0 : index
    %c0_32 = arith.constant 0 : index
    %44 = vector.load %arg8[%c0_29, %c0_30, %c0_31, %c0_32] : memref<2x4x32x8xf32, #tpu.memory_space<vmem>>, vector<1x4x32x8xf32>
    %45 = vector.shape_cast %44 : vector<1x4x32x8xf32> to vector<4x32x8xf32>
    "tpu.trace_start"() <{level = 10 : i32, message = "hne,hed->hnd"}> : () -> ()
    %cst_33 = arith.constant dense<0.000000e+00> : vector<4x8x8xf32>
    %46 = tpu.matmul %43, %45, %cst_33 {dimension_numbers = #tpu.dot_dimension_numbers<[2], [1], [1], [2], [0, 0, 0, 1, 1, 2], [0], [0]>} : vector<4x8x32xf32>, vector<4x32x8xf32>, vector<4x8x8xf32> -> vector<4x8x8xf32>
    "tpu.trace_stop"() : () -> ()
    %cst_34 = arith.constant 0.353553385 : f32
    %47 = vector.broadcast %cst_34 : f32 to vector<4x8x8xf32>
    %48 = arith.mulf %46, %47 : vector<4x8x8xf32>
    %c0_35 = arith.constant 0 : index
    %c0_36 = arith.constant 0 : index
    %c0_37 = arith.constant 0 : index
    %c0_38 = arith.constant 0 : index
    %49 = vector.load %arg9[%c0_35, %c0_36, %c0_37, %c0_38] : memref<2x4x32x8xf32, #tpu.memory_space<vmem>>, vector<1x4x32x8xf32>
    %50 = vector.shape_cast %49 : vector<1x4x32x8xf32> to vector<4x32x8xf32>
    "tpu.trace_start"() <{level = 10 : i32, message = "hne,hed->hnd"}> : () -> ()
    %cst_39 = arith.constant dense<0.000000e+00> : vector<4x8x8xf32>
    %51 = tpu.matmul %43, %50, %cst_39 {dimension_numbers = #tpu.dot_dimension_numbers<[2], [1], [1], [2], [0, 0, 0, 1, 1, 2], [0], [0]>} : vector<4x8x32xf32>, vector<4x32x8xf32>, vector<4x8x8xf32> -> vector<4x8x8xf32>
    "tpu.trace_stop"() : () -> ()
    %c0_40 = arith.constant 0 : index
    %c0_41 = arith.constant 0 : index
    %c0_42 = arith.constant 0 : index
    %c0_43 = arith.constant 0 : index
    %52 = vector.load %arg10[%c0_40, %c0_41, %c0_42, %c0_43] : memref<2x4x32x8xf32, #tpu.memory_space<vmem>>, vector<1x4x32x8xf32>
    %53 = vector.shape_cast %52 : vector<1x4x32x8xf32> to vector<4x32x8xf32>
    "tpu.trace_start"() <{level = 10 : i32, message = "hne,hed->hnd"}> : () -> ()
    %cst_44 = arith.constant dense<0.000000e+00> : vector<4x8x8xf32>
    %54 = tpu.matmul %43, %53, %cst_44 {dimension_numbers = #tpu.dot_dimension_numbers<[2], [1], [1], [2], [0, 0, 0, 1, 1, 2], [0], [0]>} : vector<4x8x32xf32>, vector<4x32x8xf32>, vector<4x8x8xf32> -> vector<4x8x8xf32>
    "tpu.trace_stop"() : () -> ()
    "tpu.trace_start"() <{level = 10 : i32, message = "hqd,hkd->hqk"}> : () -> ()
    %cst_45 = arith.constant dense<0.000000e+00> : vector<4x8x8xf32>
    %55 = tpu.matmul %48, %51, %cst_45 {dimension_numbers = #tpu.dot_dimension_numbers<[2], [2], [1], [1], [0, 0, 0, 1, 1, 1], [0], [0]>} : vector<4x8x8xf32>, vector<4x8x8xf32>, vector<4x8x8xf32> -> vector<4x8x8xf32>
    "tpu.trace_stop"() : () -> ()
    %56 = vector.shape_cast %15 : vector<8x8xf32> to vector<1x8x8xf32>
    %57 = vector.broadcast %56 : vector<1x8x8xf32> to vector<4x8x8xf32>
    %58 = arith.addf %55, %57 : vector<4x8x8xf32>
    %cst_46 = arith.constant dense<0xFF800000> : vector<4x8xf32>
    %59 = vector.multi_reduction <maximumf>, %58, %cst_46 [2] : vector<4x8x8xf32> to vector<4x8xf32>
    %60 = vector.shape_cast %59 : vector<4x8xf32> to vector<4x8x1xf32>
    %61 = vector.broadcast %60 : vector<4x8x1xf32> to vector<4x8x8xf32>
    %62 = arith.subf %58, %61 : vector<4x8x8xf32>
    %63 = math.exp %62 : vector<4x8x8xf32>
    %cst_47 = arith.constant dense<0.000000e+00> : vector<4x8xf32>
    %64 = vector.multi_reduction <add>, %63, %cst_47 [2] : vector<4x8x8xf32> to vector<4x8xf32>
    %65 = vector.shape_cast %64 : vector<4x8xf32> to vector<4x8x1xf32>
    %66 = tpu.reciprocal %65 {approx = true} : vector<4x8x1xf32> -> vector<4x8x1xf32>
    %67 = vector.broadcast %66 : vector<4x8x1xf32> to vector<4x8x8xf32>
    %68 = arith.mulf %63, %67 : vector<4x8x8xf32>
    "tpu.trace_start"() <{level = 10 : i32, message = "hqk,hkd->hqd"}> : () -> ()
    %cst_48 = arith.constant dense<0.000000e+00> : vector<4x8x8xf32>
    %69 = tpu.matmul %68, %54, %cst_48 {dimension_numbers = #tpu.dot_dimension_numbers<[2], [1], [1], [2], [0, 0, 0, 1, 1, 2], [0], [0]>} : vector<4x8x8xf32>, vector<4x8x8xf32>, vector<4x8x8xf32> -> vector<4x8x8xf32>
    "tpu.trace_stop"() : () -> ()
    %c0_49 = arith.constant 0 : index
    %c0_50 = arith.constant 0 : index
    %c0_51 = arith.constant 0 : index
    %c0_52 = arith.constant 0 : index
    %70 = vector.load %arg11[%c0_49, %c0_50, %c0_51, %c0_52] : memref<2x4x8x32xf32, #tpu.memory_space<vmem>>, vector<1x4x8x32xf32>
    %71 = vector.shape_cast %70 : vector<1x4x8x32xf32> to vector<4x8x32xf32>
    "tpu.trace_start"() <{level = 10 : i32, message = "hqd,hde->hqe"}> : () -> ()
    %cst_53 = arith.constant dense<0.000000e+00> : vector<4x8x32xf32>
    %72 = tpu.matmul %69, %71, %cst_53 {dimension_numbers = #tpu.dot_dimension_numbers<[2], [1], [1], [2], [0, 0, 0, 1, 1, 2], [0], [0]>} : vector<4x8x8xf32>, vector<4x8x32xf32>, vector<4x8x32xf32> -> vector<4x8x32xf32>
    "tpu.trace_stop"() : () -> ()
    %cst_54 = arith.constant dense<0.000000e+00> : vector<8x32xf32>
    %73 = vector.multi_reduction <add>, %72, %cst_54 [0] : vector<4x8x32xf32> to vector<8x32xf32>
    %74 = arith.addf %14, %73 : vector<8x32xf32>
    %c0_55 = arith.constant 0 : index
    %c0_56 = arith.constant 0 : index
    %c0_57 = arith.constant 0 : index
    %75 = vector.load %arg12[%c0_55, %c0_56, %c0_57] : memref<2x1x32xf32, #tpu.memory_space<vmem>>, vector<1x1x32xf32>
    %76 = vector.shape_cast %75 : vector<1x1x32xf32> to vector<1x32xf32>
    %77 = vector.broadcast %76 : vector<1x32xf32> to vector<8x32xf32>
    %78 = arith.addf %74, %77 : vector<8x32xf32>
    %c0_58 = arith.constant 0 : index
    %c0_59 = arith.constant 0 : index
    %c0_60 = arith.constant 0 : index
    %79 = vector.load %arg13[%c0_58, %c0_59, %c0_60] : memref<2x1x32xf32, #tpu.memory_space<vmem>>, vector<1x1x32xf32>
    %80 = vector.shape_cast %79 : vector<1x1x32xf32> to vector<1x32xf32>
    %c0_61 = arith.constant 0 : index
    %c0_62 = arith.constant 0 : index
    %c0_63 = arith.constant 0 : index
    %81 = vector.load %arg14[%c0_61, %c0_62, %c0_63] : memref<2x1x32xf32, #tpu.memory_space<vmem>>, vector<1x1x32xf32>
    %82 = vector.shape_cast %81 : vector<1x1x32xf32> to vector<1x32xf32>
    %cst_64 = arith.constant dense<0.000000e+00> : vector<8xf32>
    %83 = vector.multi_reduction <add>, %78, %cst_64 [1] : vector<8x32xf32> to vector<8xf32>
    %84 = vector.shape_cast %83 : vector<8xf32> to vector<8x1xf32>
    %cst_65 = arith.constant 3.200000e+01 : f32
    %85 = vector.broadcast %cst_65 : f32 to vector<8x1xf32>
    %86 = arith.divf %84, %85 : vector<8x1xf32>
    %87 = vector.broadcast %86 : vector<8x1xf32> to vector<8x32xf32>
    %88 = arith.subf %78, %87 : vector<8x32xf32>
    %89 = arith.mulf %88, %88 : vector<8x32xf32>
    %cst_66 = arith.constant dense<0.000000e+00> : vector<8xf32>
    %90 = vector.multi_reduction <add>, %89, %cst_66 [1] : vector<8x32xf32> to vector<8xf32>
    %91 = vector.shape_cast %90 : vector<8xf32> to vector<8x1xf32>
    %cst_67 = arith.constant 3.200000e+01 : f32
    %92 = vector.broadcast %cst_67 : f32 to vector<8x1xf32>
    %93 = arith.divf %91, %92 : vector<8x1xf32>
    %94 = vector.broadcast %86 : vector<8x1xf32> to vector<8x32xf32>
    %95 = arith.subf %78, %94 : vector<8x32xf32>
    %cst_68 = arith.constant 9.99999974E-6 : f32
    %96 = vector.broadcast %cst_68 : f32 to vector<8x1xf32>
    %97 = arith.addf %93, %96 : vector<8x1xf32>
    %98 = math.rsqrt %97 : vector<8x1xf32>
    %99 = vector.broadcast %98 : vector<8x1xf32> to vector<8x32xf32>
    %100 = arith.mulf %95, %99 : vector<8x32xf32>
    %101 = vector.broadcast %80 : vector<1x32xf32> to vector<8x32xf32>
    %102 = arith.mulf %100, %101 : vector<8x32xf32>
    %103 = vector.broadcast %82 : vector<1x32xf32> to vector<8x32xf32>
    %104 = arith.addf %102, %103 : vector<8x32xf32>
    %c0_69 = arith.constant 0 : index
    %c0_70 = arith.constant 0 : index
    %c0_71 = arith.constant 0 : index
    %105 = vector.load %arg15[%c0_69, %c0_70, %c0_71] : memref<2x32x128xf32, #tpu.memory_space<vmem>>, vector<1x32x128xf32>
    %106 = vector.shape_cast %105 : vector<1x32x128xf32> to vector<32x128xf32>
    %cst_72 = arith.constant dense<0.000000e+00> : vector<8x128xf32>
    %107 = tpu.matmul %104, %106, %cst_72 {dimension_numbers = #tpu.dot_dimension_numbers<[1], [0], [0], [1], [0, 0, 1, 1], [], []>} : vector<8x32xf32>, vector<32x128xf32>, vector<8x128xf32> -> vector<8x128xf32>
    %c0_73 = arith.constant 0 : index
    %c0_74 = arith.constant 0 : index
    %c0_75 = arith.constant 0 : index
    %108 = vector.load %arg16[%c0_73, %c0_74, %c0_75] : memref<2x1x128xf32, #tpu.memory_space<vmem>>, vector<1x1x128xf32>
    %109 = vector.shape_cast %108 : vector<1x1x128xf32> to vector<1x128xf32>
    %110 = vector.broadcast %109 : vector<1x128xf32> to vector<8x128xf32>
    %111 = arith.addf %107, %110 : vector<8x128xf32>
    %cst_76 = arith.constant 5.000000e-01 : f32
    %112 = vector.broadcast %cst_76 : f32 to vector<8x128xf32>
    %113 = arith.mulf %112, %111 : vector<8x128xf32>
    %cst_77 = arith.constant 0.707106769 : f32
    %114 = vector.broadcast %cst_77 : f32 to vector<8x128xf32>
    %115 = arith.mulf %111, %114 : vector<8x128xf32>
    %cst_78 = arith.constant 0.000000e+00 : f32
    %116 = vector.broadcast %cst_78 : f32 to vector<8x128xf32>
    %117 = arith.cmpf oge, %115, %116 : vector<8x128xf32>
    %cst_79 = arith.constant 1.000000e+00 : f32
    %cst_80 = arith.constant -1.000000e+00 : f32
    %118 = vector.broadcast %cst_79 : f32 to vector<8x128xf32>
    %119 = vector.broadcast %cst_80 : f32 to vector<8x128xf32>
    %120 = arith.select %117, %118, %119 : vector<8x128xi1>, vector<8x128xf32>
    %121 = math.absf %115 : vector<8x128xf32>
    %cst_81 = arith.constant 0.327591091 : f32
    %122 = vector.broadcast %cst_81 : f32 to vector<8x128xf32>
    %123 = arith.mulf %122, %121 : vector<8x128xf32>
    %cst_82 = arith.constant 1.000000e+00 : f32
    %124 = vector.broadcast %cst_82 : f32 to vector<8x128xf32>
    %125 = arith.addf %124, %123 : vector<8x128xf32>
    %cst_83 = arith.constant 1.000000e+00 : f32
    %126 = vector.broadcast %cst_83 : f32 to vector<8x128xf32>
    %127 = arith.divf %126, %125 : vector<8x128xf32>
    %cst_84 = arith.constant 1.06140542 : f32
    %128 = vector.broadcast %cst_84 : f32 to vector<8x128xf32>
    %129 = arith.mulf %128, %127 : vector<8x128xf32>
    %cst_85 = arith.constant -1.45315206 : f32
    %130 = vector.broadcast %cst_85 : f32 to vector<8x128xf32>
    %131 = arith.addf %129, %130 : vector<8x128xf32>
    %132 = arith.mulf %131, %127 : vector<8x128xf32>
    %cst_86 = arith.constant 1.42141378 : f32
    %133 = vector.broadcast %cst_86 : f32 to vector<8x128xf32>
    %134 = arith.addf %132, %133 : vector<8x128xf32>
    %135 = arith.mulf %134, %127 : vector<8x128xf32>
    %cst_87 = arith.constant -0.284496725 : f32
    %136 = vector.broadcast %cst_87 : f32 to vector<8x128xf32>
    %137 = arith.addf %135, %136 : vector<8x128xf32>
    %138 = arith.mulf %137, %127 : vector<8x128xf32>
    %cst_88 = arith.constant 0.254829586 : f32
    %139 = vector.broadcast %cst_88 : f32 to vector<8x128xf32>
    %140 = arith.addf %138, %139 : vector<8x128xf32>
    %141 = arith.mulf %140, %127 : vector<8x128xf32>
    %cst_89 = arith.constant 0.000000e+00 : f32
    %142 = vector.broadcast %cst_89 : f32 to vector<8x128xf32>
    %143 = arith.subf %142, %121 : vector<8x128xf32>
    %144 = arith.mulf %143, %121 : vector<8x128xf32>
    %145 = math.exp %144 : vector<8x128xf32>
    %146 = arith.mulf %141, %145 : vector<8x128xf32>
    %cst_90 = arith.constant 1.000000e+00 : f32
    %147 = vector.broadcast %cst_90 : f32 to vector<8x128xf32>
    %148 = arith.subf %147, %146 : vector<8x128xf32>
    %149 = arith.mulf %120, %148 : vector<8x128xf32>
    %cst_91 = arith.constant 1.000000e+00 : f32
    %150 = vector.broadcast %cst_91 : f32 to vector<8x128xf32>
    %151 = arith.addf %150, %149 : vector<8x128xf32>
    %152 = arith.mulf %113, %151 : vector<8x128xf32>
    %c0_92 = arith.constant 0 : index
    %c0_93 = arith.constant 0 : index
    %c0_94 = arith.constant 0 : index
    %153 = vector.load %arg17[%c0_92, %c0_93, %c0_94] : memref<2x128x32xf32, #tpu.memory_space<vmem>>, vector<1x128x32xf32>
    %154 = vector.shape_cast %153 : vector<1x128x32xf32> to vector<128x32xf32>
    %cst_95 = arith.constant dense<0.000000e+00> : vector<8x32xf32>
    %155 = tpu.matmul %152, %154, %cst_95 {dimension_numbers = #tpu.dot_dimension_numbers<[1], [0], [0], [1], [0, 0, 1, 1], [], []>} : vector<8x128xf32>, vector<128x32xf32>, vector<8x32xf32> -> vector<8x32xf32>
    %c0_96 = arith.constant 0 : index
    %c0_97 = arith.constant 0 : index
    %c0_98 = arith.constant 0 : index
    %156 = vector.load %arg18[%c0_96, %c0_97, %c0_98] : memref<2x1x32xf32, #tpu.memory_space<vmem>>, vector<1x1x32xf32>
    %157 = vector.shape_cast %156 : vector<1x1x32xf32> to vector<1x32xf32>
    %158 = vector.broadcast %157 : vector<1x32xf32> to vector<8x32xf32>
    %159 = arith.addf %155, %158 : vector<8x32xf32>
    %160 = arith.addf %78, %159 : vector<8x32xf32>
    %c1 = arith.constant 1 : index
    %c0_99 = arith.constant 0 : index
    %c0_100 = arith.constant 0 : index
    %161 = vector.load %arg6[%c1, %c0_99, %c0_100] : memref<2x1x32xf32, #tpu.memory_space<vmem>>, vector<1x1x32xf32>
    %162 = vector.shape_cast %161 : vector<1x1x32xf32> to vector<1x32xf32>
    %c1_101 = arith.constant 1 : index
    %c0_102 = arith.constant 0 : index
    %c0_103 = arith.constant 0 : index
    %163 = vector.load %arg7[%c1_101, %c0_102, %c0_103] : memref<2x1x32xf32, #tpu.memory_space<vmem>>, vector<1x1x32xf32>
    %164 = vector.shape_cast %163 : vector<1x1x32xf32> to vector<1x32xf32>
    %cst_104 = arith.constant dense<0.000000e+00> : vector<8xf32>
    %165 = vector.multi_reduction <add>, %160, %cst_104 [1] : vector<8x32xf32> to vector<8xf32>
    %166 = vector.shape_cast %165 : vector<8xf32> to vector<8x1xf32>
    %cst_105 = arith.constant 3.200000e+01 : f32
    %167 = vector.broadcast %cst_105 : f32 to vector<8x1xf32>
    %168 = arith.divf %166, %167 : vector<8x1xf32>
    %169 = vector.broadcast %168 : vector<8x1xf32> to vector<8x32xf32>
    %170 = arith.subf %160, %169 : vector<8x32xf32>
    %171 = arith.mulf %170, %170 : vector<8x32xf32>
    %cst_106 = arith.constant dense<0.000000e+00> : vector<8xf32>
    %172 = vector.multi_reduction <add>, %171, %cst_106 [1] : vector<8x32xf32> to vector<8xf32>
    %173 = vector.shape_cast %172 : vector<8xf32> to vector<8x1xf32>
    %cst_107 = arith.constant 3.200000e+01 : f32
    %174 = vector.broadcast %cst_107 : f32 to vector<8x1xf32>
    %175 = arith.divf %173, %174 : vector<8x1xf32>
    %176 = vector.broadcast %168 : vector<8x1xf32> to vector<8x32xf32>
    %177 = arith.subf %160, %176 : vector<8x32xf32>
    %cst_108 = arith.constant 9.99999974E-6 : f32
    %178 = vector.broadcast %cst_108 : f32 to vector<8x1xf32>
    %179 = arith.addf %175, %178 : vector<8x1xf32>
    %180 = math.rsqrt %179 : vector<8x1xf32>
    %181 = vector.broadcast %180 : vector<8x1xf32> to vector<8x32xf32>
    %182 = arith.mulf %177, %181 : vector<8x32xf32>
    %183 = vector.broadcast %162 : vector<1x32xf32> to vector<8x32xf32>
    %184 = arith.mulf %182, %183 : vector<8x32xf32>
    %185 = vector.broadcast %164 : vector<1x32xf32> to vector<8x32xf32>
    %186 = arith.addf %184, %185 : vector<8x32xf32>
    %187 = vector.shape_cast %186 : vector<8x32xf32> to vector<1x8x32xf32>
    %188 = vector.broadcast %187 : vector<1x8x32xf32> to vector<4x8x32xf32>
    %c1_109 = arith.constant 1 : index
    %c0_110 = arith.constant 0 : index
    %c0_111 = arith.constant 0 : index
    %c0_112 = arith.constant 0 : index
    %189 = vector.load %arg8[%c1_109, %c0_110, %c0_111, %c0_112] : memref<2x4x32x8xf32, #tpu.memory_space<vmem>>, vector<1x4x32x8xf32>
    %190 = vector.shape_cast %189 : vector<1x4x32x8xf32> to vector<4x32x8xf32>
    "tpu.trace_start"() <{level = 10 : i32, message = "hne,hed->hnd"}> : () -> ()
    %cst_113 = arith.constant dense<0.000000e+00> : vector<4x8x8xf32>
    %191 = tpu.matmul %188, %190, %cst_113 {dimension_numbers = #tpu.dot_dimension_numbers<[2], [1], [1], [2], [0, 0, 0, 1, 1, 2], [0], [0]>} : vector<4x8x32xf32>, vector<4x32x8xf32>, vector<4x8x8xf32> -> vector<4x8x8xf32>
    "tpu.trace_stop"() : () -> ()
    %cst_114 = arith.constant 0.353553385 : f32
    %192 = vector.broadcast %cst_114 : f32 to vector<4x8x8xf32>
    %193 = arith.mulf %191, %192 : vector<4x8x8xf32>
    %c1_115 = arith.constant 1 : index
    %c0_116 = arith.constant 0 : index
    %c0_117 = arith.constant 0 : index
    %c0_118 = arith.constant 0 : index
    %194 = vector.load %arg9[%c1_115, %c0_116, %c0_117, %c0_118] : memref<2x4x32x8xf32, #tpu.memory_space<vmem>>, vector<1x4x32x8xf32>
    %195 = vector.shape_cast %194 : vector<1x4x32x8xf32> to vector<4x32x8xf32>
    "tpu.trace_start"() <{level = 10 : i32, message = "hne,hed->hnd"}> : () -> ()
    %cst_119 = arith.constant dense<0.000000e+00> : vector<4x8x8xf32>
    %196 = tpu.matmul %188, %195, %cst_119 {dimension_numbers = #tpu.dot_dimension_numbers<[2], [1], [1], [2], [0, 0, 0, 1, 1, 2], [0], [0]>} : vector<4x8x32xf32>, vector<4x32x8xf32>, vector<4x8x8xf32> -> vector<4x8x8xf32>
    "tpu.trace_stop"() : () -> ()
    %c1_120 = arith.constant 1 : index
    %c0_121 = arith.constant 0 : index
    %c0_122 = arith.constant 0 : index
    %c0_123 = arith.constant 0 : index
    %197 = vector.load %arg10[%c1_120, %c0_121, %c0_122, %c0_123] : memref<2x4x32x8xf32, #tpu.memory_space<vmem>>, vector<1x4x32x8xf32>
    %198 = vector.shape_cast %197 : vector<1x4x32x8xf32> to vector<4x32x8xf32>
    "tpu.trace_start"() <{level = 10 : i32, message = "hne,hed->hnd"}> : () -> ()
    %cst_124 = arith.constant dense<0.000000e+00> : vector<4x8x8xf32>
    %199 = tpu.matmul %188, %198, %cst_124 {dimension_numbers = #tpu.dot_dimension_numbers<[2], [1], [1], [2], [0, 0, 0, 1, 1, 2], [0], [0]>} : vector<4x8x32xf32>, vector<4x32x8xf32>, vector<4x8x8xf32> -> vector<4x8x8xf32>
    "tpu.trace_stop"() : () -> ()
    "tpu.trace_start"() <{level = 10 : i32, message = "hqd,hkd->hqk"}> : () -> ()
    %cst_125 = arith.constant dense<0.000000e+00> : vector<4x8x8xf32>
    %200 = tpu.matmul %193, %196, %cst_125 {dimension_numbers = #tpu.dot_dimension_numbers<[2], [2], [1], [1], [0, 0, 0, 1, 1, 1], [0], [0]>} : vector<4x8x8xf32>, vector<4x8x8xf32>, vector<4x8x8xf32> -> vector<4x8x8xf32>
    "tpu.trace_stop"() : () -> ()
    %201 = vector.shape_cast %15 : vector<8x8xf32> to vector<1x8x8xf32>
    %202 = vector.broadcast %201 : vector<1x8x8xf32> to vector<4x8x8xf32>
    %203 = arith.addf %200, %202 : vector<4x8x8xf32>
    %cst_126 = arith.constant dense<0xFF800000> : vector<4x8xf32>
    %204 = vector.multi_reduction <maximumf>, %203, %cst_126 [2] : vector<4x8x8xf32> to vector<4x8xf32>
    %205 = vector.shape_cast %204 : vector<4x8xf32> to vector<4x8x1xf32>
    %206 = vector.broadcast %205 : vector<4x8x1xf32> to vector<4x8x8xf32>
    %207 = arith.subf %203, %206 : vector<4x8x8xf32>
    %208 = math.exp %207 : vector<4x8x8xf32>
    %cst_127 = arith.constant dense<0.000000e+00> : vector<4x8xf32>
    %209 = vector.multi_reduction <add>, %208, %cst_127 [2] : vector<4x8x8xf32> to vector<4x8xf32>
    %210 = vector.shape_cast %209 : vector<4x8xf32> to vector<4x8x1xf32>
    %211 = tpu.reciprocal %210 {approx = true} : vector<4x8x1xf32> -> vector<4x8x1xf32>
    %212 = vector.broadcast %211 : vector<4x8x1xf32> to vector<4x8x8xf32>
    %213 = arith.mulf %208, %212 : vector<4x8x8xf32>
    "tpu.trace_start"() <{level = 10 : i32, message = "hqk,hkd->hqd"}> : () -> ()
    %cst_128 = arith.constant dense<0.000000e+00> : vector<4x8x8xf32>
    %214 = tpu.matmul %213, %199, %cst_128 {dimension_numbers = #tpu.dot_dimension_numbers<[2], [1], [1], [2], [0, 0, 0, 1, 1, 2], [0], [0]>} : vector<4x8x8xf32>, vector<4x8x8xf32>, vector<4x8x8xf32> -> vector<4x8x8xf32>
    "tpu.trace_stop"() : () -> ()
    %c1_129 = arith.constant 1 : index
    %c0_130 = arith.constant 0 : index
    %c0_131 = arith.constant 0 : index
    %c0_132 = arith.constant 0 : index
    %215 = vector.load %arg11[%c1_129, %c0_130, %c0_131, %c0_132] : memref<2x4x8x32xf32, #tpu.memory_space<vmem>>, vector<1x4x8x32xf32>
    %216 = vector.shape_cast %215 : vector<1x4x8x32xf32> to vector<4x8x32xf32>
    "tpu.trace_start"() <{level = 10 : i32, message = "hqd,hde->hqe"}> : () -> ()
    %cst_133 = arith.constant dense<0.000000e+00> : vector<4x8x32xf32>
    %217 = tpu.matmul %214, %216, %cst_133 {dimension_numbers = #tpu.dot_dimension_numbers<[2], [1], [1], [2], [0, 0, 0, 1, 1, 2], [0], [0]>} : vector<4x8x8xf32>, vector<4x8x32xf32>, vector<4x8x32xf32> -> vector<4x8x32xf32>
    "tpu.trace_stop"() : () -> ()
    %cst_134 = arith.constant dense<0.000000e+00> : vector<8x32xf32>
    %218 = vector.multi_reduction <add>, %217, %cst_134 [0] : vector<4x8x32xf32> to vector<8x32xf32>
    %219 = arith.addf %160, %218 : vector<8x32xf32>
    %c1_135 = arith.constant 1 : index
    %c0_136 = arith.constant 0 : index
    %c0_137 = arith.constant 0 : index
    %220 = vector.load %arg12[%c1_135, %c0_136, %c0_137] : memref<2x1x32xf32, #tpu.memory_space<vmem>>, vector<1x1x32xf32>
    %221 = vector.shape_cast %220 : vector<1x1x32xf32> to vector<1x32xf32>
    %222 = vector.broadcast %221 : vector<1x32xf32> to vector<8x32xf32>
    %223 = arith.addf %219, %222 : vector<8x32xf32>
    %c1_138 = arith.constant 1 : index
    %c0_139 = arith.constant 0 : index
    %c0_140 = arith.constant 0 : index
    %224 = vector.load %arg13[%c1_138, %c0_139, %c0_140] : memref<2x1x32xf32, #tpu.memory_space<vmem>>, vector<1x1x32xf32>
    %225 = vector.shape_cast %224 : vector<1x1x32xf32> to vector<1x32xf32>
    %c1_141 = arith.constant 1 : index
    %c0_142 = arith.constant 0 : index
    %c0_143 = arith.constant 0 : index
    %226 = vector.load %arg14[%c1_141, %c0_142, %c0_143] : memref<2x1x32xf32, #tpu.memory_space<vmem>>, vector<1x1x32xf32>
    %227 = vector.shape_cast %226 : vector<1x1x32xf32> to vector<1x32xf32>
    %cst_144 = arith.constant dense<0.000000e+00> : vector<8xf32>
    %228 = vector.multi_reduction <add>, %223, %cst_144 [1] : vector<8x32xf32> to vector<8xf32>
    %229 = vector.shape_cast %228 : vector<8xf32> to vector<8x1xf32>
    %cst_145 = arith.constant 3.200000e+01 : f32
    %230 = vector.broadcast %cst_145 : f32 to vector<8x1xf32>
    %231 = arith.divf %229, %230 : vector<8x1xf32>
    %232 = vector.broadcast %231 : vector<8x1xf32> to vector<8x32xf32>
    %233 = arith.subf %223, %232 : vector<8x32xf32>
    %234 = arith.mulf %233, %233 : vector<8x32xf32>
    %cst_146 = arith.constant dense<0.000000e+00> : vector<8xf32>
    %235 = vector.multi_reduction <add>, %234, %cst_146 [1] : vector<8x32xf32> to vector<8xf32>
    %236 = vector.shape_cast %235 : vector<8xf32> to vector<8x1xf32>
    %cst_147 = arith.constant 3.200000e+01 : f32
    %237 = vector.broadcast %cst_147 : f32 to vector<8x1xf32>
    %238 = arith.divf %236, %237 : vector<8x1xf32>
    %239 = vector.broadcast %231 : vector<8x1xf32> to vector<8x32xf32>
    %240 = arith.subf %223, %239 : vector<8x32xf32>
    %cst_148 = arith.constant 9.99999974E-6 : f32
    %241 = vector.broadcast %cst_148 : f32 to vector<8x1xf32>
    %242 = arith.addf %238, %241 : vector<8x1xf32>
    %243 = math.rsqrt %242 : vector<8x1xf32>
    %244 = vector.broadcast %243 : vector<8x1xf32> to vector<8x32xf32>
    %245 = arith.mulf %240, %244 : vector<8x32xf32>
    %246 = vector.broadcast %225 : vector<1x32xf32> to vector<8x32xf32>
    %247 = arith.mulf %245, %246 : vector<8x32xf32>
    %248 = vector.broadcast %227 : vector<1x32xf32> to vector<8x32xf32>
    %249 = arith.addf %247, %248 : vector<8x32xf32>
    %c1_149 = arith.constant 1 : index
    %c0_150 = arith.constant 0 : index
    %c0_151 = arith.constant 0 : index
    %250 = vector.load %arg15[%c1_149, %c0_150, %c0_151] : memref<2x32x128xf32, #tpu.memory_space<vmem>>, vector<1x32x128xf32>
    %251 = vector.shape_cast %250 : vector<1x32x128xf32> to vector<32x128xf32>
    %cst_152 = arith.constant dense<0.000000e+00> : vector<8x128xf32>
    %252 = tpu.matmul %249, %251, %cst_152 {dimension_numbers = #tpu.dot_dimension_numbers<[1], [0], [0], [1], [0, 0, 1, 1], [], []>} : vector<8x32xf32>, vector<32x128xf32>, vector<8x128xf32> -> vector<8x128xf32>
    %c1_153 = arith.constant 1 : index
    %c0_154 = arith.constant 0 : index
    %c0_155 = arith.constant 0 : index
    %253 = vector.load %arg16[%c1_153, %c0_154, %c0_155] : memref<2x1x128xf32, #tpu.memory_space<vmem>>, vector<1x1x128xf32>
    %254 = vector.shape_cast %253 : vector<1x1x128xf32> to vector<1x128xf32>
    %255 = vector.broadcast %254 : vector<1x128xf32> to vector<8x128xf32>
    %256 = arith.addf %252, %255 : vector<8x128xf32>
    %cst_156 = arith.constant 5.000000e-01 : f32
    %257 = vector.broadcast %cst_156 : f32 to vector<8x128xf32>
    %258 = arith.mulf %257, %256 : vector<8x128xf32>
    %cst_157 = arith.constant 0.707106769 : f32
    %259 = vector.broadcast %cst_157 : f32 to vector<8x128xf32>
    %260 = arith.mulf %256, %259 : vector<8x128xf32>
    %cst_158 = arith.constant 0.000000e+00 : f32
    %261 = vector.broadcast %cst_158 : f32 to vector<8x128xf32>
    %262 = arith.cmpf oge, %260, %261 : vector<8x128xf32>
    %cst_159 = arith.constant 1.000000e+00 : f32
    %cst_160 = arith.constant -1.000000e+00 : f32
    %263 = vector.broadcast %cst_159 : f32 to vector<8x128xf32>
    %264 = vector.broadcast %cst_160 : f32 to vector<8x128xf32>
    %265 = arith.select %262, %263, %264 : vector<8x128xi1>, vector<8x128xf32>
    %266 = math.absf %260 : vector<8x128xf32>
    %cst_161 = arith.constant 0.327591091 : f32
    %267 = vector.broadcast %cst_161 : f32 to vector<8x128xf32>
    %268 = arith.mulf %267, %266 : vector<8x128xf32>
    %cst_162 = arith.constant 1.000000e+00 : f32
    %269 = vector.broadcast %cst_162 : f32 to vector<8x128xf32>
    %270 = arith.addf %269, %268 : vector<8x128xf32>
    %cst_163 = arith.constant 1.000000e+00 : f32
    %271 = vector.broadcast %cst_163 : f32 to vector<8x128xf32>
    %272 = arith.divf %271, %270 : vector<8x128xf32>
    %cst_164 = arith.constant 1.06140542 : f32
    %273 = vector.broadcast %cst_164 : f32 to vector<8x128xf32>
    %274 = arith.mulf %273, %272 : vector<8x128xf32>
    %cst_165 = arith.constant -1.45315206 : f32
    %275 = vector.broadcast %cst_165 : f32 to vector<8x128xf32>
    %276 = arith.addf %274, %275 : vector<8x128xf32>
    %277 = arith.mulf %276, %272 : vector<8x128xf32>
    %cst_166 = arith.constant 1.42141378 : f32
    %278 = vector.broadcast %cst_166 : f32 to vector<8x128xf32>
    %279 = arith.addf %277, %278 : vector<8x128xf32>
    %280 = arith.mulf %279, %272 : vector<8x128xf32>
    %cst_167 = arith.constant -0.284496725 : f32
    %281 = vector.broadcast %cst_167 : f32 to vector<8x128xf32>
    %282 = arith.addf %280, %281 : vector<8x128xf32>
    %283 = arith.mulf %282, %272 : vector<8x128xf32>
    %cst_168 = arith.constant 0.254829586 : f32
    %284 = vector.broadcast %cst_168 : f32 to vector<8x128xf32>
    %285 = arith.addf %283, %284 : vector<8x128xf32>
    %286 = arith.mulf %285, %272 : vector<8x128xf32>
    %cst_169 = arith.constant 0.000000e+00 : f32
    %287 = vector.broadcast %cst_169 : f32 to vector<8x128xf32>
    %288 = arith.subf %287, %266 : vector<8x128xf32>
    %289 = arith.mulf %288, %266 : vector<8x128xf32>
    %290 = math.exp %289 : vector<8x128xf32>
    %291 = arith.mulf %286, %290 : vector<8x128xf32>
    %cst_170 = arith.constant 1.000000e+00 : f32
    %292 = vector.broadcast %cst_170 : f32 to vector<8x128xf32>
    %293 = arith.subf %292, %291 : vector<8x128xf32>
    %294 = arith.mulf %265, %293 : vector<8x128xf32>
    %cst_171 = arith.constant 1.000000e+00 : f32
    %295 = vector.broadcast %cst_171 : f32 to vector<8x128xf32>
    %296 = arith.addf %295, %294 : vector<8x128xf32>
    %297 = arith.mulf %258, %296 : vector<8x128xf32>
    %c1_172 = arith.constant 1 : index
    %c0_173 = arith.constant 0 : index
    %c0_174 = arith.constant 0 : index
    %298 = vector.load %arg17[%c1_172, %c0_173, %c0_174] : memref<2x128x32xf32, #tpu.memory_space<vmem>>, vector<1x128x32xf32>
    %299 = vector.shape_cast %298 : vector<1x128x32xf32> to vector<128x32xf32>
    %cst_175 = arith.constant dense<0.000000e+00> : vector<8x32xf32>
    %300 = tpu.matmul %297, %299, %cst_175 {dimension_numbers = #tpu.dot_dimension_numbers<[1], [0], [0], [1], [0, 0, 1, 1], [], []>} : vector<8x128xf32>, vector<128x32xf32>, vector<8x32xf32> -> vector<8x32xf32>
    %c1_176 = arith.constant 1 : index
    %c0_177 = arith.constant 0 : index
    %c0_178 = arith.constant 0 : index
    %301 = vector.load %arg18[%c1_176, %c0_177, %c0_178] : memref<2x1x32xf32, #tpu.memory_space<vmem>>, vector<1x1x32xf32>
    %302 = vector.shape_cast %301 : vector<1x1x32xf32> to vector<1x32xf32>
    %303 = vector.broadcast %302 : vector<1x32xf32> to vector<8x32xf32>
    %304 = arith.addf %300, %303 : vector<8x32xf32>
    %305 = arith.addf %223, %304 : vector<8x32xf32>
    %c0_179 = arith.constant 0 : index
    %c0_180 = arith.constant 0 : index
    %306 = vector.load %arg19[%c0_179, %c0_180] : memref<1x32xf32, #tpu.memory_space<vmem>>, vector<1x32xf32>
    %c0_181 = arith.constant 0 : index
    %c0_182 = arith.constant 0 : index
    %307 = vector.load %arg20[%c0_181, %c0_182] : memref<1x32xf32, #tpu.memory_space<vmem>>, vector<1x32xf32>
    %cst_183 = arith.constant dense<0.000000e+00> : vector<8xf32>
    %308 = vector.multi_reduction <add>, %305, %cst_183 [1] : vector<8x32xf32> to vector<8xf32>
    %309 = vector.shape_cast %308 : vector<8xf32> to vector<8x1xf32>
    %cst_184 = arith.constant 3.200000e+01 : f32
    %310 = vector.broadcast %cst_184 : f32 to vector<8x1xf32>
    %311 = arith.divf %309, %310 : vector<8x1xf32>
    %312 = vector.broadcast %311 : vector<8x1xf32> to vector<8x32xf32>
    %313 = arith.subf %305, %312 : vector<8x32xf32>
    %314 = arith.mulf %313, %313 : vector<8x32xf32>
    %cst_185 = arith.constant dense<0.000000e+00> : vector<8xf32>
    %315 = vector.multi_reduction <add>, %314, %cst_185 [1] : vector<8x32xf32> to vector<8xf32>
    %316 = vector.shape_cast %315 : vector<8xf32> to vector<8x1xf32>
    %cst_186 = arith.constant 3.200000e+01 : f32
    %317 = vector.broadcast %cst_186 : f32 to vector<8x1xf32>
    %318 = arith.divf %316, %317 : vector<8x1xf32>
    %319 = vector.broadcast %311 : vector<8x1xf32> to vector<8x32xf32>
    %320 = arith.subf %305, %319 : vector<8x32xf32>
    %cst_187 = arith.constant 9.99999974E-6 : f32
    %321 = vector.broadcast %cst_187 : f32 to vector<8x1xf32>
    %322 = arith.addf %318, %321 : vector<8x1xf32>
    %323 = math.rsqrt %322 : vector<8x1xf32>
    %324 = vector.broadcast %323 : vector<8x1xf32> to vector<8x32xf32>
    %325 = arith.mulf %320, %324 : vector<8x32xf32>
    %326 = vector.broadcast %306 : vector<1x32xf32> to vector<8x32xf32>
    %327 = arith.mulf %325, %326 : vector<8x32xf32>
    %328 = vector.broadcast %307 : vector<1x32xf32> to vector<8x32xf32>
    %329 = arith.addf %327, %328 : vector<8x32xf32>
    %c0_188 = arith.constant 0 : index
    %c0_189 = arith.constant 0 : index
    %330 = vector.load %arg21[%c0_188, %c0_189] : memref<8x32xf32, #tpu.memory_space<vmem>>, vector<8x32xf32>
    tpu.vector_store %arg21[%c0_188, %c0_189], %329 {strides = array<i32>} : memref<8x32xf32, #tpu.memory_space<vmem>>, vector<8x32xf32>,
    return
  }
}

</mosaic_0001>

<llo_original>
// kernel: _lambda_.1
$region0: #{_lambda_.1}
  #allocation0 [shape = 'u32[]', space=smem, size = 0x4, offset = 0x4, fixed_abs, tag = 'smem constant byte address 0x4 - core index']
  #allocation1 [shape = 'u32[144,128]{1,0:T(1,128)}', space=vmem, size = 0x12000, scoped, tag = 'internal scratch']
  %s0 = inlined_call_operand.vmem [shape: f32[16,384], index: 0, kind: input, shape index: {}]
  %s1 = inlined_call_operand.vmem [shape: f32[8,384], index: 1, kind: input, shape index: {}]
  %s2 = inlined_call_operand.vmem [shape: f32[8,32], index: 2, kind: input, shape index: {}]
  %s3 = inlined_call_operand.vmem [shape: f32[8,8], index: 3, kind: input, shape index: {}]
  %s4 = inlined_call_operand.vmem [shape: f32[384,32], index: 4, kind: input, shape index: {}]
  %s5 = inlined_call_operand.vmem [shape: f32[1,32], index: 5, kind: input, shape index: {}]
  %s6 = inlined_call_operand.vmem [shape: f32[2,1,32], index: 6, kind: input, shape index: {}]
  %s7 = inlined_call_operand.vmem [shape: f32[2,1,32], index: 7, kind: input, shape index: {}]
  %s8 = inlined_call_operand.vmem [shape: f32[2,4,32,8], index: 8, kind: input, shape index: {}]
  %s9 = inlined_call_operand.vmem [shape: f32[2,4,32,8], index: 9, kind: input, shape index: {}]
  %s10 = inlined_call_operand.vmem [shape: f32[2,4,32,8], index: 10, kind: input, shape index: {}]
  %s11 = inlined_call_operand.vmem [shape: f32[2,4,8,32], index: 11, kind: input, shape index: {}]
  %s12 = inlined_call_operand.vmem [shape: f32[2,1,32], index: 12, kind: input, shape index: {}]
  %s13 = inlined_call_operand.vmem [shape: f32[2,1,32], index: 13, kind: input, shape index: {}]
  %s14 = inlined_call_operand.vmem [shape: f32[2,1,32], index: 14, kind: input, shape index: {}]
  %s15 = inlined_call_operand.vmem [shape: f32[2,32,128], index: 15, kind: input, shape index: {}]
  %s16 = inlined_call_operand.vmem [shape: f32[2,1,128], index: 16, kind: input, shape index: {}]
  %s17 = inlined_call_operand.vmem [shape: f32[2,128,32], index: 17, kind: input, shape index: {}]
  %s18 = inlined_call_operand.vmem [shape: f32[2,1,32], index: 18, kind: input, shape index: {}]
  %s19 = inlined_call_operand.vmem [shape: f32[1,32], index: 19, kind: input, shape index: {}]
  %s20 = inlined_call_operand.vmem [shape: f32[1,32], index: 20, kind: input, shape index: {}]
  %s21 = inlined_call_operand.hbm [shape: f32[8,32], index: 21, kind: output, shape index: {0}]
  %s22 = inlined_call_operand.hbm [shape: f32[16,32], index: 22, kind: output, shape index: {1}]
  %23 = xla_tuple %s21, %s22
  %s24 = sld [smem:[#allocation0]]
  $region102: #{_lambda_.1} parent=0
    _
  %s26 = ssub.s32 1, %s24
  %s27 = scalar_select 0, %s26, %s24
  $region1: #{_lambda_.1} parent=0
    #allocation2 [shape = 'u8[4096]{0}', space=vmem, size = 0x1000, scoped, tag = 'output window, operand 0, single buffered']
    #allocation3 [shape = 's32[1]{0}', space=sflag, size = 0x4, scoped, tag = 'scoped memory for _lambda_.1']
    #allocation4 [shape = 'u8[8192]{0}', space=vmem, size = 0x2000, scoped, tag = 'output window, operand 1, single buffered']
    #allocation5 [shape = 's32[1]{0}', space=sflag, size = 0x4, scoped, tag = 'scoped memory for _lambda_.1']
    %28 = vsyncpa [#allocation3], 0
    %29 = vsyncpa [#allocation5], 0
    // Predicated region
    $region2: #{_lambda_.1} parent=1 // pred_check
      _
    $region3: #{_lambda_.1} parent=1 // pred_check_branch
      %31 = sbr.rel (0) target = $region5
    $region4: #{_lambda_.1} parent=1 // pred_region
      _
    $region5: #{_lambda_.1} parent=1 // pred_fallthru
      _
    // Predicated region
    $region6: #{_lambda_.1} parent=1 // pred_check
      _
    $region7: #{_lambda_.1} parent=1 // pred_check_branch
      %33 = sbr.rel (0) target = $region9
    $region8: #{_lambda_.1} parent=1 // pred_region
      _
    $region9: #{_lambda_.1} parent=1 // pred_fallthru
      _
    // Predicated region
    $region10: #{_lambda_.1} parent=1 // pred_check
      _
    $region11: #{_lambda_.1} parent=1 // pred_check_branch
      %35 = sbr.rel (0) target = $region13
    $region12: #{_lambda_.1} parent=1 // pred_region
      _
    $region13: #{_lambda_.1} parent=1 // pred_fallthru
      _
    // Predicated region
    $region14: #{_lambda_.1} parent=1 // pred_check
      _
    $region15: #{_lambda_.1} parent=1 // pred_check_branch
      %37 = sbr.rel (0) target = $region17
    $region16: #{_lambda_.1} parent=1 // pred_region
      _
    $region17: #{_lambda_.1} parent=1 // pred_fallthru
      _
    // Predicated region
    $region18: #{_lambda_.1} parent=1 // pred_check
      _
    $region19: #{_lambda_.1} parent=1 // pred_check_branch
      %39 = sbr.rel (0) target = $region21
    $region20: #{_lambda_.1} parent=1 // pred_region
      _
    $region21: #{_lambda_.1} parent=1 // pred_fallthru
      _
    // Predicated region
    $region22: #{_lambda_.1} parent=1 // pred_check
      _
    $region23: #{_lambda_.1} parent=1 // pred_check_branch
      %41 = sbr.rel (0) target = $region25
    $region24: #{_lambda_.1} parent=1 // pred_region
      _
    $region25: #{_lambda_.1} parent=1 // pred_fallthru
      _
    // Predicated region
    $region26: #{_lambda_.1} parent=1 // pred_check
      _
    $region27: #{_lambda_.1} parent=1 // pred_check_branch
      %43 = sbr.rel (0) target = $region29
    $region28: #{_lambda_.1} parent=1 // pred_region
      _
    $region29: #{_lambda_.1} parent=1 // pred_fallthru
      _
    // Predicated region
    $region30: #{_lambda_.1} parent=1 // pred_check
      _
    $region31: #{_lambda_.1} parent=1 // pred_check_branch
      %45 = sbr.rel (0) target = $region33
    $region32: #{_lambda_.1} parent=1 // pred_region
      _
    $region33: #{_lambda_.1} parent=1 // pred_fallthru
      _
    // Predicated region
    $region34: #{_lambda_.1} parent=1 // pred_check
      _
    $region35: #{_lambda_.1} parent=1 // pred_check_branch
      %47 = sbr.rel (0) target = $region37
    $region36: #{_lambda_.1} parent=1 // pred_region
      _
    $region37: #{_lambda_.1} parent=1 // pred_fallthru
      _
    // Predicated region
    $region38: #{_lambda_.1} parent=1 // pred_check
      _
    $region39: #{_lambda_.1} parent=1 // pred_check_branch
      %49 = sbr.rel (0) target = $region41
    $region40: #{_lambda_.1} parent=1 // pred_region
      _
    $region41: #{_lambda_.1} parent=1 // pred_fallthru
      _
    // Predicated region
    $region42: #{_lambda_.1} parent=1 // pred_check
      _
    $region43: #{_lambda_.1} parent=1 // pred_check_branch
      %51 = sbr.rel (0) target = $region45
    $region44: #{_lambda_.1} parent=1 // pred_region
      _
    $region45: #{_lambda_.1} parent=1 // pred_fallthru
      _
    // Predicated region
    $region46: #{_lambda_.1} parent=1 // pred_check
      _
    $region47: #{_lambda_.1} parent=1 // pred_check_branch
      %53 = sbr.rel (0) target = $region49
    $region48: #{_lambda_.1} parent=1 // pred_region
      _
    $region49: #{_lambda_.1} parent=1 // pred_fallthru
      _
    // Predicated region
    $region50: #{_lambda_.1} parent=1 // pred_check
      _
    $region51: #{_lambda_.1} parent=1 // pred_check_branch
      %55 = sbr.rel (0) target = $region53
    $region52: #{_lambda_.1} parent=1 // pred_region
      _
    $region53: #{_lambda_.1} parent=1 // pred_fallthru
      _
    // Predicated region
    $region54: #{_lambda_.1} parent=1 // pred_check
      _
    $region55: #{_lambda_.1} parent=1 // pred_check_branch
      %57 = sbr.rel (0) target = $region57
    $region56: #{_lambda_.1} parent=1 // pred_region
      _
    $region57: #{_lambda_.1} parent=1 // pred_fallthru
      _
    // Predicated region
    $region58: #{_lambda_.1} parent=1 // pred_check
      _
    $region59: #{_lambda_.1} parent=1 // pred_check_branch
      %59 = sbr.rel (0) target = $region61
    $region60: #{_lambda_.1} parent=1 // pred_region
      _
    $region61: #{_lambda_.1} parent=1 // pred_fallthru
      _
    // Predicated region
    $region62: #{_lambda_.1} parent=1 // pred_check
      _
    $region63: #{_lambda_.1} parent=1 // pred_check_branch
      %61 = sbr.rel (0) target = $region65
    $region64: #{_lambda_.1} parent=1 // pred_region
      _
    $region65: #{_lambda_.1} parent=1 // pred_fallthru
      _
    // Predicated region
    $region66: #{_lambda_.1} parent=1 // pred_check
      _
    $region67: #{_lambda_.1} parent=1 // pred_check_branch
      %63 = sbr.rel (0) target = $region69
    $region68: #{_lambda_.1} parent=1 // pred_region
      _
    $region69: #{_lambda_.1} parent=1 // pred_fallthru
      _
    // Predicated region
    $region70: #{_lambda_.1} parent=1 // pred_check
      _
    $region71: #{_lambda_.1} parent=1 // pred_check_branch
      %65 = sbr.rel (0) target = $region73
    $region72: #{_lambda_.1} parent=1 // pred_region
      _
    $region73: #{_lambda_.1} parent=1 // pred_fallthru
      _
    // Predicated region
    $region74: #{_lambda_.1} parent=1 // pred_check
      _
    $region75: #{_lambda_.1} parent=1 // pred_check_branch
      %67 = sbr.rel (0) target = $region77
    $region76: #{_lambda_.1} parent=1 // pred_region
      _
    $region77: #{_lambda_.1} parent=1 // pred_fallthru
      _
    // Predicated region
    $region78: #{_lambda_.1} parent=1 // pred_check
      _
    $region79: #{_lambda_.1} parent=1 // pred_check_branch
      %69 = sbr.rel (0) target = $region81
    $region80: #{_lambda_.1} parent=1 // pred_region
      _
    $region81: #{_lambda_.1} parent=1 // pred_fallthru
      _
    // Predicated region
    $region82: #{_lambda_.1} parent=1 // pred_check
      _
    $region83: #{_lambda_.1} parent=1 // pred_check_branch
      %71 = sbr.rel (0) target = $region85
    $region84: #{_lambda_.1} parent=1 // pred_region
      _
    $region85: #{_lambda_.1} parent=1 // pred_fallthru
      _
    %v72 = vld [vmem:[%s0] sm:$0xff]
    %v73 = vld [vmem:[%s0 + $0x8] sm:$0xff]
    %v74 = vld [vmem:[%s0 + $0x10] sm:$0xff]
    %v75 = vld [vmem:[%s0 + $0x18] sm:$0xff]
    %v76 = vld [vmem:[%s0 + $0x20] sm:$0xff]
    %v77 = vld [vmem:[%s0 + $0x28] sm:$0xff]
    %v78 = vld [vmem:[%s4] sm:$0xff]
    %v79 = vld [vmem:[%s4 + $0x8] sm:$0xff]
    %v80 = vld [vmem:[%s4 + $0x10] sm:$0xff]
    %v81 = vld [vmem:[%s4 + $0x18] sm:$0xff]
    %v82 = vld [vmem:[%s4 + $0x20] sm:$0xff]
    %v83 = vld [vmem:[%s4 + $0x28] sm:$0xff]
    %v84 = vld [vmem:[%s4 + $0x30] sm:$0xff]
    %v85 = vld [vmem:[%s4 + $0x38] sm:$0xff]
    %v86 = vld [vmem:[%s4 + $0x40] sm:$0xff]
    %v87 = vld [vmem:[%s4 + $0x48] sm:$0xff]
    %v88 = vld [vmem:[%s4 + $0x50] sm:$0xff]
    %v89 = vld [vmem:[%s4 + $0x58] sm:$0xff]
    %v90 = vld [vmem:[%s4 + $0x60] sm:$0xff]
    %v91 = vld [vmem:[%s4 + $0x68] sm:$0xff]
    %v92 = vld [vmem:[%s4 + $0x70] sm:$0xff]
    %v93 = vld [vmem:[%s4 + $0x78] sm:$0xff]
    %v94 = vld [vmem:[%s4 + $0x80] sm:$0xff]
    %v95 = vld [vmem:[%s4 + $0x88] sm:$0xff]
    %v96 = vld [vmem:[%s4 + $0x90] sm:$0xff]
    %v97 = vld [vmem:[%s4 + $0x98] sm:$0xff]
    %v98 = vld [vmem:[%s4 + $0xa0] sm:$0xff]
    %v99 = vld [vmem:[%s4 + $0xa8] sm:$0xff]
    %v100 = vld [vmem:[%s4 + $0xb0] sm:$0xff]
    %v101 = vld [vmem:[%s4 + $0xb8] sm:$0xff]
    %v102 = vld [vmem:[%s4 + $0xc0] sm:$0xff]
    %v103 = vld [vmem:[%s4 + $0xc8] sm:$0xff]
    %v104 = vld [vmem:[%s4 + $0xd0] sm:$0xff]
    %v105 = vld [vmem:[%s4 + $0xd8] sm:$0xff]
    %v106 = vld [vmem:[%s4 + $0xe0] sm:$0xff]
    %v107 = vld [vmem:[%s4 + $0xe8] sm:$0xff]
    %v108 = vld [vmem:[%s4 + $0xf0] sm:$0xff]
    %v109 = vld [vmem:[%s4 + $0xf8] sm:$0xff]
    %v110 = vld [vmem:[%s4 + $0x100] sm:$0xff]
    %v111 = vld [vmem:[%s4 + $0x108] sm:$0xff]
    %v112 = vld [vmem:[%s4 + $0x110] sm:$0xff]
    %v113 = vld [vmem:[%s4 + $0x118] sm:$0xff]
    %v114 = vld [vmem:[%s4 + $0x120] sm:$0xff]
    %v115 = vld [vmem:[%s4 + $0x128] sm:$0xff]
    %v116 = vld [vmem:[%s4 + $0x130] sm:$0xff]
    %v117 = vld [vmem:[%s4 + $0x138] sm:$0xff]
    %v118 = vld [vmem:[%s4 + $0x140] sm:$0xff]
    %v119 = vld [vmem:[%s4 + $0x148] sm:$0xff]
    %v120 = vld [vmem:[%s4 + $0x150] sm:$0xff]
    %v121 = vld [vmem:[%s4 + $0x158] sm:$0xff]
    %v122 = vld [vmem:[%s4 + $0x160] sm:$0xff]
    %v123 = vld [vmem:[%s4 + $0x168] sm:$0xff]
    %v124 = vld [vmem:[%s4 + $0x170] sm:$0xff]
    %v125 = vld [vmem:[%s4 + $0x178] sm:$0xff]
    %v126 = vld [vmem:[%s5] sm:$0x1]
    %v128 = vlaneseq
    %v129 = vshrl.u32 %v128, 7
    %v130 = vsub.s32 0, %v129
    %v131 = vrot.slane %v126, %v130
    %133 = vmatprep.subr.mxu0 0.0
    %134 = vmatpush1.msra.mxu0 %v93
    %135 = vmatprep.subr.mxu0 0.0
    %136 = vmatpush1.msra.mxu0 %v92
    %137 = vmatprep.subr.mxu0 0.0
    %138 = vmatpush1.msra.mxu0 %v91
    %139 = vmatprep.subr.mxu0 0.0
    %140 = vmatpush1.msra.mxu0 %v90
    %141 = vmatprep.subr.mxu0 0.0
    %142 = vmatpush1.msra.mxu0 %v89
    %143 = vmatprep.subr.mxu0 0.0
    %144 = vmatpush1.msra.mxu0 %v88
    %145 = vmatprep.subr.mxu0 0.0
    %146 = vmatpush1.msra.mxu0 %v87
    %147 = vmatprep.subr.mxu0 0.0
    %148 = vmatpush1.msra.mxu0 %v86
    %149 = vmatprep.subr.mxu0 0.0
    %150 = vmatpush1.msra.mxu0 %v85
    %151 = vmatprep.subr.mxu0 0.0
    %152 = vmatpush1.msra.mxu0 %v84
    %153 = vmatprep.subr.mxu0 0.0
    %154 = vmatpush1.msra.mxu0 %v83
    %155 = vmatprep.subr.mxu0 0.0
    %156 = vmatpush1.msra.mxu0 %v82
    %157 = vmatprep.subr.mxu0 0.0
    %158 = vmatpush1.msra.mxu0 %v81
    %159 = vmatprep.subr.mxu0 0.0
    %160 = vmatpush1.msra.mxu0 %v80
    %161 = vmatprep.subr.mxu0 0.0
    %162 = vmatpush1.msra.mxu0 %v79
    %163 = vmatprep.subr.mxu0 0.0
    %164 = vmatpush1.msra.mxu0 %v78
    %165 = vmatprep.subr.mxu0 0.0
    %166 = vmatpush2.msra.mxu0 %v109
    %167 = vmatprep.subr.mxu0 0.0
    %168 = vmatpush2.msra.mxu0 %v108
    %169 = vmatprep.subr.mxu0 0.0
    %170 = vmatpush2.msra.mxu0 %v107
    %171 = vmatprep.subr.mxu0 0.0
    %172 = vmatpush2.msra.mxu0 %v106
    %173 = vmatprep.subr.mxu0 0.0
    %174 = vmatpush2.msra.mxu0 %v105
    %175 = vmatprep.subr.mxu0 0.0
    %176 = vmatpush2.msra.mxu0 %v104
    %177 = vmatprep.subr.mxu0 0.0
    %178 = vmatpush2.msra.mxu0 %v103
    %179 = vmatprep.subr.mxu0 0.0
    %180 = vmatpush2.msra.mxu0 %v102
    %181 = vmatprep.subr.mxu0 0.0
    %182 = vmatpush2.msra.mxu0 %v101
    %183 = vmatprep.subr.mxu0 0.0
    %184 = vmatpush2.msra.mxu0 %v100
    %185 = vmatprep.subr.mxu0 0.0
    %186 = vmatpush2.msra.mxu0 %v99
    %187 = vmatprep.subr.mxu0 0.0
    %188 = vmatpush2.msra.mxu0 %v98
    %189 = vmatprep.subr.mxu0 0.0
    %190 = vmatpush2.msra.mxu0 %v97
    %191 = vmatprep.subr.mxu0 0.0
    %192 = vmatpush2.msra.mxu0 %v96
    %193 = vmatprep.subr.mxu0 0.0
    %194 = vmatpush2.msra.mxu0 %v95
    %195 = vmatprep.subr.mxu0 0.0
    %196 = vmatpush2.msra.mxu0 %v94
    %197 = vmatprep.mubr.f32.mxu0 %v73
    %198 = vmatmul.mubr.f32.gmra.mxu0 %v72
    %v199 = vpop.f32.mrf.mxu0
    %v200 = vadd.f32 %v131, %v199
    %v201 = vpop.f32.mrf.mxu0
    %202 = vmatprep.mubr.f32.mxu0 %v76
    %203 = vmatmul.mubr.f32.gmra.mxu0 %v75
    %v204 = vpop.f32.mrf.mxu0
    %v205 = vadd.f32 %v131, %v204
    %v206 = vpop.f32.mrf.mxu0
    %207 = vdwg.mxu0
    %208 = vmatprep.subr.mxu0 0.0
    %209 = vmatpush1.msra.mxu0 %v125
    %210 = vmatprep.subr.mxu0 0.0
    %211 = vmatpush1.msra.mxu0 %v124
    %212 = vmatprep.subr.mxu0 0.0
    %213 = vmatpush1.msra.mxu0 %v123
    %214 = vmatprep.subr.mxu0 0.0
    %215 = vmatpush1.msra.mxu0 %v122
    %216 = vmatprep.subr.mxu0 0.0
    %217 = vmatpush1.msra.mxu0 %v121
    %218 = vmatprep.subr.mxu0 0.0
    %219 = vmatpush1.msra.mxu0 %v120
    %220 = vmatprep.subr.mxu0 0.0
    %221 = vmatpush1.msra.mxu0 %v119
    %222 = vmatprep.subr.mxu0 0.0
    %223 = vmatpush1.msra.mxu0 %v118
    %224 = vmatprep.subr.mxu0 0.0
    %225 = vmatpush1.msra.mxu0 %v117
    %226 = vmatprep.subr.mxu0 0.0
    %227 = vmatpush1.msra.mxu0 %v116
    %228 = vmatprep.subr.mxu0 0.0
    %229 = vmatpush1.msra.mxu0 %v115
    %230 = vmatprep.subr.mxu0 0.0
    %231 = vmatpush1.msra.mxu0 %v114
    %232 = vmatprep.subr.mxu0 0.0
    %233 = vmatpush1.msra.mxu0 %v113
    %234 = vmatprep.subr.mxu0 0.0
    %235 = vmatpush1.msra.mxu0 %v112
    %236 = vmatprep.subr.mxu0 0.0
    %237 = vmatpush1.msra.mxu0 %v111
    %238 = vmatprep.subr.mxu0 0.0
    %239 = vmatpush1.msra.mxu0 %v110
    %240 = vmatprep.subr.mxu0 0.0
    %241 = vmatpush2.msra.mxu0 0.0
    %242 = vmatprep.subr.mxu0 0.0
    %243 = vmatpush2.msra.mxu0 0.0
    %244 = vmatprep.subr.mxu0 0.0
    %245 = vmatpush2.msra.mxu0 0.0
    %246 = vmatprep.subr.mxu0 0.0
    %247 = vmatpush2.msra.mxu0 0.0
    %248 = vmatprep.subr.mxu0 0.0
    %249 = vmatpush2.msra.mxu0 0.0
    %250 = vmatprep.subr.mxu0 0.0
    %251 = vmatpush2.msra.mxu0 0.0
    %252 = vmatprep.subr.mxu0 0.0
    %253 = vmatpush2.msra.mxu0 0.0
    %254 = vmatprep.subr.mxu0 0.0
    %255 = vmatpush2.msra.mxu0 0.0
    %256 = vmatprep.subr.mxu0 0.0
    %257 = vmatpush2.msra.mxu0 0.0
    %258 = vmatprep.subr.mxu0 0.0
    %259 = vmatpush2.msra.mxu0 0.0
    %260 = vmatprep.subr.mxu0 0.0
    %261 = vmatpush2.msra.mxu0 0.0
    %262 = vmatprep.subr.mxu0 0.0
    %263 = vmatpush2.msra.mxu0 0.0
    %264 = vmatprep.subr.mxu0 0.0
    %265 = vmatpush2.msra.mxu0 0.0
    %266 = vmatprep.subr.mxu0 0.0
    %267 = vmatpush2.msra.mxu0 0.0
    %268 = vmatprep.subr.mxu0 0.0
    %269 = vmatpush2.msra.mxu0 0.0
    %270 = vmatprep.subr.mxu0 0.0
    %271 = vmatpush2.msra.mxu0 0.0
    %272 = vmatprep.mubr.f32.mxu0 0.0
    %273 = vmatmul.mubr.f32.gmra.mxu0 %v74
    %v274 = vpop.f32.mrf.mxu0
    %v275 = vadd.f32 %v200, %v274
    %v276 = vpop.f32.mrf.mxu0
    %277 = vmatprep.mubr.f32.mxu0 0.0
    %278 = vmatmul.mubr.f32.gmra.mxu0 %v77
    %v279 = vpop.f32.mrf.mxu0
    %v280 = vadd.f32 %v205, %v279
    %v281 = vpop.f32.mrf.mxu0
    %282 = vdwg.mxu0
    %vm283 = vcmask 261120
    %284 = vst.msk [vmem:[#allocation4] sm:$0xff] %vm283, %v275
    %285 = vst.msk [vmem:[#allocation4 + $0x8] sm:$0xff] %vm283, %v280
    %v286 = vld [vmem:[%s1] sm:$0xff]
    %v287 = vld [vmem:[%s1 + $0x8] sm:$0xff]
    %v288 = vld [vmem:[%s1 + $0x10] sm:$0xff]
    %v289 = vld [vmem:[%s4] sm:$0xff]
    %v290 = vld [vmem:[%s4 + $0x8] sm:$0xff]
    %v291 = vld [vmem:[%s4 + $0x10] sm:$0xff]
    %v292 = vld [vmem:[%s4 + $0x18] sm:$0xff]
    %v293 = vld [vmem:[%s4 + $0x20] sm:$0xff]
    %v294 = vld [vmem:[%s4 + $0x28] sm:$0xff]
    %v295 = vld [vmem:[%s4 + $0x30] sm:$0xff]
    %v296 = vld [vmem:[%s4 + $0x38] sm:$0xff]
    %v297 = vld [vmem:[%s4 + $0x40] sm:$0xff]
    %v298 = vld [vmem:[%s4 + $0x48] sm:$0xff]
    %v299 = vld [vmem:[%s4 + $0x50] sm:$0xff]
    %v300 = vld [vmem:[%s4 + $0x58] sm:$0xff]
    %v301 = vld [vmem:[%s4 + $0x60] sm:$0xff]
    %v302 = vld [vmem:[%s4 + $0x68] sm:$0xff]
    %v303 = vld [vmem:[%s4 + $0x70] sm:$0xff]
    %v304 = vld [vmem:[%s4 + $0x78] sm:$0xff]
    %v305 = vld [vmem:[%s4 + $0x80] sm:$0xff]
    %v306 = vld [vmem:[%s4 + $0x88] sm:$0xff]
    %v307 = vld [vmem:[%s4 + $0x90] sm:$0xff]
    %v308 = vld [vmem:[%s4 + $0x98] sm:$0xff]
    %v309 = vld [vmem:[%s4 + $0xa0] sm:$0xff]
    %v310 = vld [vmem:[%s4 + $0xa8] sm:$0xff]
    %v311 = vld [vmem:[%s4 + $0xb0] sm:$0xff]
    %v312 = vld [vmem:[%s4 + $0xb8] sm:$0xff]
    %v313 = vld [vmem:[%s4 + $0xc0] sm:$0xff]
    %v314 = vld [vmem:[%s4 + $0xc8] sm:$0xff]
    %v315 = vld [vmem:[%s4 + $0xd0] sm:$0xff]
    %v316 = vld [vmem:[%s4 + $0xd8] sm:$0xff]
    %v317 = vld [vmem:[%s4 + $0xe0] sm:$0xff]
    %v318 = vld [vmem:[%s4 + $0xe8] sm:$0xff]
    %v319 = vld [vmem:[%s4 + $0xf0] sm:$0xff]
    %v320 = vld [vmem:[%s4 + $0xf8] sm:$0xff]
    %v321 = vld [vmem:[%s4 + $0x100] sm:$0xff]
    %v322 = vld [vmem:[%s4 + $0x108] sm:$0xff]
    %v323 = vld [vmem:[%s4 + $0x110] sm:$0xff]
    %v324 = vld [vmem:[%s4 + $0x118] sm:$0xff]
    %v325 = vld [vmem:[%s4 + $0x120] sm:$0xff]
    %v326 = vld [vmem:[%s4 + $0x128] sm:$0xff]
    %v327 = vld [vmem:[%s4 + $0x130] sm:$0xff]
    %v328 = vld [vmem:[%s4 + $0x138] sm:$0xff]
    %v329 = vld [vmem:[%s4 + $0x140] sm:$0xff]
    %v330 = vld [vmem:[%s4 + $0x148] sm:$0xff]
    %v331 = vld [vmem:[%s4 + $0x150] sm:$0xff]
    %v332 = vld [vmem:[%s4 + $0x158] sm:$0xff]
    %v333 = vld [vmem:[%s4 + $0x160] sm:$0xff]
    %v334 = vld [vmem:[%s4 + $0x168] sm:$0xff]
    %v335 = vld [vmem:[%s4 + $0x170] sm:$0xff]
    %v336 = vld [vmem:[%s4 + $0x178] sm:$0xff]
    %v337 = vld [vmem:[%s5] sm:$0x1]
    %v339 = vlaneseq
    %v340 = vshrl.u32 %v339, 7
    %v341 = vsub.s32 0, %v340
    %v342 = vrot.slane %v337, %v341
    %344 = vmatprep.subr.mxu0 0.0
    %345 = vmatpush1.msra.mxu0 %v304
    %346 = vmatprep.subr.mxu0 0.0
    %347 = vmatpush1.msra.mxu0 %v303
    %348 = vmatprep.subr.mxu0 0.0
    %349 = vmatpush1.msra.mxu0 %v302
    %350 = vmatprep.subr.mxu0 0.0
    %351 = vmatpush1.msra.mxu0 %v301
    %352 = vmatprep.subr.mxu0 0.0
    %353 = vmatpush1.msra.mxu0 %v300
    %354 = vmatprep.subr.mxu0 0.0
    %355 = vmatpush1.msra.mxu0 %v299
    %356 = vmatprep.subr.mxu0 0.0
    %357 = vmatpush1.msra.mxu0 %v298
    %358 = vmatprep.subr.mxu0 0.0
    %359 = vmatpush1.msra.mxu0 %v297
    %360 = vmatprep.subr.mxu0 0.0
    %361 = vmatpush1.msra.mxu0 %v296
    %362 = vmatprep.subr.mxu0 0.0
    %363 = vmatpush1.msra.mxu0 %v295
    %364 = vmatprep.subr.mxu0 0.0
    %365 = vmatpush1.msra.mxu0 %v294
    %366 = vmatprep.subr.mxu0 0.0
    %367 = vmatpush1.msra.mxu0 %v293
    %368 = vmatprep.subr.mxu0 0.0
    %369 = vmatpush1.msra.mxu0 %v292
    %370 = vmatprep.subr.mxu0 0.0
    %371 = vmatpush1.msra.mxu0 %v291
    %372 = vmatprep.subr.mxu0 0.0
    %373 = vmatpush1.msra.mxu0 %v290
    %374 = vmatprep.subr.mxu0 0.0
    %375 = vmatpush1.msra.mxu0 %v289
    %376 = vmatprep.subr.mxu0 0.0
    %377 = vmatpush2.msra.mxu0 %v320
    %378 = vmatprep.subr.mxu0 0.0
    %379 = vmatpush2.msra.mxu0 %v319
    %380 = vmatprep.subr.mxu0 0.0
    %381 = vmatpush2.msra.mxu0 %v318
    %382 = vmatprep.subr.mxu0 0.0
    %383 = vmatpush2.msra.mxu0 %v317
    %384 = vmatprep.subr.mxu0 0.0
    %385 = vmatpush2.msra.mxu0 %v316
    %386 = vmatprep.subr.mxu0 0.0
    %387 = vmatpush2.msra.mxu0 %v315
    %388 = vmatprep.subr.mxu0 0.0
    %389 = vmatpush2.msra.mxu0 %v314
    %390 = vmatprep.subr.mxu0 0.0
    %391 = vmatpush2.msra.mxu0 %v313
    %392 = vmatprep.subr.mxu0 0.0
    %393 = vmatpush2.msra.mxu0 %v312
    %394 = vmatprep.subr.mxu0 0.0
    %395 = vmatpush2.msra.mxu0 %v311
    %396 = vmatprep.subr.mxu0 0.0
    %397 = vmatpush2.msra.mxu0 %v310
    %398 = vmatprep.subr.mxu0 0.0
    %399 = vmatpush2.msra.mxu0 %v309
    %400 = vmatprep.subr.mxu0 0.0
    %401 = vmatpush2.msra.mxu0 %v308
    %402 = vmatprep.subr.mxu0 0.0
    %403 = vmatpush2.msra.mxu0 %v307
    %404 = vmatprep.subr.mxu0 0.0
    %405 = vmatpush2.msra.mxu0 %v306
    %406 = vmatprep.subr.mxu0 0.0
    %407 = vmatpush2.msra.mxu0 %v305
    %408 = vmatprep.mubr.f32.mxu0 %v287
    %409 = vmatmul.mubr.f32.gmra.mxu0 %v286
    %v410 = vpop.f32.mrf.mxu0
    %v411 = vadd.f32 %v342, %v410
    %v412 = vpop.f32.mrf.mxu0
    %413 = vdwg.mxu0
    %414 = vmatprep.subr.mxu0 0.0
    %415 = vmatpush1.msra.mxu0 %v336
    %416 = vmatprep.subr.mxu0 0.0
    %417 = vmatpush1.msra.mxu0 %v335
    %418 = vmatprep.subr.mxu0 0.0
    %419 = vmatpush1.msra.mxu0 %v334
    %420 = vmatprep.subr.mxu0 0.0
    %421 = vmatpush1.msra.mxu0 %v333
    %422 = vmatprep.subr.mxu0 0.0
    %423 = vmatpush1.msra.mxu0 %v332
    %424 = vmatprep.subr.mxu0 0.0
    %425 = vmatpush1.msra.mxu0 %v331
    %426 = vmatprep.subr.mxu0 0.0
    %427 = vmatpush1.msra.mxu0 %v330
    %428 = vmatprep.subr.mxu0 0.0
    %429 = vmatpush1.msra.mxu0 %v329
    %430 = vmatprep.subr.mxu0 0.0
    %431 = vmatpush1.msra.mxu0 %v328
    %432 = vmatprep.subr.mxu0 0.0
    %433 = vmatpush1.msra.mxu0 %v327
    %434 = vmatprep.subr.mxu0 0.0
    %435 = vmatpush1.msra.mxu0 %v326
    %436 = vmatprep.subr.mxu0 0.0
    %437 = vmatpush1.msra.mxu0 %v325
    %438 = vmatprep.subr.mxu0 0.0
    %439 = vmatpush1.msra.mxu0 %v324
    %440 = vmatprep.subr.mxu0 0.0
    %441 = vmatpush1.msra.mxu0 %v323
    %442 = vmatprep.subr.mxu0 0.0
    %443 = vmatpush1.msra.mxu0 %v322
    %444 = vmatprep.subr.mxu0 0.0
    %445 = vmatpush1.msra.mxu0 %v321
    %446 = vmatprep.subr.mxu0 0.0
    %447 = vmatpush2.msra.mxu0 0.0
    %448 = vmatprep.subr.mxu0 0.0
    %449 = vmatpush2.msra.mxu0 0.0
    %450 = vmatprep.subr.mxu0 0.0
    %451 = vmatpush2.msra.mxu0 0.0
    %452 = vmatprep.subr.mxu0 0.0
    %453 = vmatpush2.msra.mxu0 0.0
    %454 = vmatprep.subr.mxu0 0.0
    %455 = vmatpush2.msra.mxu0 0.0
    %456 = vmatprep.subr.mxu0 0.0
    %457 = vmatpush2.msra.mxu0 0.0
    %458 = vmatprep.subr.mxu0 0.0
    %459 = vmatpush2.msra.mxu0 0.0
    %460 = vmatprep.subr.mxu0 0.0
    %461 = vmatpush2.msra.mxu0 0.0
    %462 = vmatprep.subr.mxu0 0.0
    %463 = vmatpush2.msra.mxu0 0.0
    %464 = vmatprep.subr.mxu0 0.0
    %465 = vmatpush2.msra.mxu0 0.0
    %466 = vmatprep.subr.mxu0 0.0
    %467 = vmatpush2.msra.mxu0 0.0
    %468 = vmatprep.subr.mxu0 0.0
    %469 = vmatpush2.msra.mxu0 0.0
    %470 = vmatprep.subr.mxu0 0.0
    %471 = vmatpush2.msra.mxu0 0.0
    %472 = vmatprep.subr.mxu0 0.0
    %473 = vmatpush2.msra.mxu0 0.0
    %474 = vmatprep.subr.mxu0 0.0
    %475 = vmatpush2.msra.mxu0 0.0
    %476 = vmatprep.subr.mxu0 0.0
    %477 = vmatpush2.msra.mxu0 0.0
    %478 = vmatprep.mubr.f32.mxu0 0.0
    %479 = vmatmul.mubr.f32.gmra.mxu0 %v288
    %v480 = vpop.f32.mrf.mxu0
    %v481 = vadd.f32 %v411, %v480
    %v482 = vpop.f32.mrf.mxu0
    %483 = vdwg.mxu0
    %v484 = vld [vmem:[%s2] sm:$0xff]
    %v485 = vadd.f32 %v481, %v484
    %v486 = vld [vmem:[%s3] sm:$0xff]
    %v487 = vld [vmem:[%s6] sm:$0x1]
    %v488 = vld [vmem:[%s7] sm:$0x1]
    %v489 = vsel %vm283, %v485, 0.0
    %490 = vadd.xlane.f32.xlu0 %v489
    %v491 = vpop.xlane.xlu0 %490
    %v492 = vrcp.pop 32.0
    %v493 = vmul.f32 %v491, %v492
    %v494 = vsub.f32 %v485, %v493
    %v495 = vmul.f32 %v494, %v494
    %v496 = vsel %vm283, %v495, 0.0
    %497 = vadd.xlane.f32.xlu0 %v496
    %v498 = vpop.xlane.xlu0 %497
    %v499 = vmul.f32 %v498, %v492
    %v500 = vadd.f32 %v499, 1e-05
    %v501 = vrsqrt.pop %v500
    %v502 = vmul.f32 %v494, %v501
    %v504 = vlaneseq
    %v505 = vshrl.u32 %v504, 7
    %v506 = vsub.s32 0, %v505
    %v507 = vrot.slane %v487, %v506
    %v509 = vmul.f32 %v502, %v507
    %v511 = vlaneseq
    %v512 = vshrl.u32 %v511, 7
    %v513 = vsub.s32 0, %v512
    %v514 = vrot.slane %v488, %v513
    %v516 = vadd.f32 %v509, %v514
    %v517 = vld [vmem:[%s8] sm:$0xff]
    %v518 = vld [vmem:[%s8 + $0x8] sm:$0xff]
    %v519 = vld [vmem:[%s8 + $0x10] sm:$0xff]
    %v520 = vld [vmem:[%s8 + $0x18] sm:$0xff]
    %v521 = vld [vmem:[%s8 + $0x20] sm:$0xff]
    %v522 = vld [vmem:[%s8 + $0x28] sm:$0xff]
    %v523 = vld [vmem:[%s8 + $0x30] sm:$0xff]
    %v524 = vld [vmem:[%s8 + $0x38] sm:$0xff]
    %v525 = vld [vmem:[%s8 + $0x40] sm:$0xff]
    %v526 = vld [vmem:[%s8 + $0x48] sm:$0xff]
    %v527 = vld [vmem:[%s8 + $0x50] sm:$0xff]
    %v528 = vld [vmem:[%s8 + $0x58] sm:$0xff]
    %v529 = vld [vmem:[%s8 + $0x60] sm:$0xff]
    %v530 = vld [vmem:[%s8 + $0x68] sm:$0xff]
    %v531 = vld [vmem:[%s8 + $0x70] sm:$0xff]
    %v532 = vld [vmem:[%s8 + $0x78] sm:$0xff]
    %v534 = vsel %vm283, %v516, 0
    %536 = vmatprep.subr.mxu0 0.0
    %537 = vmatpush1.msra.mxu0 0.0
    %538 = vmatprep.subr.mxu0 0.0
    %539 = vmatpush1.msra.mxu0 0.0
    %540 = vmatprep.subr.mxu0 0.0
    %541 = vmatpush1.msra.mxu0 0.0
    %542 = vmatprep.subr.mxu0 0.0
    %543 = vmatpush1.msra.mxu0 0.0
    %544 = vmatprep.subr.mxu0 0.0
    %545 = vmatpush1.msra.mxu0 0.0
    %546 = vmatprep.subr.mxu0 0.0
    %547 = vmatpush1.msra.mxu0 0.0
    %548 = vmatprep.subr.mxu0 0.0
    %549 = vmatpush1.msra.mxu0 0.0
    %550 = vmatprep.subr.mxu0 0.0
    %551 = vmatpush1.msra.mxu0 0.0
    %552 = vmatprep.subr.mxu0 0.0
    %553 = vmatpush1.msra.mxu0 0.0
    %554 = vmatprep.subr.mxu0 0.0
    %555 = vmatpush1.msra.mxu0 0.0
    %556 = vmatprep.subr.mxu0 0.0
    %557 = vmatpush1.msra.mxu0 0.0
    %558 = vmatprep.subr.mxu0 0.0
    %559 = vmatpush1.msra.mxu0 0.0
    %560 = vmatprep.subr.mxu0 0.0
    %561 = vmatpush1.msra.mxu0 %v520
    %562 = vmatprep.subr.mxu0 0.0
    %563 = vmatpush1.msra.mxu0 %v519
    %564 = vmatprep.subr.mxu0 0.0
    %565 = vmatpush1.msra.mxu0 %v518
    %566 = vmatprep.subr.mxu0 0.0
    %567 = vmatpush1.msra.mxu0 %v517
    %568 = vmatprep.subr.mxu0 0.0
    %569 = vmatpush2.msra.mxu0 0.0
    %570 = vmatprep.subr.mxu0 0.0
    %571 = vmatpush2.msra.mxu0 0.0
    %572 = vmatprep.subr.mxu0 0.0
    %573 = vmatpush2.msra.mxu0 0.0
    %574 = vmatprep.subr.mxu0 0.0
    %575 = vmatpush2.msra.mxu0 0.0
    %576 = vmatprep.subr.mxu0 0.0
    %577 = vmatpush2.msra.mxu0 0.0
    %578 = vmatprep.subr.mxu0 0.0
    %579 = vmatpush2.msra.mxu0 0.0
    %580 = vmatprep.subr.mxu0 0.0
    %581 = vmatpush2.msra.mxu0 0.0
    %582 = vmatprep.subr.mxu0 0.0
    %583 = vmatpush2.msra.mxu0 0.0
    %584 = vmatprep.subr.mxu0 0.0
    %585 = vmatpush2.msra.mxu0 0.0
    %586 = vmatprep.subr.mxu0 0.0
    %587 = vmatpush2.msra.mxu0 0.0
    %588 = vmatprep.subr.mxu0 0.0
    %589 = vmatpush2.msra.mxu0 0.0
    %590 = vmatprep.subr.mxu0 0.0
    %591 = vmatpush2.msra.mxu0 0.0
    %592 = vmatprep.subr.mxu0 0.0
    %593 = vmatpush2.msra.mxu0 0.0
    %594 = vmatprep.subr.mxu0 0.0
    %595 = vmatpush2.msra.mxu0 0.0
    %596 = vmatprep.subr.mxu0 0.0
    %597 = vmatpush2.msra.mxu0 0.0
    %598 = vmatprep.subr.mxu0 0.0
    %599 = vmatpush2.msra.mxu0 0.0
    %600 = vmatprep.mubr.f32.mxu0 0.0
    %601 = vmatmul.mubr.f32.gmra.mxu0 %v534
    %v602 = vpop.f32.mrf.mxu0
    %v603 = vadd.f32 0.0, %v602
    %v604 = vpop.f32.mrf.mxu0
    %605 = vdwg.mxu0
    %606 = vmatprep.subr.mxu0 0.0
    %607 = vmatpush1.msra.mxu0 0.0
    %608 = vmatprep.subr.mxu0 0.0
    %609 = vmatpush1.msra.mxu0 0.0
    %610 = vmatprep.subr.mxu0 0.0
    %611 = vmatpush1.msra.mxu0 0.0
    %612 = vmatprep.subr.mxu0 0.0
    %613 = vmatpush1.msra.mxu0 0.0
    %614 = vmatprep.subr.mxu0 0.0
    %615 = vmatpush1.msra.mxu0 0.0
    %616 = vmatprep.subr.mxu0 0.0
    %617 = vmatpush1.msra.mxu0 0.0
    %618 = vmatprep.subr.mxu0 0.0
    %619 = vmatpush1.msra.mxu0 0.0
    %620 = vmatprep.subr.mxu0 0.0
    %621 = vmatpush1.msra.mxu0 0.0
    %622 = vmatprep.subr.mxu0 0.0
    %623 = vmatpush1.msra.mxu0 0.0
    %624 = vmatprep.subr.mxu0 0.0
    %625 = vmatpush1.msra.mxu0 0.0
    %626 = vmatprep.subr.mxu0 0.0
    %627 = vmatpush1.msra.mxu0 0.0
    %628 = vmatprep.subr.mxu0 0.0
    %629 = vmatpush1.msra.mxu0 0.0
    %630 = vmatprep.subr.mxu0 0.0
    %631 = vmatpush1.msra.mxu0 %v524
    %632 = vmatprep.subr.mxu0 0.0
    %633 = vmatpush1.msra.mxu0 %v523
    %634 = vmatprep.subr.mxu0 0.0
    %635 = vmatpush1.msra.mxu0 %v522
    %636 = vmatprep.subr.mxu0 0.0
    %637 = vmatpush1.msra.mxu0 %v521
    %638 = vmatprep.subr.mxu0 0.0
    %639 = vmatpush2.msra.mxu0 0.0
    %640 = vmatprep.subr.mxu0 0.0
    %641 = vmatpush2.msra.mxu0 0.0
    %642 = vmatprep.subr.mxu0 0.0
    %643 = vmatpush2.msra.mxu0 0.0
    %644 = vmatprep.subr.mxu0 0.0
    %645 = vmatpush2.msra.mxu0 0.0
    %646 = vmatprep.subr.mxu0 0.0
    %647 = vmatpush2.msra.mxu0 0.0
    %648 = vmatprep.subr.mxu0 0.0
    %649 = vmatpush2.msra.mxu0 0.0
    %650 = vmatprep.subr.mxu0 0.0
    %651 = vmatpush2.msra.mxu0 0.0
    %652 = vmatprep.subr.mxu0 0.0
    %653 = vmatpush2.msra.mxu0 0.0
    %654 = vmatprep.subr.mxu0 0.0
    %655 = vmatpush2.msra.mxu0 0.0
    %656 = vmatprep.subr.mxu0 0.0
    %657 = vmatpush2.msra.mxu0 0.0
    %658 = vmatprep.subr.mxu0 0.0
    %659 = vmatpush2.msra.mxu0 0.0
    %660 = vmatprep.subr.mxu0 0.0
    %661 = vmatpush2.msra.mxu0 0.0
    %662 = vmatprep.subr.mxu0 0.0
    %663 = vmatpush2.msra.mxu0 0.0
    %664 = vmatprep.subr.mxu0 0.0
    %665 = vmatpush2.msra.mxu0 0.0
    %666 = vmatprep.subr.mxu0 0.0
    %667 = vmatpush2.msra.mxu0 0.0
    %668 = vmatprep.subr.mxu0 0.0
    %669 = vmatpush2.msra.mxu0 0.0
    %670 = vmatprep.mubr.f32.mxu0 0.0
    %671 = vmatmul.mubr.f32.gmra.mxu0 %v534
    %v672 = vpop.f32.mrf.mxu0
    %v673 = vadd.f32 0.0, %v672
    %v674 = vpop.f32.mrf.mxu0
    %675 = vdwg.mxu0
    %676 = vmatprep.subr.mxu0 0.0
    %677 = vmatpush1.msra.mxu0 0.0
    %678 = vmatprep.subr.mxu0 0.0
    %679 = vmatpush1.msra.mxu0 0.0
    %680 = vmatprep.subr.mxu0 0.0
    %681 = vmatpush1.msra.mxu0 0.0
    %682 = vmatprep.subr.mxu0 0.0
    %683 = vmatpush1.msra.mxu0 0.0
    %684 = vmatprep.subr.mxu0 0.0
    %685 = vmatpush1.msra.mxu0 0.0
    %686 = vmatprep.subr.mxu0 0.0
    %687 = vmatpush1.msra.mxu0 0.0
    %688 = vmatprep.subr.mxu0 0.0
    %689 = vmatpush1.msra.mxu0 0.0
    %690 = vmatprep.subr.mxu0 0.0
    %691 = vmatpush1.msra.mxu0 0.0
    %692 = vmatprep.subr.mxu0 0.0
    %693 = vmatpush1.msra.mxu0 0.0
    %694 = vmatprep.subr.mxu0 0.0
    %695 = vmatpush1.msra.mxu0 0.0
    %696 = vmatprep.subr.mxu0 0.0
    %697 = vmatpush1.msra.mxu0 0.0
    %698 = vmatprep.subr.mxu0 0.0
    %699 = vmatpush1.msra.mxu0 0.0
    %700 = vmatprep.subr.mxu0 0.0
    %701 = vmatpush1.msra.mxu0 %v528
    %702 = vmatprep.subr.mxu0 0.0
    %703 = vmatpush1.msra.mxu0 %v527
    %704 = vmatprep.subr.mxu0 0.0
    %705 = vmatpush1.msra.mxu0 %v526
    %706 = vmatprep.subr.mxu0 0.0
    %707 = vmatpush1.msra.mxu0 %v525
    %708 = vmatprep.subr.mxu0 0.0
    %709 = vmatpush2.msra.mxu0 0.0
    %710 = vmatprep.subr.mxu0 0.0
    %711 = vmatpush2.msra.mxu0 0.0
    %712 = vmatprep.subr.mxu0 0.0
    %713 = vmatpush2.msra.mxu0 0.0
    %714 = vmatprep.subr.mxu0 0.0
    %715 = vmatpush2.msra.mxu0 0.0
    %716 = vmatprep.subr.mxu0 0.0
    %717 = vmatpush2.msra.mxu0 0.0
    %718 = vmatprep.subr.mxu0 0.0
    %719 = vmatpush2.msra.mxu0 0.0
    %720 = vmatprep.subr.mxu0 0.0
    %721 = vmatpush2.msra.mxu0 0.0
    %722 = vmatprep.subr.mxu0 0.0
    %723 = vmatpush2.msra.mxu0 0.0
    %724 = vmatprep.subr.mxu0 0.0
    %725 = vmatpush2.msra.mxu0 0.0
    %726 = vmatprep.subr.mxu0 0.0
    %727 = vmatpush2.msra.mxu0 0.0
    %728 = vmatprep.subr.mxu0 0.0
    %729 = vmatpush2.msra.mxu0 0.0
    %730 = vmatprep.subr.mxu0 0.0
    %731 = vmatpush2.msra.mxu0 0.0
    %732 = vmatprep.subr.mxu0 0.0
    %733 = vmatpush2.msra.mxu0 0.0
    %734 = vmatprep.subr.mxu0 0.0
    %735 = vmatpush2.msra.mxu0 0.0
    %736 = vmatprep.subr.mxu0 0.0
    %737 = vmatpush2.msra.mxu0 0.0
    %738 = vmatprep.subr.mxu0 0.0
    %739 = vmatpush2.msra.mxu0 0.0
    %740 = vmatprep.mubr.f32.mxu0 0.0
    %741 = vmatmul.mubr.f32.gmra.mxu0 %v534
    %v742 = vpop.f32.mrf.mxu0
    %v743 = vadd.f32 0.0, %v742
    %v744 = vpop.f32.mrf.mxu0
    %745 = vdwg.mxu0
    %746 = vmatprep.subr.mxu0 0.0
    %747 = vmatpush1.msra.mxu0 0.0
    %748 = vmatprep.subr.mxu0 0.0
    %749 = vmatpush1.msra.mxu0 0.0
    %750 = vmatprep.subr.mxu0 0.0
    %751 = vmatpush1.msra.mxu0 0.0
    %752 = vmatprep.subr.mxu0 0.0
    %753 = vmatpush1.msra.mxu0 0.0
    %754 = vmatprep.subr.mxu0 0.0
    %755 = vmatpush1.msra.mxu0 0.0
    %756 = vmatprep.subr.mxu0 0.0
    %757 = vmatpush1.msra.mxu0 0.0
    %758 = vmatprep.subr.mxu0 0.0
    %759 = vmatpush1.msra.mxu0 0.0
    %760 = vmatprep.subr.mxu0 0.0
    %761 = vmatpush1.msra.mxu0 0.0
    %762 = vmatprep.subr.mxu0 0.0
    %763 = vmatpush1.msra.mxu0 0.0
    %764 = vmatprep.subr.mxu0 0.0
    %765 = vmatpush1.msra.mxu0 0.0
    %766 = vmatprep.subr.mxu0 0.0
    %767 = vmatpush1.msra.mxu0 0.0
    %768 = vmatprep.subr.mxu0 0.0
    %769 = vmatpush1.msra.mxu0 0.0
    %770 = vmatprep.subr.mxu0 0.0
    %771 = vmatpush1.msra.mxu0 %v532
    %772 = vmatprep.subr.mxu0 0.0
    %773 = vmatpush1.msra.mxu0 %v531
    %774 = vmatprep.subr.mxu0 0.0
    %775 = vmatpush1.msra.mxu0 %v530
    %776 = vmatprep.subr.mxu0 0.0
    %777 = vmatpush1.msra.mxu0 %v529
    %778 = vmatprep.subr.mxu0 0.0
    %779 = vmatpush2.msra.mxu0 0.0
    %780 = vmatprep.subr.mxu0 0.0
    %781 = vmatpush2.msra.mxu0 0.0
    %782 = vmatprep.subr.mxu0 0.0
    %783 = vmatpush2.msra.mxu0 0.0
    %784 = vmatprep.subr.mxu0 0.0
    %785 = vmatpush2.msra.mxu0 0.0
    %786 = vmatprep.subr.mxu0 0.0
    %787 = vmatpush2.msra.mxu0 0.0
    %788 = vmatprep.subr.mxu0 0.0
    %789 = vmatpush2.msra.mxu0 0.0
    %790 = vmatprep.subr.mxu0 0.0
    %791 = vmatpush2.msra.mxu0 0.0
    %792 = vmatprep.subr.mxu0 0.0
    %793 = vmatpush2.msra.mxu0 0.0
    %794 = vmatprep.subr.mxu0 0.0
    %795 = vmatpush2.msra.mxu0 0.0
    %796 = vmatprep.subr.mxu0 0.0
    %797 = vmatpush2.msra.mxu0 0.0
    %798 = vmatprep.subr.mxu0 0.0
    %799 = vmatpush2.msra.mxu0 0.0
    %800 = vmatprep.subr.mxu0 0.0
    %801 = vmatpush2.msra.mxu0 0.0
    %802 = vmatprep.subr.mxu0 0.0
    %803 = vmatpush2.msra.mxu0 0.0
    %804 = vmatprep.subr.mxu0 0.0
    %805 = vmatpush2.msra.mxu0 0.0
    %806 = vmatprep.subr.mxu0 0.0
    %807 = vmatpush2.msra.mxu0 0.0
    %808 = vmatprep.subr.mxu0 0.0
    %809 = vmatpush2.msra.mxu0 0.0
    %810 = vmatprep.mubr.f32.mxu0 0.0
    %811 = vmatmul.mubr.f32.gmra.mxu0 %v534
    %v812 = vpop.f32.mrf.mxu0
    %v813 = vadd.f32 0.0, %v812
    %v814 = vpop.f32.mrf.mxu0
    %815 = vdwg.mxu0
    %v816 = vmul.f32 %v603, 0.35355338
    %v817 = vmul.f32 %v673, 0.35355338
    %v818 = vmul.f32 %v743, 0.35355338
    %v819 = vmul.f32 %v813, 0.35355338
    %v820 = vld [vmem:[%s9] sm:$0xff]
    %v821 = vld [vmem:[%s9 + $0x8] sm:$0xff]
    %v822 = vld [vmem:[%s9 + $0x10] sm:$0xff]
    %v823 = vld [vmem:[%s9 + $0x18] sm:$0xff]
    %v824 = vld [vmem:[%s9 + $0x20] sm:$0xff]
    %v825 = vld [vmem:[%s9 + $0x28] sm:$0xff]
    %v826 = vld [vmem:[%s9 + $0x30] sm:$0xff]
    %v827 = vld [vmem:[%s9 + $0x38] sm:$0xff]
    %v828 = vld [vmem:[%s9 + $0x40] sm:$0xff]
    %v829 = vld [vmem:[%s9 + $0x48] sm:$0xff]
    %v830 = vld [vmem:[%s9 + $0x50] sm:$0xff]
    %v831 = vld [vmem:[%s9 + $0x58] sm:$0xff]
    %v832 = vld [vmem:[%s9 + $0x60] sm:$0xff]
    %v833 = vld [vmem:[%s9 + $0x68] sm:$0xff]
    %v834 = vld [vmem:[%s9 + $0x70] sm:$0xff]
    %v835 = vld [vmem:[%s9 + $0x78] sm:$0xff]
    %836 = vmatprep.subr.mxu0 0.0
    %837 = vmatpush1.msra.mxu0 0.0
    %838 = vmatprep.subr.mxu0 0.0
    %839 = vmatpush1.msra.mxu0 0.0
    %840 = vmatprep.subr.mxu0 0.0
    %841 = vmatpush1.msra.mxu0 0.0
    %842 = vmatprep.subr.mxu0 0.0
    %843 = vmatpush1.msra.mxu0 0.0
    %844 = vmatprep.subr.mxu0 0.0
    %845 = vmatpush1.msra.mxu0 0.0
    %846 = vmatprep.subr.mxu0 0.0
    %847 = vmatpush1.msra.mxu0 0.0
    %848 = vmatprep.subr.mxu0 0.0
    %849 = vmatpush1.msra.mxu0 0.0
    %850 = vmatprep.subr.mxu0 0.0
    %851 = vmatpush1.msra.mxu0 0.0
    %852 = vmatprep.subr.mxu0 0.0
    %853 = vmatpush1.msra.mxu0 0.0
    %854 = vmatprep.subr.mxu0 0.0
    %855 = vmatpush1.msra.mxu0 0.0
    %856 = vmatprep.subr.mxu0 0.0
    %857 = vmatpush1.msra.mxu0 0.0
    %858 = vmatprep.subr.mxu0 0.0
    %859 = vmatpush1.msra.mxu0 0.0
    %860 = vmatprep.subr.mxu0 0.0
    %861 = vmatpush1.msra.mxu0 %v823
    %862 = vmatprep.subr.mxu0 0.0
    %863 = vmatpush1.msra.mxu0 %v822
    %864 = vmatprep.subr.mxu0 0.0
    %865 = vmatpush1.msra.mxu0 %v821
    %866 = vmatprep.subr.mxu0 0.0
    %867 = vmatpush1.msra.mxu0 %v820
    %868 = vmatprep.subr.mxu0 0.0
    %869 = vmatpush2.msra.mxu0 0.0
    %870 = vmatprep.subr.mxu0 0.0
    %871 = vmatpush2.msra.mxu0 0.0
    %872 = vmatprep.subr.mxu0 0.0
    %873 = vmatpush2.msra.mxu0 0.0
    %874 = vmatprep.subr.mxu0 0.0
    %875 = vmatpush2.msra.mxu0 0.0
    %876 = vmatprep.subr.mxu0 0.0
    %877 = vmatpush2.msra.mxu0 0.0
    %878 = vmatprep.subr.mxu0 0.0
    %879 = vmatpush2.msra.mxu0 0.0
    %880 = vmatprep.subr.mxu0 0.0
    %881 = vmatpush2.msra.mxu0 0.0
    %882 = vmatprep.subr.mxu0 0.0
    %883 = vmatpush2.msra.mxu0 0.0
    %884 = vmatprep.subr.mxu0 0.0
    %885 = vmatpush2.msra.mxu0 0.0
    %886 = vmatprep.subr.mxu0 0.0
    %887 = vmatpush2.msra.mxu0 0.0
    %888 = vmatprep.subr.mxu0 0.0
    %889 = vmatpush2.msra.mxu0 0.0
    %890 = vmatprep.subr.mxu0 0.0
    %891 = vmatpush2.msra.mxu0 0.0
    %892 = vmatprep.subr.mxu0 0.0
    %893 = vmatpush2.msra.mxu0 0.0
    %894 = vmatprep.subr.mxu0 0.0
    %895 = vmatpush2.msra.mxu0 0.0
    %896 = vmatprep.subr.mxu0 0.0
    %897 = vmatpush2.msra.mxu0 0.0
    %898 = vmatprep.subr.mxu0 0.0
    %899 = vmatpush2.msra.mxu0 0.0
    %900 = vmatprep.mubr.f32.mxu0 0.0
    %901 = vmatmul.mubr.f32.gmra.mxu0 %v534
    %v902 = vpop.f32.mrf.mxu0
    %v903 = vadd.f32 0.0, %v902
    %v904 = vpop.f32.mrf.mxu0
    %905 = vdwg.mxu0
    %906 = vmatprep.subr.mxu0 0.0
    %907 = vmatpush1.msra.mxu0 0.0
    %908 = vmatprep.subr.mxu0 0.0
    %909 = vmatpush1.msra.mxu0 0.0
    %910 = vmatprep.subr.mxu0 0.0
    %911 = vmatpush1.msra.mxu0 0.0
    %912 = vmatprep.subr.mxu0 0.0
    %913 = vmatpush1.msra.mxu0 0.0
    %914 = vmatprep.subr.mxu0 0.0
    %915 = vmatpush1.msra.mxu0 0.0
    %916 = vmatprep.subr.mxu0 0.0
    %917 = vmatpush1.msra.mxu0 0.0
    %918 = vmatprep.subr.mxu0 0.0
    %919 = vmatpush1.msra.mxu0 0.0
    %920 = vmatprep.subr.mxu0 0.0
    %921 = vmatpush1.msra.mxu0 0.0
    %922 = vmatprep.subr.mxu0 0.0
    %923 = vmatpush1.msra.mxu0 0.0
    %924 = vmatprep.subr.mxu0 0.0
    %925 = vmatpush1.msra.mxu0 0.0
    %926 = vmatprep.subr.mxu0 0.0
    %927 = vmatpush1.msra.mxu0 0.0
    %928 = vmatprep.subr.mxu0 0.0
    %929 = vmatpush1.msra.mxu0 0.0
    %930 = vmatprep.subr.mxu0 0.0
    %931 = vmatpush1.msra.mxu0 %v827
    %932 = vmatprep.subr.mxu0 0.0
    %933 = vmatpush1.msra.mxu0 %v826
    %934 = vmatprep.subr.mxu0 0.0
    %935 = vmatpush1.msra.mxu0 %v825
    %936 = vmatprep.subr.mxu0 0.0
    %937 = vmatpush1.msra.mxu0 %v824
    %938 = vmatprep.subr.mxu0 0.0
    %939 = vmatpush2.msra.mxu0 0.0
    %940 = vmatprep.subr.mxu0 0.0
    %941 = vmatpush2.msra.mxu0 0.0
    %942 = vmatprep.subr.mxu0 0.0
    %943 = vmatpush2.msra.mxu0 0.0
    %944 = vmatprep.subr.mxu0 0.0
    %945 = vmatpush2.msra.mxu0 0.0
    %946 = vmatprep.subr.mxu0 0.0
    %947 = vmatpush2.msra.mxu0 0.0
    %948 = vmatprep.subr.mxu0 0.0
    %949 = vmatpush2.msra.mxu0 0.0
    %950 = vmatprep.subr.mxu0 0.0
    %951 = vmatpush2.msra.mxu0 0.0
    %952 = vmatprep.subr.mxu0 0.0
    %953 = vmatpush2.msra.mxu0 0.0
    %954 = vmatprep.subr.mxu0 0.0
    %955 = vmatpush2.msra.mxu0 0.0
    %956 = vmatprep.subr.mxu0 0.0
    %957 = vmatpush2.msra.mxu0 0.0
    %958 = vmatprep.subr.mxu0 0.0
    %959 = vmatpush2.msra.mxu0 0.0
    %960 = vmatprep.subr.mxu0 0.0
    %961 = vmatpush2.msra.mxu0 0.0
    %962 = vmatprep.subr.mxu0 0.0
    %963 = vmatpush2.msra.mxu0 0.0
    %964 = vmatprep.subr.mxu0 0.0
    %965 = vmatpush2.msra.mxu0 0.0
    %966 = vmatprep.subr.mxu0 0.0
    %967 = vmatpush2.msra.mxu0 0.0
    %968 = vmatprep.subr.mxu0 0.0
    %969 = vmatpush2.msra.mxu0 0.0
    %970 = vmatprep.mubr.f32.mxu0 0.0
    %971 = vmatmul.mubr.f32.gmra.mxu0 %v534
    %v972 = vpop.f32.mrf.mxu0
    %v973 = vadd.f32 0.0, %v972
    %v974 = vpop.f32.mrf.mxu0
    %975 = vdwg.mxu0
    %976 = vmatprep.subr.mxu0 0.0
    %977 = vmatpush1.msra.mxu0 0.0
    %978 = vmatprep.subr.mxu0 0.0
    %979 = vmatpush1.msra.mxu0 0.0
    %980 = vmatprep.subr.mxu0 0.0
    %981 = vmatpush1.msra.mxu0 0.0
    %982 = vmatprep.subr.mxu0 0.0
    %983 = vmatpush1.msra.mxu0 0.0
    %984 = vmatprep.subr.mxu0 0.0
    %985 = vmatpush1.msra.mxu0 0.0
    %986 = vmatprep.subr.mxu0 0.0
    %987 = vmatpush1.msra.mxu0 0.0
    %988 = vmatprep.subr.mxu0 0.0
    %989 = vmatpush1.msra.mxu0 0.0
    %990 = vmatprep.subr.mxu0 0.0
    %991 = vmatpush1.msra.mxu0 0.0
    %992 = vmatprep.subr.mxu0 0.0
    %993 = vmatpush1.msra.mxu0 0.0
    %994 = vmatprep.subr.mxu0 0.0
    %995 = vmatpush1.msra.mxu0 0.0
    %996 = vmatprep.subr.mxu0 0.0
    %997 = vmatpush1.msra.mxu0 0.0
    %998 = vmatprep.subr.mxu0 0.0
    %999 = vmatpush1.msra.mxu0 0.0
    %1000 = vmatprep.subr.mxu0 0.0
    %1001 = vmatpush1.msra.mxu0 %v831
    %1002 = vmatprep.subr.mxu0 0.0
    %1003 = vmatpush1.msra.mxu0 %v830
    %1004 = vmatprep.subr.mxu0 0.0
    %1005 = vmatpush1.msra.mxu0 %v829
    %1006 = vmatprep.subr.mxu0 0.0
    %1007 = vmatpush1.msra.mxu0 %v828
    %1008 = vmatprep.subr.mxu0 0.0
    %1009 = vmatpush2.msra.mxu0 0.0
    %1010 = vmatprep.subr.mxu0 0.0
    %1011 = vmatpush2.msra.mxu0 0.0
    %1012 = vmatprep.subr.mxu0 0.0
    %1013 = vmatpush2.msra.mxu0 0.0
    %1014 = vmatprep.subr.mxu0 0.0
    %1015 = vmatpush2.msra.mxu0 0.0
    %1016 = vmatprep.subr.mxu0 0.0
    %1017 = vmatpush2.msra.mxu0 0.0
    %1018 = vmatprep.subr.mxu0 0.0
    %1019 = vmatpush2.msra.mxu0 0.0
    %1020 = vmatprep.subr.mxu0 0.0
    %1021 = vmatpush2.msra.mxu0 0.0
    %1022 = vmatprep.subr.mxu0 0.0
    %1023 = vmatpush2.msra.mxu0 0.0
    %1024 = vmatprep.subr.mxu0 0.0
    %1025 = vmatpush2.msra.mxu0 0.0
    %1026 = vmatprep.subr.mxu0 0.0
    %1027 = vmatpush2.msra.mxu0 0.0
    %1028 = vmatprep.subr.mxu0 0.0
    %1029 = vmatpush2.msra.mxu0 0.0
    %1030 = vmatprep.subr.mxu0 0.0
    %1031 = vmatpush2.msra.mxu0 0.0
    %1032 = vmatprep.subr.mxu0 0.0
    %1033 = vmatpush2.msra.mxu0 0.0
    %1034 = vmatprep.subr.mxu0 0.0
    %1035 = vmatpush2.msra.mxu0 0.0
    %1036 = vmatprep.subr.mxu0 0.0
    %1037 = vmatpush2.msra.mxu0 0.0
    %1038 = vmatprep.subr.mxu0 0.0
    %1039 = vmatpush2.msra.mxu0 0.0
    %1040 = vmatprep.mubr.f32.mxu0 0.0
    %1041 = vmatmul.mubr.f32.gmra.mxu0 %v534
    %v1042 = vpop.f32.mrf.mxu0
    %v1043 = vadd.f32 0.0, %v1042
    %v1044 = vpop.f32.mrf.mxu0
    %1045 = vdwg.mxu0
    %1046 = vmatprep.subr.mxu0 0.0
    %1047 = vmatpush1.msra.mxu0 0.0
    %1048 = vmatprep.subr.mxu0 0.0
    %1049 = vmatpush1.msra.mxu0 0.0
    %1050 = vmatprep.subr.mxu0 0.0
    %1051 = vmatpush1.msra.mxu0 0.0
    %1052 = vmatprep.subr.mxu0 0.0
    %1053 = vmatpush1.msra.mxu0 0.0
    %1054 = vmatprep.subr.mxu0 0.0
    %1055 = vmatpush1.msra.mxu0 0.0
    %1056 = vmatprep.subr.mxu0 0.0
    %1057 = vmatpush1.msra.mxu0 0.0
    %1058 = vmatprep.subr.mxu0 0.0
    %1059 = vmatpush1.msra.mxu0 0.0
    %1060 = vmatprep.subr.mxu0 0.0
    %1061 = vmatpush1.msra.mxu0 0.0
    %1062 = vmatprep.subr.mxu0 0.0
    %1063 = vmatpush1.msra.mxu0 0.0
    %1064 = vmatprep.subr.mxu0 0.0
    %1065 = vmatpush1.msra.mxu0 0.0
    %1066 = vmatprep.subr.mxu0 0.0
    %1067 = vmatpush1.msra.mxu0 0.0
    %1068 = vmatprep.subr.mxu0 0.0
    %1069 = vmatpush1.msra.mxu0 0.0
    %1070 = vmatprep.subr.mxu0 0.0
    %1071 = vmatpush1.msra.mxu0 %v835
    %1072 = vmatprep.subr.mxu0 0.0
    %1073 = vmatpush1.msra.mxu0 %v834
    %1074 = vmatprep.subr.mxu0 0.0
    %1075 = vmatpush1.msra.mxu0 %v833
    %1076 = vmatprep.subr.mxu0 0.0
    %1077 = vmatpush1.msra.mxu0 %v832
    %1078 = vmatprep.subr.mxu0 0.0
    %1079 = vmatpush2.msra.mxu0 0.0
    %1080 = vmatprep.subr.mxu0 0.0
    %1081 = vmatpush2.msra.mxu0 0.0
    %1082 = vmatprep.subr.mxu0 0.0
    %1083 = vmatpush2.msra.mxu0 0.0
    %1084 = vmatprep.subr.mxu0 0.0
    %1085 = vmatpush2.msra.mxu0 0.0
    %1086 = vmatprep.subr.mxu0 0.0
    %1087 = vmatpush2.msra.mxu0 0.0
    %1088 = vmatprep.subr.mxu0 0.0
    %1089 = vmatpush2.msra.mxu0 0.0
    %1090 = vmatprep.subr.mxu0 0.0
    %1091 = vmatpush2.msra.mxu0 0.0
    %1092 = vmatprep.subr.mxu0 0.0
    %1093 = vmatpush2.msra.mxu0 0.0
    %1094 = vmatprep.subr.mxu0 0.0
    %1095 = vmatpush2.msra.mxu0 0.0
    %1096 = vmatprep.subr.mxu0 0.0
    %1097 = vmatpush2.msra.mxu0 0.0
    %1098 = vmatprep.subr.mxu0 0.0
    %1099 = vmatpush2.msra.mxu0 0.0
    %1100 = vmatprep.subr.mxu0 0.0
    %1101 = vmatpush2.msra.mxu0 0.0
    %1102 = vmatprep.subr.mxu0 0.0
    %1103 = vmatpush2.msra.mxu0 0.0
    %1104 = vmatprep.subr.mxu0 0.0
    %1105 = vmatpush2.msra.mxu0 0.0
    %1106 = vmatprep.subr.mxu0 0.0
    %1107 = vmatpush2.msra.mxu0 0.0
    %1108 = vmatprep.subr.mxu0 0.0
    %1109 = vmatpush2.msra.mxu0 0.0
    %1110 = vmatprep.mubr.f32.mxu0 0.0
    %1111 = vmatmul.mubr.f32.gmra.mxu0 %v534
    %v1112 = vpop.f32.mrf.mxu0
    %v1113 = vadd.f32 0.0, %v1112
    %v1114 = vpop.f32.mrf.mxu0
    %1115 = vdwg.mxu0
    %v1116 = vld [vmem:[%s10] sm:$0xff]
    %v1117 = vld [vmem:[%s10 + $0x8] sm:$0xff]
    %v1118 = vld [vmem:[%s10 + $0x10] sm:$0xff]
    %v1119 = vld [vmem:[%s10 + $0x18] sm:$0xff]
    %v1120 = vld [vmem:[%s10 + $0x20] sm:$0xff]
    %v1121 = vld [vmem:[%s10 + $0x28] sm:$0xff]
    %v1122 = vld [vmem:[%s10 + $0x30] sm:$0xff]
    %v1123 = vld [vmem:[%s10 + $0x38] sm:$0xff]
    %v1124 = vld [vmem:[%s10 + $0x40] sm:$0xff]
    %v1125 = vld [vmem:[%s10 + $0x48] sm:$0xff]
    %v1126 = vld [vmem:[%s10 + $0x50] sm:$0xff]
    %v1127 = vld [vmem:[%s10 + $0x58] sm:$0xff]
    %v1128 = vld [vmem:[%s10 + $0x60] sm:$0xff]
    %v1129 = vld [vmem:[%s10 + $0x68] sm:$0xff]
    %v1130 = vld [vmem:[%s10 + $0x70] sm:$0xff]
    %v1131 = vld [vmem:[%s10 + $0x78] sm:$0xff]
    %1132 = vmatprep.subr.mxu0 0.0
    %1133 = vmatpush1.msra.mxu0 0.0
    %1134 = vmatprep.subr.mxu0 0.0
    %1135 = vmatpush1.msra.mxu0 0.0
    %1136 = vmatprep.subr.mxu0 0.0
    %1137 = vmatpush1.msra.mxu0 0.0
    %1138 = vmatprep.subr.mxu0 0.0
    %1139 = vmatpush1.msra.mxu0 0.0
    %1140 = vmatprep.subr.mxu0 0.0
    %1141 = vmatpush1.msra.mxu0 0.0
    %1142 = vmatprep.subr.mxu0 0.0
    %1143 = vmatpush1.msra.mxu0 0.0
    %1144 = vmatprep.subr.mxu0 0.0
    %1145 = vmatpush1.msra.mxu0 0.0
    %1146 = vmatprep.subr.mxu0 0.0
    %1147 = vmatpush1.msra.mxu0 0.0
    %1148 = vmatprep.subr.mxu0 0.0
    %1149 = vmatpush1.msra.mxu0 0.0
    %1150 = vmatprep.subr.mxu0 0.0
    %1151 = vmatpush1.msra.mxu0 0.0
    %1152 = vmatprep.subr.mxu0 0.0
    %1153 = vmatpush1.msra.mxu0 0.0
    %1154 = vmatprep.subr.mxu0 0.0
    %1155 = vmatpush1.msra.mxu0 0.0
    %1156 = vmatprep.subr.mxu0 0.0
    %1157 = vmatpush1.msra.mxu0 %v1119
    %1158 = vmatprep.subr.mxu0 0.0
    %1159 = vmatpush1.msra.mxu0 %v1118
    %1160 = vmatprep.subr.mxu0 0.0
    %1161 = vmatpush1.msra.mxu0 %v1117
    %1162 = vmatprep.subr.mxu0 0.0
    %1163 = vmatpush1.msra.mxu0 %v1116
    %1164 = vmatprep.subr.mxu0 0.0
    %1165 = vmatpush2.msra.mxu0 0.0
    %1166 = vmatprep.subr.mxu0 0.0
    %1167 = vmatpush2.msra.mxu0 0.0
    %1168 = vmatprep.subr.mxu0 0.0
    %1169 = vmatpush2.msra.mxu0 0.0
    %1170 = vmatprep.subr.mxu0 0.0
    %1171 = vmatpush2.msra.mxu0 0.0
    %1172 = vmatprep.subr.mxu0 0.0
    %1173 = vmatpush2.msra.mxu0 0.0
    %1174 = vmatprep.subr.mxu0 0.0
    %1175 = vmatpush2.msra.mxu0 0.0
    %1176 = vmatprep.subr.mxu0 0.0
    %1177 = vmatpush2.msra.mxu0 0.0
    %1178 = vmatprep.subr.mxu0 0.0
    %1179 = vmatpush2.msra.mxu0 0.0
    %1180 = vmatprep.subr.mxu0 0.0
    %1181 = vmatpush2.msra.mxu0 0.0
    %1182 = vmatprep.subr.mxu0 0.0
    %1183 = vmatpush2.msra.mxu0 0.0
    %1184 = vmatprep.subr.mxu0 0.0
    %1185 = vmatpush2.msra.mxu0 0.0
    %1186 = vmatprep.subr.mxu0 0.0
    %1187 = vmatpush2.msra.mxu0 0.0
    %1188 = vmatprep.subr.mxu0 0.0
    %1189 = vmatpush2.msra.mxu0 0.0
    %1190 = vmatprep.subr.mxu0 0.0
    %1191 = vmatpush2.msra.mxu0 0.0
    %1192 = vmatprep.subr.mxu0 0.0
    %1193 = vmatpush2.msra.mxu0 0.0
    %1194 = vmatprep.subr.mxu0 0.0
    %1195 = vmatpush2.msra.mxu0 0.0
    %1196 = vmatprep.mubr.f32.mxu0 0.0
    %1197 = vmatmul.mubr.f32.gmra.mxu0 %v534
    %v1198 = vpop.f32.mrf.mxu0
    %v1199 = vadd.f32 0.0, %v1198
    %v1200 = vpop.f32.mrf.mxu0
    %1201 = vdwg.mxu0
    %1202 = vmatprep.subr.mxu0 0.0
    %1203 = vmatpush1.msra.mxu0 0.0
    %1204 = vmatprep.subr.mxu0 0.0
    %1205 = vmatpush1.msra.mxu0 0.0
    %1206 = vmatprep.subr.mxu0 0.0
    %1207 = vmatpush1.msra.mxu0 0.0
    %1208 = vmatprep.subr.mxu0 0.0
    %1209 = vmatpush1.msra.mxu0 0.0
    %1210 = vmatprep.subr.mxu0 0.0
    %1211 = vmatpush1.msra.mxu0 0.0
    %1212 = vmatprep.subr.mxu0 0.0
    %1213 = vmatpush1.msra.mxu0 0.0
    %1214 = vmatprep.subr.mxu0 0.0
    %1215 = vmatpush1.msra.mxu0 0.0
    %1216 = vmatprep.subr.mxu0 0.0
    %1217 = vmatpush1.msra.mxu0 0.0
    %1218 = vmatprep.subr.mxu0 0.0
    %1219 = vmatpush1.msra.mxu0 0.0
    %1220 = vmatprep.subr.mxu0 0.0
    %1221 = vmatpush1.msra.mxu0 0.0
    %1222 = vmatprep.subr.mxu0 0.0
    %1223 = vmatpush1.msra.mxu0 0.0
    %1224 = vmatprep.subr.mxu0 0.0
    %1225 = vmatpush1.msra.mxu0 0.0
    %1226 = vmatprep.subr.mxu0 0.0
    %1227 = vmatpush1.msra.mxu0 %v1123
    %1228 = vmatprep.subr.mxu0 0.0
    %1229 = vmatpush1.msra.mxu0 %v1122
    %1230 = vmatprep.subr.mxu0 0.0
    %1231 = vmatpush1.msra.mxu0 %v1121
    %1232 = vmatprep.subr.mxu0 0.0
    %1233 = vmatpush1.msra.mxu0 %v1120
    %1234 = vmatprep.subr.mxu0 0.0
    %1235 = vmatpush2.msra.mxu0 0.0
    %1236 = vmatprep.subr.mxu0 0.0
    %1237 = vmatpush2.msra.mxu0 0.0
    %1238 = vmatprep.subr.mxu0 0.0
    %1239 = vmatpush2.msra.mxu0 0.0
    %1240 = vmatprep.subr.mxu0 0.0
    %1241 = vmatpush2.msra.mxu0 0.0
    %1242 = vmatprep.subr.mxu0 0.0
    %1243 = vmatpush2.msra.mxu0 0.0
    %1244 = vmatprep.subr.mxu0 0.0
    %1245 = vmatpush2.msra.mxu0 0.0
    %1246 = vmatprep.subr.mxu0 0.0
    %1247 = vmatpush2.msra.mxu0 0.0
    %1248 = vmatprep.subr.mxu0 0.0
    %1249 = vmatpush2.msra.mxu0 0.0
    %1250 = vmatprep.subr.mxu0 0.0
    %1251 = vmatpush2.msra.mxu0 0.0
    %1252 = vmatprep.subr.mxu0 0.0
    %1253 = vmatpush2.msra.mxu0 0.0
    %1254 = vmatprep.subr.mxu0 0.0
    %1255 = vmatpush2.msra.mxu0 0.0
    %1256 = vmatprep.subr.mxu0 0.0
    %1257 = vmatpush2.msra.mxu0 0.0
    %1258 = vmatprep.subr.mxu0 0.0
    %1259 = vmatpush2.msra.mxu0 0.0
    %1260 = vmatprep.subr.mxu0 0.0
    %1261 = vmatpush2.msra.mxu0 0.0
    %1262 = vmatprep.subr.mxu0 0.0
    %1263 = vmatpush2.msra.mxu0 0.0
    %1264 = vmatprep.subr.mxu0 0.0
    %1265 = vmatpush2.msra.mxu0 0.0
    %1266 = vmatprep.mubr.f32.mxu0 0.0
    %1267 = vmatmul.mubr.f32.gmra.mxu0 %v534
    %v1268 = vpop.f32.mrf.mxu0
    %v1269 = vadd.f32 0.0, %v1268
    %v1270 = vpop.f32.mrf.mxu0
    %1271 = vdwg.mxu0
    %1272 = vmatprep.subr.mxu0 0.0
    %1273 = vmatpush1.msra.mxu0 0.0
    %1274 = vmatprep.subr.mxu0 0.0
    %1275 = vmatpush1.msra.mxu0 0.0
    %1276 = vmatprep.subr.mxu0 0.0
    %1277 = vmatpush1.msra.mxu0 0.0
    %1278 = vmatprep.subr.mxu0 0.0
    %1279 = vmatpush1.msra.mxu0 0.0
    %1280 = vmatprep.subr.mxu0 0.0
    %1281 = vmatpush1.msra.mxu0 0.0
    %1282 = vmatprep.subr.mxu0 0.0
    %1283 = vmatpush1.msra.mxu0 0.0
    %1284 = vmatprep.subr.mxu0 0.0
    %1285 = vmatpush1.msra.mxu0 0.0
    %1286 = vmatprep.subr.mxu0 0.0
    %1287 = vmatpush1.msra.mxu0 0.0
    %1288 = vmatprep.subr.mxu0 0.0
    %1289 = vmatpush1.msra.mxu0 0.0
    %1290 = vmatprep.subr.mxu0 0.0
    %1291 = vmatpush1.msra.mxu0 0.0
    %1292 = vmatprep.subr.mxu0 0.0
    %1293 = vmatpush1.msra.mxu0 0.0
    %1294 = vmatprep.subr.mxu0 0.0
    %1295 = vmatpush1.msra.mxu0 0.0
    %1296 = vmatprep.subr.mxu0 0.0
    %1297 = vmatpush1.msra.mxu0 %v1127
    %1298 = vmatprep.subr.mxu0 0.0
    %1299 = vmatpush1.msra.mxu0 %v1126
    %1300 = vmatprep.subr.mxu0 0.0
    %1301 = vmatpush1.msra.mxu0 %v1125
    %1302 = vmatprep.subr.mxu0 0.0
    %1303 = vmatpush1.msra.mxu0 %v1124
    %1304 = vmatprep.subr.mxu0 0.0
    %1305 = vmatpush2.msra.mxu0 0.0
    %1306 = vmatprep.subr.mxu0 0.0
    %1307 = vmatpush2.msra.mxu0 0.0
    %1308 = vmatprep.subr.mxu0 0.0
    %1309 = vmatpush2.msra.mxu0 0.0
    %1310 = vmatprep.subr.mxu0 0.0
    %1311 = vmatpush2.msra.mxu0 0.0
    %1312 = vmatprep.subr.mxu0 0.0
    %1313 = vmatpush2.msra.mxu0 0.0
    %1314 = vmatprep.subr.mxu0 0.0
    %1315 = vmatpush2.msra.mxu0 0.0
    %1316 = vmatprep.subr.mxu0 0.0
    %1317 = vmatpush2.msra.mxu0 0.0
    %1318 = vmatprep.subr.mxu0 0.0
    %1319 = vmatpush2.msra.mxu0 0.0
    %1320 = vmatprep.subr.mxu0 0.0
    %1321 = vmatpush2.msra.mxu0 0.0
    %1322 = vmatprep.subr.mxu0 0.0
    %1323 = vmatpush2.msra.mxu0 0.0
    %1324 = vmatprep.subr.mxu0 0.0
    %1325 = vmatpush2.msra.mxu0 0.0
    %1326 = vmatprep.subr.mxu0 0.0
    %1327 = vmatpush2.msra.mxu0 0.0
    %1328 = vmatprep.subr.mxu0 0.0
    %1329 = vmatpush2.msra.mxu0 0.0
    %1330 = vmatprep.subr.mxu0 0.0
    %1331 = vmatpush2.msra.mxu0 0.0
    %1332 = vmatprep.subr.mxu0 0.0
    %1333 = vmatpush2.msra.mxu0 0.0
    %1334 = vmatprep.subr.mxu0 0.0
    %1335 = vmatpush2.msra.mxu0 0.0
    %1336 = vmatprep.mubr.f32.mxu0 0.0
    %1337 = vmatmul.mubr.f32.gmra.mxu0 %v534
    %v1338 = vpop.f32.mrf.mxu0
    %v1339 = vadd.f32 0.0, %v1338
    %v1340 = vpop.f32.mrf.mxu0
    %1341 = vdwg.mxu0
    %1342 = vmatprep.subr.mxu0 0.0
    %1343 = vmatpush1.msra.mxu0 0.0
    %1344 = vmatprep.subr.mxu0 0.0
    %1345 = vmatpush1.msra.mxu0 0.0
    %1346 = vmatprep.subr.mxu0 0.0
    %1347 = vmatpush1.msra.mxu0 0.0
    %1348 = vmatprep.subr.mxu0 0.0
    %1349 = vmatpush1.msra.mxu0 0.0
    %1350 = vmatprep.subr.mxu0 0.0
    %1351 = vmatpush1.msra.mxu0 0.0
    %1352 = vmatprep.subr.mxu0 0.0
    %1353 = vmatpush1.msra.mxu0 0.0
    %1354 = vmatprep.subr.mxu0 0.0
    %1355 = vmatpush1.msra.mxu0 0.0
    %1356 = vmatprep.subr.mxu0 0.0
    %1357 = vmatpush1.msra.mxu0 0.0
    %1358 = vmatprep.subr.mxu0 0.0
    %1359 = vmatpush1.msra.mxu0 0.0
    %1360 = vmatprep.subr.mxu0 0.0
    %1361 = vmatpush1.msra.mxu0 0.0
    %1362 = vmatprep.subr.mxu0 0.0
    %1363 = vmatpush1.msra.mxu0 0.0
    %1364 = vmatprep.subr.mxu0 0.0
    %1365 = vmatpush1.msra.mxu0 0.0
    %1366 = vmatprep.subr.mxu0 0.0
    %1367 = vmatpush1.msra.mxu0 %v1131
    %1368 = vmatprep.subr.mxu0 0.0
    %1369 = vmatpush1.msra.mxu0 %v1130
    %1370 = vmatprep.subr.mxu0 0.0
    %1371 = vmatpush1.msra.mxu0 %v1129
    %1372 = vmatprep.subr.mxu0 0.0
    %1373 = vmatpush1.msra.mxu0 %v1128
    %1374 = vmatprep.subr.mxu0 0.0
    %1375 = vmatpush2.msra.mxu0 0.0
    %1376 = vmatprep.subr.mxu0 0.0
    %1377 = vmatpush2.msra.mxu0 0.0
    %1378 = vmatprep.subr.mxu0 0.0
    %1379 = vmatpush2.msra.mxu0 0.0
    %1380 = vmatprep.subr.mxu0 0.0
    %1381 = vmatpush2.msra.mxu0 0.0
    %1382 = vmatprep.subr.mxu0 0.0
    %1383 = vmatpush2.msra.mxu0 0.0
    %1384 = vmatprep.subr.mxu0 0.0
    %1385 = vmatpush2.msra.mxu0 0.0
    %1386 = vmatprep.subr.mxu0 0.0
    %1387 = vmatpush2.msra.mxu0 0.0
    %1388 = vmatprep.subr.mxu0 0.0
    %1389 = vmatpush2.msra.mxu0 0.0
    %1390 = vmatprep.subr.mxu0 0.0
    %1391 = vmatpush2.msra.mxu0 0.0
    %1392 = vmatprep.subr.mxu0 0.0
    %1393 = vmatpush2.msra.mxu0 0.0
    %1394 = vmatprep.subr.mxu0 0.0
    %1395 = vmatpush2.msra.mxu0 0.0
    %1396 = vmatprep.subr.mxu0 0.0
    %1397 = vmatpush2.msra.mxu0 0.0
    %1398 = vmatprep.subr.mxu0 0.0
    %1399 = vmatpush2.msra.mxu0 0.0
    %1400 = vmatprep.subr.mxu0 0.0
    %1401 = vmatpush2.msra.mxu0 0.0
    %1402 = vmatprep.subr.mxu0 0.0
    %1403 = vmatpush2.msra.mxu0 0.0
    %1404 = vmatprep.subr.mxu0 0.0
    %1405 = vmatpush2.msra.mxu0 0.0
    %1406 = vmatprep.mubr.f32.mxu0 0.0
    %1407 = vmatmul.mubr.f32.gmra.mxu0 %v534
    %v1408 = vpop.f32.mrf.mxu0
    %v1409 = vadd.f32 0.0, %v1408
    %v1410 = vpop.f32.mrf.mxu0
    %1411 = vdwg.mxu0
    %vm1412 = vcmask 64512
    %v1414 = vsel %vm1412, %v816, 0
    %v1417 = vsel %vm1412, %v903, 0
    %1419 = vmatprep.subr.mxu0 0.0
    %1420 = vmatpush1.xpose.msra.mxu0 0.0
    %1421 = vmatprep.subr.mxu0 0.0
    %1422 = vmatpush1.xpose.msra.mxu0 0.0
    %1423 = vmatprep.subr.mxu0 0.0
    %1424 = vmatpush1.xpose.msra.mxu0 0.0
    %1425 = vmatprep.subr.mxu0 0.0
    %1426 = vmatpush1.xpose.msra.mxu0 0.0
    %1427 = vmatprep.subr.mxu0 0.0
    %1428 = vmatpush1.xpose.msra.mxu0 0.0
    %1429 = vmatprep.subr.mxu0 0.0
    %1430 = vmatpush1.xpose.msra.mxu0 0.0
    %1431 = vmatprep.subr.mxu0 0.0
    %1432 = vmatpush1.xpose.msra.mxu0 0.0
    %1433 = vmatprep.subr.mxu0 0.0
    %1434 = vmatpush1.xpose.msra.mxu0 0.0
    %1435 = vmatprep.subr.mxu0 0.0
    %1436 = vmatpush1.xpose.msra.mxu0 0.0
    %1437 = vmatprep.subr.mxu0 0.0
    %1438 = vmatpush1.xpose.msra.mxu0 0.0
    %1439 = vmatprep.subr.mxu0 0.0
    %1440 = vmatpush1.xpose.msra.mxu0 0.0
    %1441 = vmatprep.subr.mxu0 0.0
    %1442 = vmatpush1.xpose.msra.mxu0 0.0
    %1443 = vmatprep.subr.mxu0 0.0
    %1444 = vmatpush1.xpose.msra.mxu0 0.0
    %1445 = vmatprep.subr.mxu0 0.0
    %1446 = vmatpush1.xpose.msra.mxu0 0.0
    %1447 = vmatprep.subr.mxu0 0.0
    %1448 = vmatpush1.xpose.msra.mxu0 0.0
    %1449 = vmatprep.subr.mxu0 0.0
    %1450 = vmatpush1.xpose.msra.mxu0 %v1417
    %1451 = vmatprep.subr.mxu0 0.0
    %1452 = vmatpush2.xpose.msra.mxu0 0.0
    %1453 = vmatprep.subr.mxu0 0.0
    %1454 = vmatpush2.xpose.msra.mxu0 0.0
    %1455 = vmatprep.subr.mxu0 0.0
    %1456 = vmatpush2.xpose.msra.mxu0 0.0
    %1457 = vmatprep.subr.mxu0 0.0
    %1458 = vmatpush2.xpose.msra.mxu0 0.0
    %1459 = vmatprep.subr.mxu0 0.0
    %1460 = vmatpush2.xpose.msra.mxu0 0.0
    %1461 = vmatprep.subr.mxu0 0.0
    %1462 = vmatpush2.xpose.msra.mxu0 0.0
    %1463 = vmatprep.subr.mxu0 0.0
    %1464 = vmatpush2.xpose.msra.mxu0 0.0
    %1465 = vmatprep.subr.mxu0 0.0
    %1466 = vmatpush2.xpose.msra.mxu0 0.0
    %1467 = vmatprep.subr.mxu0 0.0
    %1468 = vmatpush2.xpose.msra.mxu0 0.0
    %1469 = vmatprep.subr.mxu0 0.0
    %1470 = vmatpush2.xpose.msra.mxu0 0.0
    %1471 = vmatprep.subr.mxu0 0.0
    %1472 = vmatpush2.xpose.msra.mxu0 0.0
    %1473 = vmatprep.subr.mxu0 0.0
    %1474 = vmatpush2.xpose.msra.mxu0 0.0
    %1475 = vmatprep.subr.mxu0 0.0
    %1476 = vmatpush2.xpose.msra.mxu0 0.0
    %1477 = vmatprep.subr.mxu0 0.0
    %1478 = vmatpush2.xpose.msra.mxu0 0.0
    %1479 = vmatprep.subr.mxu0 0.0
    %1480 = vmatpush2.xpose.msra.mxu0 0.0
    %1481 = vmatprep.subr.mxu0 0.0
    %1482 = vmatpush2.xpose.msra.mxu0 0.0
    %1483 = vmatprep.mubr.f32.mxu0 0.0
    %1484 = vmatmul.mubr.f32.gmra.mxu0 %v1414
    %v1485 = vpop.f32.mrf.mxu0
    %v1486 = vadd.f32 %v486, %v1485
    %v1487 = vpop.f32.mrf.mxu0
    %1488 = vdwg.mxu0
    %v1490 = vsel %vm1412, %v817, 0
    %v1493 = vsel %vm1412, %v973, 0
    %1495 = vmatprep.subr.mxu0 0.0
    %1496 = vmatpush1.xpose.msra.mxu0 0.0
    %1497 = vmatprep.subr.mxu0 0.0
    %1498 = vmatpush1.xpose.msra.mxu0 0.0
    %1499 = vmatprep.subr.mxu0 0.0
    %1500 = vmatpush1.xpose.msra.mxu0 0.0
    %1501 = vmatprep.subr.mxu0 0.0
    %1502 = vmatpush1.xpose.msra.mxu0 0.0
    %1503 = vmatprep.subr.mxu0 0.0
    %1504 = vmatpush1.xpose.msra.mxu0 0.0
    %1505 = vmatprep.subr.mxu0 0.0
    %1506 = vmatpush1.xpose.msra.mxu0 0.0
    %1507 = vmatprep.subr.mxu0 0.0
    %1508 = vmatpush1.xpose.msra.mxu0 0.0
    %1509 = vmatprep.subr.mxu0 0.0
    %1510 = vmatpush1.xpose.msra.mxu0 0.0
    %1511 = vmatprep.subr.mxu0 0.0
    %1512 = vmatpush1.xpose.msra.mxu0 0.0
    %1513 = vmatprep.subr.mxu0 0.0
    %1514 = vmatpush1.xpose.msra.mxu0 0.0
    %1515 = vmatprep.subr.mxu0 0.0
    %1516 = vmatpush1.xpose.msra.mxu0 0.0
    %1517 = vmatprep.subr.mxu0 0.0
    %1518 = vmatpush1.xpose.msra.mxu0 0.0
    %1519 = vmatprep.subr.mxu0 0.0
    %1520 = vmatpush1.xpose.msra.mxu0 0.0
    %1521 = vmatprep.subr.mxu0 0.0
    %1522 = vmatpush1.xpose.msra.mxu0 0.0
    %1523 = vmatprep.subr.mxu0 0.0
    %1524 = vmatpush1.xpose.msra.mxu0 0.0
    %1525 = vmatprep.subr.mxu0 0.0
    %1526 = vmatpush1.xpose.msra.mxu0 %v1493
    %1527 = vmatprep.subr.mxu0 0.0
    %1528 = vmatpush2.xpose.msra.mxu0 0.0
    %1529 = vmatprep.subr.mxu0 0.0
    %1530 = vmatpush2.xpose.msra.mxu0 0.0
    %1531 = vmatprep.subr.mxu0 0.0
    %1532 = vmatpush2.xpose.msra.mxu0 0.0
    %1533 = vmatprep.subr.mxu0 0.0
    %1534 = vmatpush2.xpose.msra.mxu0 0.0
    %1535 = vmatprep.subr.mxu0 0.0
    %1536 = vmatpush2.xpose.msra.mxu0 0.0
    %1537 = vmatprep.subr.mxu0 0.0
    %1538 = vmatpush2.xpose.msra.mxu0 0.0
    %1539 = vmatprep.subr.mxu0 0.0
    %1540 = vmatpush2.xpose.msra.mxu0 0.0
    %1541 = vmatprep.subr.mxu0 0.0
    %1542 = vmatpush2.xpose.msra.mxu0 0.0
    %1543 = vmatprep.subr.mxu0 0.0
    %1544 = vmatpush2.xpose.msra.mxu0 0.0
    %1545 = vmatprep.subr.mxu0 0.0
    %1546 = vmatpush2.xpose.msra.mxu0 0.0
    %1547 = vmatprep.subr.mxu0 0.0
    %1548 = vmatpush2.xpose.msra.mxu0 0.0
    %1549 = vmatprep.subr.mxu0 0.0
    %1550 = vmatpush2.xpose.msra.mxu0 0.0
    %1551 = vmatprep.subr.mxu0 0.0
    %1552 = vmatpush2.xpose.msra.mxu0 0.0
    %1553 = vmatprep.subr.mxu0 0.0
    %1554 = vmatpush2.xpose.msra.mxu0 0.0
    %1555 = vmatprep.subr.mxu0 0.0
    %1556 = vmatpush2.xpose.msra.mxu0 0.0
    %1557 = vmatprep.subr.mxu0 0.0
    %1558 = vmatpush2.xpose.msra.mxu0 0.0
    %1559 = vmatprep.mubr.f32.mxu0 0.0
    %1560 = vmatmul.mubr.f32.gmra.mxu0 %v1490
    %v1561 = vpop.f32.mrf.mxu0
    %v1562 = vadd.f32 %v486, %v1561
    %v1563 = vpop.f32.mrf.mxu0
    %1564 = vdwg.mxu0
    %v1566 = vsel %vm1412, %v818, 0
    %v1569 = vsel %vm1412, %v1043, 0
    %1571 = vmatprep.subr.mxu0 0.0
    %1572 = vmatpush1.xpose.msra.mxu0 0.0
    %1573 = vmatprep.subr.mxu0 0.0
    %1574 = vmatpush1.xpose.msra.mxu0 0.0
    %1575 = vmatprep.subr.mxu0 0.0
    %1576 = vmatpush1.xpose.msra.mxu0 0.0
    %1577 = vmatprep.subr.mxu0 0.0
    %1578 = vmatpush1.xpose.msra.mxu0 0.0
    %1579 = vmatprep.subr.mxu0 0.0
    %1580 = vmatpush1.xpose.msra.mxu0 0.0
    %1581 = vmatprep.subr.mxu0 0.0
    %1582 = vmatpush1.xpose.msra.mxu0 0.0
    %1583 = vmatprep.subr.mxu0 0.0
    %1584 = vmatpush1.xpose.msra.mxu0 0.0
    %1585 = vmatprep.subr.mxu0 0.0
    %1586 = vmatpush1.xpose.msra.mxu0 0.0
    %1587 = vmatprep.subr.mxu0 0.0
    %1588 = vmatpush1.xpose.msra.mxu0 0.0
    %1589 = vmatprep.subr.mxu0 0.0
    %1590 = vmatpush1.xpose.msra.mxu0 0.0
    %1591 = vmatprep.subr.mxu0 0.0
    %1592 = vmatpush1.xpose.msra.mxu0 0.0
    %1593 = vmatprep.subr.mxu0 0.0
    %1594 = vmatpush1.xpose.msra.mxu0 0.0
    %1595 = vmatprep.subr.mxu0 0.0
    %1596 = vmatpush1.xpose.msra.mxu0 0.0
    %1597 = vmatprep.subr.mxu0 0.0
    %1598 = vmatpush1.xpose.msra.mxu0 0.0
    %1599 = vmatprep.subr.mxu0 0.0
    %1600 = vmatpush1.xpose.msra.mxu0 0.0
    %1601 = vmatprep.subr.mxu0 0.0
    %1602 = vmatpush1.xpose.msra.mxu0 %v1569
    %1603 = vmatprep.subr.mxu0 0.0
    %1604 = vmatpush2.xpose.msra.mxu0 0.0
    %1605 = vmatprep.subr.mxu0 0.0
    %1606 = vmatpush2.xpose.msra.mxu0 0.0
    %1607 = vmatprep.subr.mxu0 0.0
    %1608 = vmatpush2.xpose.msra.mxu0 0.0
    %1609 = vmatprep.subr.mxu0 0.0
    %1610 = vmatpush2.xpose.msra.mxu0 0.0
    %1611 = vmatprep.subr.mxu0 0.0
    %1612 = vmatpush2.xpose.msra.mxu0 0.0
    %1613 = vmatprep.subr.mxu0 0.0
    %1614 = vmatpush2.xpose.msra.mxu0 0.0
    %1615 = vmatprep.subr.mxu0 0.0
    %1616 = vmatpush2.xpose.msra.mxu0 0.0
    %1617 = vmatprep.subr.mxu0 0.0
    %1618 = vmatpush2.xpose.msra.mxu0 0.0
    %1619 = vmatprep.subr.mxu0 0.0
    %1620 = vmatpush2.xpose.msra.mxu0 0.0
    %1621 = vmatprep.subr.mxu0 0.0
    %1622 = vmatpush2.xpose.msra.mxu0 0.0
    %1623 = vmatprep.subr.mxu0 0.0
    %1624 = vmatpush2.xpose.msra.mxu0 0.0
    %1625 = vmatprep.subr.mxu0 0.0
    %1626 = vmatpush2.xpose.msra.mxu0 0.0
    %1627 = vmatprep.subr.mxu0 0.0
    %1628 = vmatpush2.xpose.msra.mxu0 0.0
    %1629 = vmatprep.subr.mxu0 0.0
    %1630 = vmatpush2.xpose.msra.mxu0 0.0
    %1631 = vmatprep.subr.mxu0 0.0
    %1632 = vmatpush2.xpose.msra.mxu0 0.0
    %1633 = vmatprep.subr.mxu0 0.0
    %1634 = vmatpush2.xpose.msra.mxu0 0.0
    %1635 = vmatprep.mubr.f32.mxu0 0.0
    %1636 = vmatmul.mubr.f32.gmra.mxu0 %v1566
    %v1637 = vpop.f32.mrf.mxu0
    %v1638 = vadd.f32 %v486, %v1637
    %v1639 = vpop.f32.mrf.mxu0
    %1640 = vdwg.mxu0
    %v1642 = vsel %vm1412, %v819, 0
    %v1645 = vsel %vm1412, %v1113, 0
    %1647 = vmatprep.subr.mxu0 0.0
    %1648 = vmatpush1.xpose.msra.mxu0 0.0
    %1649 = vmatprep.subr.mxu0 0.0
    %1650 = vmatpush1.xpose.msra.mxu0 0.0
    %1651 = vmatprep.subr.mxu0 0.0
    %1652 = vmatpush1.xpose.msra.mxu0 0.0
    %1653 = vmatprep.subr.mxu0 0.0
    %1654 = vmatpush1.xpose.msra.mxu0 0.0
    %1655 = vmatprep.subr.mxu0 0.0
    %1656 = vmatpush1.xpose.msra.mxu0 0.0
    %1657 = vmatprep.subr.mxu0 0.0
    %1658 = vmatpush1.xpose.msra.mxu0 0.0
    %1659 = vmatprep.subr.mxu0 0.0
    %1660 = vmatpush1.xpose.msra.mxu0 0.0
    %1661 = vmatprep.subr.mxu0 0.0
    %1662 = vmatpush1.xpose.msra.mxu0 0.0
    %1663 = vmatprep.subr.mxu0 0.0
    %1664 = vmatpush1.xpose.msra.mxu0 0.0
    %1665 = vmatprep.subr.mxu0 0.0
    %1666 = vmatpush1.xpose.msra.mxu0 0.0
    %1667 = vmatprep.subr.mxu0 0.0
    %1668 = vmatpush1.xpose.msra.mxu0 0.0
    %1669 = vmatprep.subr.mxu0 0.0
    %1670 = vmatpush1.xpose.msra.mxu0 0.0
    %1671 = vmatprep.subr.mxu0 0.0
    %1672 = vmatpush1.xpose.msra.mxu0 0.0
    %1673 = vmatprep.subr.mxu0 0.0
    %1674 = vmatpush1.xpose.msra.mxu0 0.0
    %1675 = vmatprep.subr.mxu0 0.0
    %1676 = vmatpush1.xpose.msra.mxu0 0.0
    %1677 = vmatprep.subr.mxu0 0.0
    %1678 = vmatpush1.xpose.msra.mxu0 %v1645
    %1679 = vmatprep.subr.mxu0 0.0
    %1680 = vmatpush2.xpose.msra.mxu0 0.0
    %1681 = vmatprep.subr.mxu0 0.0
    %1682 = vmatpush2.xpose.msra.mxu0 0.0
    %1683 = vmatprep.subr.mxu0 0.0
    %1684 = vmatpush2.xpose.msra.mxu0 0.0
    %1685 = vmatprep.subr.mxu0 0.0
    %1686 = vmatpush2.xpose.msra.mxu0 0.0
    %1687 = vmatprep.subr.mxu0 0.0
    %1688 = vmatpush2.xpose.msra.mxu0 0.0
    %1689 = vmatprep.subr.mxu0 0.0
    %1690 = vmatpush2.xpose.msra.mxu0 0.0
    %1691 = vmatprep.subr.mxu0 0.0
    %1692 = vmatpush2.xpose.msra.mxu0 0.0
    %1693 = vmatprep.subr.mxu0 0.0
    %1694 = vmatpush2.xpose.msra.mxu0 0.0
    %1695 = vmatprep.subr.mxu0 0.0
    %1696 = vmatpush2.xpose.msra.mxu0 0.0
    %1697 = vmatprep.subr.mxu0 0.0
    %1698 = vmatpush2.xpose.msra.mxu0 0.0
    %1699 = vmatprep.subr.mxu0 0.0
    %1700 = vmatpush2.xpose.msra.mxu0 0.0
    %1701 = vmatprep.subr.mxu0 0.0
    %1702 = vmatpush2.xpose.msra.mxu0 0.0
    %1703 = vmatprep.subr.mxu0 0.0
    %1704 = vmatpush2.xpose.msra.mxu0 0.0
    %1705 = vmatprep.subr.mxu0 0.0
    %1706 = vmatpush2.xpose.msra.mxu0 0.0
    %1707 = vmatprep.subr.mxu0 0.0
    %1708 = vmatpush2.xpose.msra.mxu0 0.0
    %1709 = vmatprep.subr.mxu0 0.0
    %1710 = vmatpush2.xpose.msra.mxu0 0.0
    %1711 = vmatprep.mubr.f32.mxu0 0.0
    %1712 = vmatmul.mubr.f32.gmra.mxu0 %v1642
    %v1713 = vpop.f32.mrf.mxu0
    %v1714 = vadd.f32 %v486, %v1713
    %v1715 = vpop.f32.mrf.mxu0
    %1716 = vdwg.mxu0
    %v1717 = vsel %vm1412, %v1486, -inf
    %1718 = vmax.xlane.f32.xlu0 %v1717
    %v1719 = vpop.xlane.xlu0 %1718
    %v1720 = vsel %vm1412, %v1562, -inf
    %1721 = vmax.xlane.f32.xlu0 %v1720
    %v1722 = vpop.xlane.xlu0 %1721
    %v1723 = vsel %vm1412, %v1638, -inf
    %1724 = vmax.xlane.f32.xlu0 %v1723
    %v1725 = vpop.xlane.xlu0 %1724
    %v1726 = vsel %vm1412, %v1714, -inf
    %1727 = vmax.xlane.f32.xlu0 %v1726
    %v1728 = vpop.xlane.xlu0 %1727
    %v1729 = vsub.f32 %v1486, %v1719
    %v1730 = vsub.f32 %v1562, %v1722
    %v1731 = vsub.f32 %v1638, %v1725
    %v1732 = vsub.f32 %v1714, %v1728
    %v1733 = vmul.f32 %v1729, 1.442695
    %v1734 = vpow.pop %v1733
    %v1735 = vmul.f32 %v1730, 1.442695
    %v1736 = vpow.pop %v1735
    %v1737 = vmul.f32 %v1731, 1.442695
    %v1738 = vpow.pop %v1737
    %v1739 = vmul.f32 %v1732, 1.442695
    %v1740 = vpow.pop %v1739
    %v1741 = vsel %vm1412, %v1734, 0.0
    %1742 = vadd.xlane.f32.xlu0 %v1741
    %v1743 = vpop.xlane.xlu0 %1742
    %v1744 = vsel %vm1412, %v1736, 0.0
    %1745 = vadd.xlane.f32.xlu0 %v1744
    %v1746 = vpop.xlane.xlu0 %1745
    %v1747 = vsel %vm1412, %v1738, 0.0
    %1748 = vadd.xlane.f32.xlu0 %v1747
    %v1749 = vpop.xlane.xlu0 %1748
    %v1750 = vsel %vm1412, %v1740, 0.0
    %1751 = vadd.xlane.f32.xlu0 %v1750
    %v1752 = vpop.xlane.xlu0 %1751
    %v1753 = vrcp.pop %v1743
    %v1754 = vrcp.pop %v1746
    %v1755 = vrcp.pop %v1749
    %v1756 = vrcp.pop %v1752
    %v1757 = vmul.f32 %v1734, %v1753
    %v1758 = vmul.f32 %v1736, %v1754
    %v1759 = vmul.f32 %v1738, %v1755
    %v1760 = vmul.f32 %v1740, %v1756
    %v1762 = vsel %vm1412, %v1757, 0
    %1764 = vmatprep.subr.mxu0 0.0
    %1765 = vmatpush1.msra.mxu0 0.0
    %1766 = vmatprep.subr.mxu0 0.0
    %1767 = vmatpush1.msra.mxu0 0.0
    %1768 = vmatprep.subr.mxu0 0.0
    %1769 = vmatpush1.msra.mxu0 0.0
    %1770 = vmatprep.subr.mxu0 0.0
    %1771 = vmatpush1.msra.mxu0 0.0
    %1772 = vmatprep.subr.mxu0 0.0
    %1773 = vmatpush1.msra.mxu0 0.0
    %1774 = vmatprep.subr.mxu0 0.0
    %1775 = vmatpush1.msra.mxu0 0.0
    %1776 = vmatprep.subr.mxu0 0.0
    %1777 = vmatpush1.msra.mxu0 0.0
    %1778 = vmatprep.subr.mxu0 0.0
    %1779 = vmatpush1.msra.mxu0 0.0
    %1780 = vmatprep.subr.mxu0 0.0
    %1781 = vmatpush1.msra.mxu0 0.0
    %1782 = vmatprep.subr.mxu0 0.0
    %1783 = vmatpush1.msra.mxu0 0.0
    %1784 = vmatprep.subr.mxu0 0.0
    %1785 = vmatpush1.msra.mxu0 0.0
    %1786 = vmatprep.subr.mxu0 0.0
    %1787 = vmatpush1.msra.mxu0 0.0
    %1788 = vmatprep.subr.mxu0 0.0
    %1789 = vmatpush1.msra.mxu0 0.0
    %1790 = vmatprep.subr.mxu0 0.0
    %1791 = vmatpush1.msra.mxu0 0.0
    %1792 = vmatprep.subr.mxu0 0.0
    %1793 = vmatpush1.msra.mxu0 0.0
    %1794 = vmatprep.subr.mxu0 0.0
    %1795 = vmatpush1.msra.mxu0 %v1199
    %1796 = vmatprep.subr.mxu0 0.0
    %1797 = vmatpush2.msra.mxu0 0.0
    %1798 = vmatprep.subr.mxu0 0.0
    %1799 = vmatpush2.msra.mxu0 0.0
    %1800 = vmatprep.subr.mxu0 0.0
    %1801 = vmatpush2.msra.mxu0 0.0
    %1802 = vmatprep.subr.mxu0 0.0
    %1803 = vmatpush2.msra.mxu0 0.0
    %1804 = vmatprep.subr.mxu0 0.0
    %1805 = vmatpush2.msra.mxu0 0.0
    %1806 = vmatprep.subr.mxu0 0.0
    %1807 = vmatpush2.msra.mxu0 0.0
    %1808 = vmatprep.subr.mxu0 0.0
    %1809 = vmatpush2.msra.mxu0 0.0
    %1810 = vmatprep.subr.mxu0 0.0
    %1811 = vmatpush2.msra.mxu0 0.0
    %1812 = vmatprep.subr.mxu0 0.0
    %1813 = vmatpush2.msra.mxu0 0.0
    %1814 = vmatprep.subr.mxu0 0.0
    %1815 = vmatpush2.msra.mxu0 0.0
    %1816 = vmatprep.subr.mxu0 0.0
    %1817 = vmatpush2.msra.mxu0 0.0
    %1818 = vmatprep.subr.mxu0 0.0
    %1819 = vmatpush2.msra.mxu0 0.0
    %1820 = vmatprep.subr.mxu0 0.0
    %1821 = vmatpush2.msra.mxu0 0.0
    %1822 = vmatprep.subr.mxu0 0.0
    %1823 = vmatpush2.msra.mxu0 0.0
    %1824 = vmatprep.subr.mxu0 0.0
    %1825 = vmatpush2.msra.mxu0 0.0
    %1826 = vmatprep.subr.mxu0 0.0
    %1827 = vmatpush2.msra.mxu0 0.0
    %1828 = vmatprep.mubr.f32.mxu0 0.0
    %1829 = vmatmul.mubr.f32.gmra.mxu0 %v1762
    %v1830 = vpop.f32.mrf.mxu0
    %v1831 = vadd.f32 0.0, %v1830
    %v1832 = vpop.f32.mrf.mxu0
    %1833 = vdwg.mxu0
    %v1835 = vsel %vm1412, %v1758, 0
    %1837 = vmatprep.subr.mxu0 0.0
    %1838 = vmatpush1.msra.mxu0 0.0
    %1839 = vmatprep.subr.mxu0 0.0
    %1840 = vmatpush1.msra.mxu0 0.0
    %1841 = vmatprep.subr.mxu0 0.0
    %1842 = vmatpush1.msra.mxu0 0.0
    %1843 = vmatprep.subr.mxu0 0.0
    %1844 = vmatpush1.msra.mxu0 0.0
    %1845 = vmatprep.subr.mxu0 0.0
    %1846 = vmatpush1.msra.mxu0 0.0
    %1847 = vmatprep.subr.mxu0 0.0
    %1848 = vmatpush1.msra.mxu0 0.0
    %1849 = vmatprep.subr.mxu0 0.0
    %1850 = vmatpush1.msra.mxu0 0.0
    %1851 = vmatprep.subr.mxu0 0.0
    %1852 = vmatpush1.msra.mxu0 0.0
    %1853 = vmatprep.subr.mxu0 0.0
    %1854 = vmatpush1.msra.mxu0 0.0
    %1855 = vmatprep.subr.mxu0 0.0
    %1856 = vmatpush1.msra.mxu0 0.0
    %1857 = vmatprep.subr.mxu0 0.0
    %1858 = vmatpush1.msra.mxu0 0.0
    %1859 = vmatprep.subr.mxu0 0.0
    %1860 = vmatpush1.msra.mxu0 0.0
    %1861 = vmatprep.subr.mxu0 0.0
    %1862 = vmatpush1.msra.mxu0 0.0
    %1863 = vmatprep.subr.mxu0 0.0
    %1864 = vmatpush1.msra.mxu0 0.0
    %1865 = vmatprep.subr.mxu0 0.0
    %1866 = vmatpush1.msra.mxu0 0.0
    %1867 = vmatprep.subr.mxu0 0.0
    %1868 = vmatpush1.msra.mxu0 %v1269
    %1869 = vmatprep.subr.mxu0 0.0
    %1870 = vmatpush2.msra.mxu0 0.0
    %1871 = vmatprep.subr.mxu0 0.0
    %1872 = vmatpush2.msra.mxu0 0.0
    %1873 = vmatprep.subr.mxu0 0.0
    %1874 = vmatpush2.msra.mxu0 0.0
    %1875 = vmatprep.subr.mxu0 0.0
    %1876 = vmatpush2.msra.mxu0 0.0
    %1877 = vmatprep.subr.mxu0 0.0
    %1878 = vmatpush2.msra.mxu0 0.0
    %1879 = vmatprep.subr.mxu0 0.0
    %1880 = vmatpush2.msra.mxu0 0.0
    %1881 = vmatprep.subr.mxu0 0.0
    %1882 = vmatpush2.msra.mxu0 0.0
    %1883 = vmatprep.subr.mxu0 0.0
    %1884 = vmatpush2.msra.mxu0 0.0
    %1885 = vmatprep.subr.mxu0 0.0
    %1886 = vmatpush2.msra.mxu0 0.0
    %1887 = vmatprep.subr.mxu0 0.0
    %1888 = vmatpush2.msra.mxu0 0.0
    %1889 = vmatprep.subr.mxu0 0.0
    %1890 = vmatpush2.msra.mxu0 0.0
    %1891 = vmatprep.subr.mxu0 0.0
    %1892 = vmatpush2.msra.mxu0 0.0
    %1893 = vmatprep.subr.mxu0 0.0
    %1894 = vmatpush2.msra.mxu0 0.0
    %1895 = vmatprep.subr.mxu0 0.0
    %1896 = vmatpush2.msra.mxu0 0.0
    %1897 = vmatprep.subr.mxu0 0.0
    %1898 = vmatpush2.msra.mxu0 0.0
    %1899 = vmatprep.subr.mxu0 0.0
    %1900 = vmatpush2.msra.mxu0 0.0
    %1901 = vmatprep.mubr.f32.mxu0 0.0
    %1902 = vmatmul.mubr.f32.gmra.mxu0 %v1835
    %v1903 = vpop.f32.mrf.mxu0
    %v1904 = vadd.f32 0.0, %v1903
    %v1905 = vpop.f32.mrf.mxu0
    %1906 = vdwg.mxu0
    %v1908 = vsel %vm1412, %v1759, 0
    %1910 = vmatprep.subr.mxu0 0.0
    %1911 = vmatpush1.msra.mxu0 0.0
    %1912 = vmatprep.subr.mxu0 0.0
    %1913 = vmatpush1.msra.mxu0 0.0
    %1914 = vmatprep.subr.mxu0 0.0
    %1915 = vmatpush1.msra.mxu0 0.0
    %1916 = vmatprep.subr.mxu0 0.0
    %1917 = vmatpush1.msra.mxu0 0.0
    %1918 = vmatprep.subr.mxu0 0.0
    %1919 = vmatpush1.msra.mxu0 0.0
    %1920 = vmatprep.subr.mxu0 0.0
    %1921 = vmatpush1.msra.mxu0 0.0
    %1922 = vmatprep.subr.mxu0 0.0
    %1923 = vmatpush1.msra.mxu0 0.0
    %1924 = vmatprep.subr.mxu0 0.0
    %1925 = vmatpush1.msra.mxu0 0.0
    %1926 = vmatprep.subr.mxu0 0.0
    %1927 = vmatpush1.msra.mxu0 0.0
    %1928 = vmatprep.subr.mxu0 0.0
    %1929 = vmatpush1.msra.mxu0 0.0
    %1930 = vmatprep.subr.mxu0 0.0
    %1931 = vmatpush1.msra.mxu0 0.0
    %1932 = vmatprep.subr.mxu0 0.0
    %1933 = vmatpush1.msra.mxu0 0.0
    %1934 = vmatprep.subr.mxu0 0.0
    %1935 = vmatpush1.msra.mxu0 0.0
    %1936 = vmatprep.subr.mxu0 0.0
    %1937 = vmatpush1.msra.mxu0 0.0
    %1938 = vmatprep.subr.mxu0 0.0
    %1939 = vmatpush1.msra.mxu0 0.0
    %1940 = vmatprep.subr.mxu0 0.0
    %1941 = vmatpush1.msra.mxu0 %v1339
    %1942 = vmatprep.subr.mxu0 0.0
    %1943 = vmatpush2.msra.mxu0 0.0
    %1944 = vmatprep.subr.mxu0 0.0
    %1945 = vmatpush2.msra.mxu0 0.0
    %1946 = vmatprep.subr.mxu0 0.0
    %1947 = vmatpush2.msra.mxu0 0.0
    %1948 = vmatprep.subr.mxu0 0.0
    %1949 = vmatpush2.msra.mxu0 0.0
    %1950 = vmatprep.subr.mxu0 0.0
    %1951 = vmatpush2.msra.mxu0 0.0
    %1952 = vmatprep.subr.mxu0 0.0
    %1953 = vmatpush2.msra.mxu0 0.0
    %1954 = vmatprep.subr.mxu0 0.0
    %1955 = vmatpush2.msra.mxu0 0.0
    %1956 = vmatprep.subr.mxu0 0.0
    %1957 = vmatpush2.msra.mxu0 0.0
    %1958 = vmatprep.subr.mxu0 0.0
    %1959 = vmatpush2.msra.mxu0 0.0
    %1960 = vmatprep.subr.mxu0 0.0
    %1961 = vmatpush2.msra.mxu0 0.0
    %1962 = vmatprep.subr.mxu0 0.0
    %1963 = vmatpush2.msra.mxu0 0.0
    %1964 = vmatprep.subr.mxu0 0.0
    %1965 = vmatpush2.msra.mxu0 0.0
    %1966 = vmatprep.subr.mxu0 0.0
    %1967 = vmatpush2.msra.mxu0 0.0
    %1968 = vmatprep.subr.mxu0 0.0
    %1969 = vmatpush2.msra.mxu0 0.0
    %1970 = vmatprep.subr.mxu0 0.0
    %1971 = vmatpush2.msra.mxu0 0.0
    %1972 = vmatprep.subr.mxu0 0.0
    %1973 = vmatpush2.msra.mxu0 0.0
    %1974 = vmatprep.mubr.f32.mxu0 0.0
    %1975 = vmatmul.mubr.f32.gmra.mxu0 %v1908
    %v1976 = vpop.f32.mrf.mxu0
    %v1977 = vadd.f32 0.0, %v1976
    %v1978 = vpop.f32.mrf.mxu0
    %1979 = vdwg.mxu0
    %v1981 = vsel %vm1412, %v1760, 0
    %1983 = vmatprep.subr.mxu0 0.0
    %1984 = vmatpush1.msra.mxu0 0.0
    %1985 = vmatprep.subr.mxu0 0.0
    %1986 = vmatpush1.msra.mxu0 0.0
    %1987 = vmatprep.subr.mxu0 0.0
    %1988 = vmatpush1.msra.mxu0 0.0
    %1989 = vmatprep.subr.mxu0 0.0
    %1990 = vmatpush1.msra.mxu0 0.0
    %1991 = vmatprep.subr.mxu0 0.0
    %1992 = vmatpush1.msra.mxu0 0.0
    %1993 = vmatprep.subr.mxu0 0.0
    %1994 = vmatpush1.msra.mxu0 0.0
    %1995 = vmatprep.subr.mxu0 0.0
    %1996 = vmatpush1.msra.mxu0 0.0
    %1997 = vmatprep.subr.mxu0 0.0
    %1998 = vmatpush1.msra.mxu0 0.0
    %1999 = vmatprep.subr.mxu0 0.0
    %2000 = vmatpush1.msra.mxu0 0.0
    %2001 = vmatprep.subr.mxu0 0.0
    %2002 = vmatpush1.msra.mxu0 0.0
    %2003 = vmatprep.subr.mxu0 0.0
    %2004 = vmatpush1.msra.mxu0 0.0
    %2005 = vmatprep.subr.mxu0 0.0
    %2006 = vmatpush1.msra.mxu0 0.0
    %2007 = vmatprep.subr.mxu0 0.0
    %2008 = vmatpush1.msra.mxu0 0.0
    %2009 = vmatprep.subr.mxu0 0.0
    %2010 = vmatpush1.msra.mxu0 0.0
    %2011 = vmatprep.subr.mxu0 0.0
    %2012 = vmatpush1.msra.mxu0 0.0
    %2013 = vmatprep.subr.mxu0 0.0
    %2014 = vmatpush1.msra.mxu0 %v1409
    %2015 = vmatprep.subr.mxu0 0.0
    %2016 = vmatpush2.msra.mxu0 0.0
    %2017 = vmatprep.subr.mxu0 0.0
    %2018 = vmatpush2.msra.mxu0 0.0
    %2019 = vmatprep.subr.mxu0 0.0
    %2020 = vmatpush2.msra.mxu0 0.0
    %2021 = vmatprep.subr.mxu0 0.0
    %2022 = vmatpush2.msra.mxu0 0.0
    %2023 = vmatprep.subr.mxu0 0.0
    %2024 = vmatpush2.msra.mxu0 0.0
    %2025 = vmatprep.subr.mxu0 0.0
    %2026 = vmatpush2.msra.mxu0 0.0
    %2027 = vmatprep.subr.mxu0 0.0
    %2028 = vmatpush2.msra.mxu0 0.0
    %2029 = vmatprep.subr.mxu0 0.0
    %2030 = vmatpush2.msra.mxu0 0.0
    %2031 = vmatprep.subr.mxu0 0.0
    %2032 = vmatpush2.msra.mxu0 0.0
    %2033 = vmatprep.subr.mxu0 0.0
    %2034 = vmatpush2.msra.mxu0 0.0
    %2035 = vmatprep.subr.mxu0 0.0
    %2036 = vmatpush2.msra.mxu0 0.0
    %2037 = vmatprep.subr.mxu0 0.0
    %2038 = vmatpush2.msra.mxu0 0.0
    %2039 = vmatprep.subr.mxu0 0.0
    %2040 = vmatpush2.msra.mxu0 0.0
    %2041 = vmatprep.subr.mxu0 0.0
    %2042 = vmatpush2.msra.mxu0 0.0
    %2043 = vmatprep.subr.mxu0 0.0
    %2044 = vmatpush2.msra.mxu0 0.0
    %2045 = vmatprep.subr.mxu0 0.0
    %2046 = vmatpush2.msra.mxu0 0.0
    %2047 = vmatprep.mubr.f32.mxu0 0.0
    %2048 = vmatmul.mubr.f32.gmra.mxu0 %v1981
    %v2049 = vpop.f32.mrf.mxu0
    %v2050 = vadd.f32 0.0, %v2049
    %v2051 = vpop.f32.mrf.mxu0
    %2052 = vdwg.mxu0
    %v2053 = vld [vmem:[%s11] sm:$0xff]
    %v2054 = vld [vmem:[%s11 + $0x8] sm:$0xff]
    %v2055 = vld [vmem:[%s11 + $0x10] sm:$0xff]
    %v2056 = vld [vmem:[%s11 + $0x18] sm:$0xff]
    %v2058 = vsel %vm1412, %v1831, 0
    %2060 = vmatprep.subr.mxu0 0.0
    %2061 = vmatpush1.msra.mxu0 0.0
    %2062 = vmatprep.subr.mxu0 0.0
    %2063 = vmatpush1.msra.mxu0 0.0
    %2064 = vmatprep.subr.mxu0 0.0
    %2065 = vmatpush1.msra.mxu0 0.0
    %2066 = vmatprep.subr.mxu0 0.0
    %2067 = vmatpush1.msra.mxu0 0.0
    %2068 = vmatprep.subr.mxu0 0.0
    %2069 = vmatpush1.msra.mxu0 0.0
    %2070 = vmatprep.subr.mxu0 0.0
    %2071 = vmatpush1.msra.mxu0 0.0
    %2072 = vmatprep.subr.mxu0 0.0
    %2073 = vmatpush1.msra.mxu0 0.0
    %2074 = vmatprep.subr.mxu0 0.0
    %2075 = vmatpush1.msra.mxu0 0.0
    %2076 = vmatprep.subr.mxu0 0.0
    %2077 = vmatpush1.msra.mxu0 0.0
    %2078 = vmatprep.subr.mxu0 0.0
    %2079 = vmatpush1.msra.mxu0 0.0
    %2080 = vmatprep.subr.mxu0 0.0
    %2081 = vmatpush1.msra.mxu0 0.0
    %2082 = vmatprep.subr.mxu0 0.0
    %2083 = vmatpush1.msra.mxu0 0.0
    %2084 = vmatprep.subr.mxu0 0.0
    %2085 = vmatpush1.msra.mxu0 0.0
    %2086 = vmatprep.subr.mxu0 0.0
    %2087 = vmatpush1.msra.mxu0 0.0
    %2088 = vmatprep.subr.mxu0 0.0
    %2089 = vmatpush1.msra.mxu0 0.0
    %2090 = vmatprep.subr.mxu0 0.0
    %2091 = vmatpush1.msra.mxu0 %v2053
    %2092 = vmatprep.subr.mxu0 0.0
    %2093 = vmatpush2.msra.mxu0 0.0
    %2094 = vmatprep.subr.mxu0 0.0
    %2095 = vmatpush2.msra.mxu0 0.0
    %2096 = vmatprep.subr.mxu0 0.0
    %2097 = vmatpush2.msra.mxu0 0.0
    %2098 = vmatprep.subr.mxu0 0.0
    %2099 = vmatpush2.msra.mxu0 0.0
    %2100 = vmatprep.subr.mxu0 0.0
    %2101 = vmatpush2.msra.mxu0 0.0
    %2102 = vmatprep.subr.mxu0 0.0
    %2103 = vmatpush2.msra.mxu0 0.0
    %2104 = vmatprep.subr.mxu0 0.0
    %2105 = vmatpush2.msra.mxu0 0.0
    %2106 = vmatprep.subr.mxu0 0.0
    %2107 = vmatpush2.msra.mxu0 0.0
    %2108 = vmatprep.subr.mxu0 0.0
    %2109 = vmatpush2.msra.mxu0 0.0
    %2110 = vmatprep.subr.mxu0 0.0
    %2111 = vmatpush2.msra.mxu0 0.0
    %2112 = vmatprep.subr.mxu0 0.0
    %2113 = vmatpush2.msra.mxu0 0.0
    %2114 = vmatprep.subr.mxu0 0.0
    %2115 = vmatpush2.msra.mxu0 0.0
    %2116 = vmatprep.subr.mxu0 0.0
    %2117 = vmatpush2.msra.mxu0 0.0
    %2118 = vmatprep.subr.mxu0 0.0
    %2119 = vmatpush2.msra.mxu0 0.0
    %2120 = vmatprep.subr.mxu0 0.0
    %2121 = vmatpush2.msra.mxu0 0.0
    %2122 = vmatprep.subr.mxu0 0.0
    %2123 = vmatpush2.msra.mxu0 0.0
    %2124 = vmatprep.mubr.f32.mxu0 0.0
    %2125 = vmatmul.mubr.f32.gmra.mxu0 %v2058
    %v2126 = vpop.f32.mrf.mxu0
    %v2127 = vadd.f32 0.0, %v2126
    %v2128 = vpop.f32.mrf.mxu0
    %2129 = vdwg.mxu0
    %v2131 = vsel %vm1412, %v1904, 0
    %2133 = vmatprep.subr.mxu0 0.0
    %2134 = vmatpush1.msra.mxu0 0.0
    %2135 = vmatprep.subr.mxu0 0.0
    %2136 = vmatpush1.msra.mxu0 0.0
    %2137 = vmatprep.subr.mxu0 0.0
    %2138 = vmatpush1.msra.mxu0 0.0
    %2139 = vmatprep.subr.mxu0 0.0
    %2140 = vmatpush1.msra.mxu0 0.0
    %2141 = vmatprep.subr.mxu0 0.0
    %2142 = vmatpush1.msra.mxu0 0.0
    %2143 = vmatprep.subr.mxu0 0.0
    %2144 = vmatpush1.msra.mxu0 0.0
    %2145 = vmatprep.subr.mxu0 0.0
    %2146 = vmatpush1.msra.mxu0 0.0
    %2147 = vmatprep.subr.mxu0 0.0
    %2148 = vmatpush1.msra.mxu0 0.0
    %2149 = vmatprep.subr.mxu0 0.0
    %2150 = vmatpush1.msra.mxu0 0.0
    %2151 = vmatprep.subr.mxu0 0.0
    %2152 = vmatpush1.msra.mxu0 0.0
    %2153 = vmatprep.subr.mxu0 0.0
    %2154 = vmatpush1.msra.mxu0 0.0
    %2155 = vmatprep.subr.mxu0 0.0
    %2156 = vmatpush1.msra.mxu0 0.0
    %2157 = vmatprep.subr.mxu0 0.0
    %2158 = vmatpush1.msra.mxu0 0.0
    %2159 = vmatprep.subr.mxu0 0.0
    %2160 = vmatpush1.msra.mxu0 0.0
    %2161 = vmatprep.subr.mxu0 0.0
    %2162 = vmatpush1.msra.mxu0 0.0
    %2163 = vmatprep.subr.mxu0 0.0
    %2164 = vmatpush1.msra.mxu0 %v2054
    %2165 = vmatprep.subr.mxu0 0.0
    %2166 = vmatpush2.msra.mxu0 0.0
    %2167 = vmatprep.subr.mxu0 0.0
    %2168 = vmatpush2.msra.mxu0 0.0
    %2169 = vmatprep.subr.mxu0 0.0
    %2170 = vmatpush2.msra.mxu0 0.0
    %2171 = vmatprep.subr.mxu0 0.0
    %2172 = vmatpush2.msra.mxu0 0.0
    %2173 = vmatprep.subr.mxu0 0.0
    %2174 = vmatpush2.msra.mxu0 0.0
    %2175 = vmatprep.subr.mxu0 0.0
    %2176 = vmatpush2.msra.mxu0 0.0
    %2177 = vmatprep.subr.mxu0 0.0
    %2178 = vmatpush2.msra.mxu0 0.0
    %2179 = vmatprep.subr.mxu0 0.0
    %2180 = vmatpush2.msra.mxu0 0.0
    %2181 = vmatprep.subr.mxu0 0.0
    %2182 = vmatpush2.msra.mxu0 0.0
    %2183 = vmatprep.subr.mxu0 0.0
    %2184 = vmatpush2.msra.mxu0 0.0
    %2185 = vmatprep.subr.mxu0 0.0
    %2186 = vmatpush2.msra.mxu0 0.0
    %2187 = vmatprep.subr.mxu0 0.0
    %2188 = vmatpush2.msra.mxu0 0.0
    %2189 = vmatprep.subr.mxu0 0.0
    %2190 = vmatpush2.msra.mxu0 0.0
    %2191 = vmatprep.subr.mxu0 0.0
    %2192 = vmatpush2.msra.mxu0 0.0
    %2193 = vmatprep.subr.mxu0 0.0
    %2194 = vmatpush2.msra.mxu0 0.0
    %2195 = vmatprep.subr.mxu0 0.0
    %2196 = vmatpush2.msra.mxu0 0.0
    %2197 = vmatprep.mubr.f32.mxu0 0.0
    %2198 = vmatmul.mubr.f32.gmra.mxu0 %v2131
    %v2199 = vpop.f32.mrf.mxu0
    %v2200 = vadd.f32 0.0, %v2199
    %v2201 = vpop.f32.mrf.mxu0
    %2202 = vdwg.mxu0
    %v2204 = vsel %vm1412, %v1977, 0
    %2206 = vmatprep.subr.mxu0 0.0
    %2207 = vmatpush1.msra.mxu0 0.0
    %2208 = vmatprep.subr.mxu0 0.0
    %2209 = vmatpush1.msra.mxu0 0.0
    %2210 = vmatprep.subr.mxu0 0.0
    %2211 = vmatpush1.msra.mxu0 0.0
    %2212 = vmatprep.subr.mxu0 0.0
    %2213 = vmatpush1.msra.mxu0 0.0
    %2214 = vmatprep.subr.mxu0 0.0
    %2215 = vmatpush1.msra.mxu0 0.0
    %2216 = vmatprep.subr.mxu0 0.0
    %2217 = vmatpush1.msra.mxu0 0.0
    %2218 = vmatprep.subr.mxu0 0.0
    %2219 = vmatpush1.msra.mxu0 0.0
    %2220 = vmatprep.subr.mxu0 0.0
    %2221 = vmatpush1.msra.mxu0 0.0
    %2222 = vmatprep.subr.mxu0 0.0
    %2223 = vmatpush1.msra.mxu0 0.0
    %2224 = vmatprep.subr.mxu0 0.0
    %2225 = vmatpush1.msra.mxu0 0.0
    %2226 = vmatprep.subr.mxu0 0.0
    %2227 = vmatpush1.msra.mxu0 0.0
    %2228 = vmatprep.subr.mxu0 0.0
    %2229 = vmatpush1.msra.mxu0 0.0
    %2230 = vmatprep.subr.mxu0 0.0
    %2231 = vmatpush1.msra.mxu0 0.0
    %2232 = vmatprep.subr.mxu0 0.0
    %2233 = vmatpush1.msra.mxu0 0.0
    %2234 = vmatprep.subr.mxu0 0.0
    %2235 = vmatpush1.msra.mxu0 0.0
    %2236 = vmatprep.subr.mxu0 0.0
    %2237 = vmatpush1.msra.mxu0 %v2055
    %2238 = vmatprep.subr.mxu0 0.0
    %2239 = vmatpush2.msra.mxu0 0.0
    %2240 = vmatprep.subr.mxu0 0.0
    %2241 = vmatpush2.msra.mxu0 0.0
    %2242 = vmatprep.subr.mxu0 0.0
    %2243 = vmatpush2.msra.mxu0 0.0
    %2244 = vmatprep.subr.mxu0 0.0
    %2245 = vmatpush2.msra.mxu0 0.0
    %2246 = vmatprep.subr.mxu0 0.0
    %2247 = vmatpush2.msra.mxu0 0.0
    %2248 = vmatprep.subr.mxu0 0.0
    %2249 = vmatpush2.msra.mxu0 0.0
    %2250 = vmatprep.subr.mxu0 0.0
    %2251 = vmatpush2.msra.mxu0 0.0
    %2252 = vmatprep.subr.mxu0 0.0
    %2253 = vmatpush2.msra.mxu0 0.0
    %2254 = vmatprep.subr.mxu0 0.0
    %2255 = vmatpush2.msra.mxu0 0.0
    %2256 = vmatprep.subr.mxu0 0.0
    %2257 = vmatpush2.msra.mxu0 0.0
    %2258 = vmatprep.subr.mxu0 0.0
    %2259 = vmatpush2.msra.mxu0 0.0
    %2260 = vmatprep.subr.mxu0 0.0
    %2261 = vmatpush2.msra.mxu0 0.0
    %2262 = vmatprep.subr.mxu0 0.0
    %2263 = vmatpush2.msra.mxu0 0.0
    %2264 = vmatprep.subr.mxu0 0.0
    %2265 = vmatpush2.msra.mxu0 0.0
    %2266 = vmatprep.subr.mxu0 0.0
    %2267 = vmatpush2.msra.mxu0 0.0
    %2268 = vmatprep.subr.mxu0 0.0
    %2269 = vmatpush2.msra.mxu0 0.0
    %2270 = vmatprep.mubr.f32.mxu0 0.0
    %2271 = vmatmul.mubr.f32.gmra.mxu0 %v2204
    %v2272 = vpop.f32.mrf.mxu0
    %v2273 = vadd.f32 0.0, %v2272
    %v2274 = vpop.f32.mrf.mxu0
    %2275 = vdwg.mxu0
    %v2277 = vsel %vm1412, %v2050, 0
    %2279 = vmatprep.subr.mxu0 0.0
    %2280 = vmatpush1.msra.mxu0 0.0
    %2281 = vmatprep.subr.mxu0 0.0
    %2282 = vmatpush1.msra.mxu0 0.0
    %2283 = vmatprep.subr.mxu0 0.0
    %2284 = vmatpush1.msra.mxu0 0.0
    %2285 = vmatprep.subr.mxu0 0.0
    %2286 = vmatpush1.msra.mxu0 0.0
    %2287 = vmatprep.subr.mxu0 0.0
    %2288 = vmatpush1.msra.mxu0 0.0
    %2289 = vmatprep.subr.mxu0 0.0
    %2290 = vmatpush1.msra.mxu0 0.0
    %2291 = vmatprep.subr.mxu0 0.0
    %2292 = vmatpush1.msra.mxu0 0.0
    %2293 = vmatprep.subr.mxu0 0.0
    %2294 = vmatpush1.msra.mxu0 0.0
    %2295 = vmatprep.subr.mxu0 0.0
    %2296 = vmatpush1.msra.mxu0 0.0
    %2297 = vmatprep.subr.mxu0 0.0
    %2298 = vmatpush1.msra.mxu0 0.0
    %2299 = vmatprep.subr.mxu0 0.0
    %2300 = vmatpush1.msra.mxu0 0.0
    %2301 = vmatprep.subr.mxu0 0.0
    %2302 = vmatpush1.msra.mxu0 0.0
    %2303 = vmatprep.subr.mxu0 0.0
    %2304 = vmatpush1.msra.mxu0 0.0
    %2305 = vmatprep.subr.mxu0 0.0
    %2306 = vmatpush1.msra.mxu0 0.0
    %2307 = vmatprep.subr.mxu0 0.0
    %2308 = vmatpush1.msra.mxu0 0.0
    %2309 = vmatprep.subr.mxu0 0.0
    %2310 = vmatpush1.msra.mxu0 %v2056
    %2311 = vmatprep.subr.mxu0 0.0
    %2312 = vmatpush2.msra.mxu0 0.0
    %2313 = vmatprep.subr.mxu0 0.0
    %2314 = vmatpush2.msra.mxu0 0.0
    %2315 = vmatprep.subr.mxu0 0.0
    %2316 = vmatpush2.msra.mxu0 0.0
    %2317 = vmatprep.subr.mxu0 0.0
    %2318 = vmatpush2.msra.mxu0 0.0
    %2319 = vmatprep.subr.mxu0 0.0
    %2320 = vmatpush2.msra.mxu0 0.0
    %2321 = vmatprep.subr.mxu0 0.0
    %2322 = vmatpush2.msra.mxu0 0.0
    %2323 = vmatprep.subr.mxu0 0.0
    %2324 = vmatpush2.msra.mxu0 0.0
    %2325 = vmatprep.subr.mxu0 0.0
    %2326 = vmatpush2.msra.mxu0 0.0
    %2327 = vmatprep.subr.mxu0 0.0
    %2328 = vmatpush2.msra.mxu0 0.0
    %2329 = vmatprep.subr.mxu0 0.0
    %2330 = vmatpush2.msra.mxu0 0.0
    %2331 = vmatprep.subr.mxu0 0.0
    %2332 = vmatpush2.msra.mxu0 0.0
    %2333 = vmatprep.subr.mxu0 0.0
    %2334 = vmatpush2.msra.mxu0 0.0
    %2335 = vmatprep.subr.mxu0 0.0
    %2336 = vmatpush2.msra.mxu0 0.0
    %2337 = vmatprep.subr.mxu0 0.0
    %2338 = vmatpush2.msra.mxu0 0.0
    %2339 = vmatprep.subr.mxu0 0.0
    %2340 = vmatpush2.msra.mxu0 0.0
    %2341 = vmatprep.subr.mxu0 0.0
    %2342 = vmatpush2.msra.mxu0 0.0
    %2343 = vmatprep.mubr.f32.mxu0 0.0
    %2344 = vmatmul.mubr.f32.gmra.mxu0 %v2277
    %v2345 = vpop.f32.mrf.mxu0
    %v2346 = vadd.f32 0.0, %v2345
    %v2347 = vpop.f32.mrf.mxu0
    %2348 = vdwg.mxu0
    %v2349 = vsel %vm283, %v2127, 0.0
    %v2350 = vsel %vm283, %v2200, 0.0
    %v2351 = vadd.f32 %v2349, %v2350
    %v2352 = vsel %vm283, %v2273, 0.0
    %v2353 = vadd.f32 %v2351, %v2352
    %v2354 = vsel %vm283, %v2346, 0.0
    %v2355 = vadd.f32 %v2353, %v2354
    %v2356 = vadd.f32 %v485, %v2355
    %v2357 = vld [vmem:[%s12] sm:$0x1]
    %v2359 = vlaneseq
    %v2360 = vshrl.u32 %v2359, 7
    %v2361 = vsub.s32 0, %v2360
    %v2362 = vrot.slane %v2357, %v2361
    %v2364 = vadd.f32 %v2356, %v2362
    %v2365 = vld [vmem:[%s13] sm:$0x1]
    %v2366 = vld [vmem:[%s14] sm:$0x1]
    %v2367 = vsel %vm283, %v2364, 0.0
    %2368 = vadd.xlane.f32.xlu0 %v2367
    %v2369 = vpop.xlane.xlu0 %2368
    %v2370 = vmul.f32 %v2369, %v492
    %v2371 = vsub.f32 %v2364, %v2370
    %v2372 = vmul.f32 %v2371, %v2371
    %v2373 = vsel %vm283, %v2372, 0.0
    %2374 = vadd.xlane.f32.xlu0 %v2373
    %v2375 = vpop.xlane.xlu0 %2374
    %v2376 = vmul.f32 %v2375, %v492
    %v2377 = vadd.f32 %v2376, 1e-05
    %v2378 = vrsqrt.pop %v2377
    %v2379 = vmul.f32 %v2371, %v2378
    %v2381 = vlaneseq
    %v2382 = vshrl.u32 %v2381, 7
    %v2383 = vsub.s32 0, %v2382
    %v2384 = vrot.slane %v2365, %v2383
    %v2386 = vmul.f32 %v2379, %v2384
    %v2388 = vlaneseq
    %v2389 = vshrl.u32 %v2388, 7
    %v2390 = vsub.s32 0, %v2389
    %v2391 = vrot.slane %v2366, %v2390
    %v2393 = vadd.f32 %v2386, %v2391
    %v2394 = vld [vmem:[%s15] sm:$0xff]
    %v2395 = vld [vmem:[%s15 + $0x8] sm:$0xff]
    %v2396 = vld [vmem:[%s15 + $0x10] sm:$0xff]
    %v2397 = vld [vmem:[%s15 + $0x18] sm:$0xff]
    %v2398 = vld [vmem:[%s16] sm:$0x1]
    %v2400 = vlaneseq
    %v2401 = vshrl.u32 %v2400, 7
    %v2402 = vsub.s32 0, %v2401
    %v2403 = vrot.slane %v2398, %v2402
    %v2406 = vsel %vm283, %v2393, 0
    %2408 = vmatprep.subr.mxu0 0.0
    %2409 = vmatpush1.msra.mxu0 0.0
    %2410 = vmatprep.subr.mxu0 0.0
    %2411 = vmatpush1.msra.mxu0 0.0
    %2412 = vmatprep.subr.mxu0 0.0
    %2413 = vmatpush1.msra.mxu0 0.0
    %2414 = vmatprep.subr.mxu0 0.0
    %2415 = vmatpush1.msra.mxu0 0.0
    %2416 = vmatprep.subr.mxu0 0.0
    %2417 = vmatpush1.msra.mxu0 0.0
    %2418 = vmatprep.subr.mxu0 0.0
    %2419 = vmatpush1.msra.mxu0 0.0
    %2420 = vmatprep.subr.mxu0 0.0
    %2421 = vmatpush1.msra.mxu0 0.0
    %2422 = vmatprep.subr.mxu0 0.0
    %2423 = vmatpush1.msra.mxu0 0.0
    %2424 = vmatprep.subr.mxu0 0.0
    %2425 = vmatpush1.msra.mxu0 0.0
    %2426 = vmatprep.subr.mxu0 0.0
    %2427 = vmatpush1.msra.mxu0 0.0
    %2428 = vmatprep.subr.mxu0 0.0
    %2429 = vmatpush1.msra.mxu0 0.0
    %2430 = vmatprep.subr.mxu0 0.0
    %2431 = vmatpush1.msra.mxu0 0.0
    %2432 = vmatprep.subr.mxu0 0.0
    %2433 = vmatpush1.msra.mxu0 %v2397
    %2434 = vmatprep.subr.mxu0 0.0
    %2435 = vmatpush1.msra.mxu0 %v2396
    %2436 = vmatprep.subr.mxu0 0.0
    %2437 = vmatpush1.msra.mxu0 %v2395
    %2438 = vmatprep.subr.mxu0 0.0
    %2439 = vmatpush1.msra.mxu0 %v2394
    %2440 = vmatprep.subr.mxu0 0.0
    %2441 = vmatpush2.msra.mxu0 0.0
    %2442 = vmatprep.subr.mxu0 0.0
    %2443 = vmatpush2.msra.mxu0 0.0
    %2444 = vmatprep.subr.mxu0 0.0
    %2445 = vmatpush2.msra.mxu0 0.0
    %2446 = vmatprep.subr.mxu0 0.0
    %2447 = vmatpush2.msra.mxu0 0.0
    %2448 = vmatprep.subr.mxu0 0.0
    %2449 = vmatpush2.msra.mxu0 0.0
    %2450 = vmatprep.subr.mxu0 0.0
    %2451 = vmatpush2.msra.mxu0 0.0
    %2452 = vmatprep.subr.mxu0 0.0
    %2453 = vmatpush2.msra.mxu0 0.0
    %2454 = vmatprep.subr.mxu0 0.0
    %2455 = vmatpush2.msra.mxu0 0.0
    %2456 = vmatprep.subr.mxu0 0.0
    %2457 = vmatpush2.msra.mxu0 0.0
    %2458 = vmatprep.subr.mxu0 0.0
    %2459 = vmatpush2.msra.mxu0 0.0
    %2460 = vmatprep.subr.mxu0 0.0
    %2461 = vmatpush2.msra.mxu0 0.0
    %2462 = vmatprep.subr.mxu0 0.0
    %2463 = vmatpush2.msra.mxu0 0.0
    %2464 = vmatprep.subr.mxu0 0.0
    %2465 = vmatpush2.msra.mxu0 0.0
    %2466 = vmatprep.subr.mxu0 0.0
    %2467 = vmatpush2.msra.mxu0 0.0
    %2468 = vmatprep.subr.mxu0 0.0
    %2469 = vmatpush2.msra.mxu0 0.0
    %2470 = vmatprep.subr.mxu0 0.0
    %2471 = vmatpush2.msra.mxu0 0.0
    %2472 = vmatprep.mubr.f32.mxu0 0.0
    %2473 = vmatmul.mubr.f32.gmra.mxu0 %v2406
    %v2474 = vpop.f32.mrf.mxu0
    %v2475 = vadd.f32 %v2403, %v2474
    %v2476 = vpop.f32.mrf.mxu0
    %2477 = vdwg.mxu0
    %v2478 = vmul.f32 %v2475, 0.5
    %v2479 = vmul.f32 %v2475, 0.70710677
    %vm2480 = vcmp.ge.f32.partialorder %v2479, 0.0
    %v2481 = vsel %vm2480, 1.0, -1.0
    %v2482 = vand.u32 2147483647, %v2479
    %v2483 = vmul.f32 %v2482, 0.3275911
    %v2484 = vadd.f32 %v2483, 1.0
    %v2485 = vrcp.pop %v2484
    %v2486 = vmul.f32 1.0, %v2485
    %v2487 = vmul.f32 %v2486, 1.0614054
    %v2488 = vadd.f32 %v2487, -1.4531521
    %v2489 = vmul.f32 %v2488, %v2486
    %v2490 = vadd.f32 %v2489, 1.4214138
    %v2491 = vmul.f32 %v2490, %v2486
    %v2492 = vadd.f32 %v2491, -0.28449672
    %v2493 = vmul.f32 %v2492, %v2486
    %v2494 = vadd.f32 %v2493, 0.2548296
    %v2495 = vmul.f32 %v2494, %v2486
    %v2496 = vsub.f32 0.0, %v2482
    %v2497 = vmul.f32 %v2496, %v2482
    %v2498 = vmul.f32 %v2497, 1.442695
    %v2499 = vpow.pop %v2498
    %v2500 = vmul.f32 %v2495, %v2499
    %v2501 = vsub.f32 1.0, %v2500
    %v2502 = vmul.f32 %v2481, %v2501
    %v2503 = vadd.f32 %v2502, 1.0
    %v2504 = vmul.f32 %v2478, %v2503
    %v2505 = vld [vmem:[%s17] sm:$0xff]
    %v2506 = vld [vmem:[%s17 + $0x8] sm:$0xff]
    %v2507 = vld [vmem:[%s17 + $0x10] sm:$0xff]
    %v2508 = vld [vmem:[%s17 + $0x18] sm:$0xff]
    %v2509 = vld [vmem:[%s17 + $0x20] sm:$0xff]
    %v2510 = vld [vmem:[%s17 + $0x28] sm:$0xff]
    %v2511 = vld [vmem:[%s17 + $0x30] sm:$0xff]
    %v2512 = vld [vmem:[%s17 + $0x38] sm:$0xff]
    %v2513 = vld [vmem:[%s17 + $0x40] sm:$0xff]
    %v2514 = vld [vmem:[%s17 + $0x48] sm:$0xff]
    %v2515 = vld [vmem:[%s17 + $0x50] sm:$0xff]
    %v2516 = vld [vmem:[%s17 + $0x58] sm:$0xff]
    %v2517 = vld [vmem:[%s17 + $0x60] sm:$0xff]
    %v2518 = vld [vmem:[%s17 + $0x68] sm:$0xff]
    %v2519 = vld [vmem:[%s17 + $0x70] sm:$0xff]
    %v2520 = vld [vmem:[%s17 + $0x78] sm:$0xff]
    %v2521 = vld [vmem:[%s18] sm:$0x1]
    %v2523 = vlaneseq
    %v2524 = vshrl.u32 %v2523, 7
    %v2525 = vsub.s32 0, %v2524
    %v2526 = vrot.slane %v2521, %v2525
    %2528 = vmatprep.subr.mxu0 0.0
    %2529 = vmatpush1.msra.mxu0 %v2520
    %2530 = vmatprep.subr.mxu0 0.0
    %2531 = vmatpush1.msra.mxu0 %v2519
    %2532 = vmatprep.subr.mxu0 0.0
    %2533 = vmatpush1.msra.mxu0 %v2518
    %2534 = vmatprep.subr.mxu0 0.0
    %2535 = vmatpush1.msra.mxu0 %v2517
    %2536 = vmatprep.subr.mxu0 0.0
    %2537 = vmatpush1.msra.mxu0 %v2516
    %2538 = vmatprep.subr.mxu0 0.0
    %2539 = vmatpush1.msra.mxu0 %v2515
    %2540 = vmatprep.subr.mxu0 0.0
    %2541 = vmatpush1.msra.mxu0 %v2514
    %2542 = vmatprep.subr.mxu0 0.0
    %2543 = vmatpush1.msra.mxu0 %v2513
    %2544 = vmatprep.subr.mxu0 0.0
    %2545 = vmatpush1.msra.mxu0 %v2512
    %2546 = vmatprep.subr.mxu0 0.0
    %2547 = vmatpush1.msra.mxu0 %v2511
    %2548 = vmatprep.subr.mxu0 0.0
    %2549 = vmatpush1.msra.mxu0 %v2510
    %2550 = vmatprep.subr.mxu0 0.0
    %2551 = vmatpush1.msra.mxu0 %v2509
    %2552 = vmatprep.subr.mxu0 0.0
    %2553 = vmatpush1.msra.mxu0 %v2508
    %2554 = vmatprep.subr.mxu0 0.0
    %2555 = vmatpush1.msra.mxu0 %v2507
    %2556 = vmatprep.subr.mxu0 0.0
    %2557 = vmatpush1.msra.mxu0 %v2506
    %2558 = vmatprep.subr.mxu0 0.0
    %2559 = vmatpush1.msra.mxu0 %v2505
    %2560 = vmatprep.subr.mxu0 0.0
    %2561 = vmatpush2.msra.mxu0 0.0
    %2562 = vmatprep.subr.mxu0 0.0
    %2563 = vmatpush2.msra.mxu0 0.0
    %2564 = vmatprep.subr.mxu0 0.0
    %2565 = vmatpush2.msra.mxu0 0.0
    %2566 = vmatprep.subr.mxu0 0.0
    %2567 = vmatpush2.msra.mxu0 0.0
    %2568 = vmatprep.subr.mxu0 0.0
    %2569 = vmatpush2.msra.mxu0 0.0
    %2570 = vmatprep.subr.mxu0 0.0
    %2571 = vmatpush2.msra.mxu0 0.0
    %2572 = vmatprep.subr.mxu0 0.0
    %2573 = vmatpush2.msra.mxu0 0.0
    %2574 = vmatprep.subr.mxu0 0.0
    %2575 = vmatpush2.msra.mxu0 0.0
    %2576 = vmatprep.subr.mxu0 0.0
    %2577 = vmatpush2.msra.mxu0 0.0
    %2578 = vmatprep.subr.mxu0 0.0
    %2579 = vmatpush2.msra.mxu0 0.0
    %2580 = vmatprep.subr.mxu0 0.0
    %2581 = vmatpush2.msra.mxu0 0.0
    %2582 = vmatprep.subr.mxu0 0.0
    %2583 = vmatpush2.msra.mxu0 0.0
    %2584 = vmatprep.subr.mxu0 0.0
    %2585 = vmatpush2.msra.mxu0 0.0
    %2586 = vmatprep.subr.mxu0 0.0
    %2587 = vmatpush2.msra.mxu0 0.0
    %2588 = vmatprep.subr.mxu0 0.0
    %2589 = vmatpush2.msra.mxu0 0.0
    %2590 = vmatprep.subr.mxu0 0.0
    %2591 = vmatpush2.msra.mxu0 0.0
    %2592 = vmatprep.mubr.f32.mxu0 0.0
    %2593 = vmatmul.mubr.f32.gmra.mxu0 %v2504
    %v2594 = vpop.f32.mrf.mxu0
    %v2595 = vadd.f32 %v2526, %v2594
    %v2596 = vpop.f32.mrf.mxu0
    %2597 = vdwg.mxu0
    %v2598 = vadd.f32 %v2364, %v2595
    %s2599 = scalar_lea.vmem %s6, 1
    %v2600 = vld [vmem:[%s2599] sm:$0x1]
    %s2601 = scalar_lea.vmem %s7, 1
    %v2602 = vld [vmem:[%s2601] sm:$0x1]
    %v2603 = vsel %vm283, %v2598, 0.0
    %2604 = vadd.xlane.f32.xlu0 %v2603
    %v2605 = vpop.xlane.xlu0 %2604
    %v2606 = vmul.f32 %v2605, %v492
    %v2607 = vsub.f32 %v2598, %v2606
    %v2608 = vmul.f32 %v2607, %v2607
    %v2609 = vsel %vm283, %v2608, 0.0
    %2610 = vadd.xlane.f32.xlu0 %v2609
    %v2611 = vpop.xlane.xlu0 %2610
    %v2612 = vmul.f32 %v2611, %v492
    %v2613 = vadd.f32 %v2612, 1e-05
    %v2614 = vrsqrt.pop %v2613
    %v2615 = vmul.f32 %v2607, %v2614
    %v2617 = vlaneseq
    %v2618 = vshrl.u32 %v2617, 7
    %v2619 = vsub.s32 0, %v2618
    %v2620 = vrot.slane %v2600, %v2619
    %v2622 = vmul.f32 %v2615, %v2620
    %v2624 = vlaneseq
    %v2625 = vshrl.u32 %v2624, 7
    %v2626 = vsub.s32 0, %v2625
    %v2627 = vrot.slane %v2602, %v2626
    %v2629 = vadd.f32 %v2622, %v2627
    %s2630 = scalar_lea.vmem %s8, 128
    %v2631 = vld [vmem:[%s2630] sm:$0xff]
    %v2632 = vld [vmem:[%s2630 + $0x8] sm:$0xff]
    %v2633 = vld [vmem:[%s2630 + $0x10] sm:$0xff]
    %v2634 = vld [vmem:[%s2630 + $0x18] sm:$0xff]
    %v2635 = vld [vmem:[%s2630 + $0x20] sm:$0xff]
    %v2636 = vld [vmem:[%s2630 + $0x28] sm:$0xff]
    %v2637 = vld [vmem:[%s2630 + $0x30] sm:$0xff]
    %v2638 = vld [vmem:[%s2630 + $0x38] sm:$0xff]
    %v2639 = vld [vmem:[%s2630 + $0x40] sm:$0xff]
    %v2640 = vld [vmem:[%s2630 + $0x48] sm:$0xff]
    %v2641 = vld [vmem:[%s2630 + $0x50] sm:$0xff]
    %v2642 = vld [vmem:[%s2630 + $0x58] sm:$0xff]
    %v2643 = vld [vmem:[%s2630 + $0x60] sm:$0xff]
    %v2644 = vld [vmem:[%s2630 + $0x68] sm:$0xff]
    %v2645 = vld [vmem:[%s2630 + $0x70] sm:$0xff]
    %v2646 = vld [vmem:[%s2630 + $0x78] sm:$0xff]
    %v2648 = vsel %vm283, %v2629, 0
    %2650 = vmatprep.subr.mxu0 0.0
    %2651 = vmatpush1.msra.mxu0 0.0
    %2652 = vmatprep.subr.mxu0 0.0
    %2653 = vmatpush1.msra.mxu0 0.0
    %2654 = vmatprep.subr.mxu0 0.0
    %2655 = vmatpush1.msra.mxu0 0.0
    %2656 = vmatprep.subr.mxu0 0.0
    %2657 = vmatpush1.msra.mxu0 0.0
    %2658 = vmatprep.subr.mxu0 0.0
    %2659 = vmatpush1.msra.mxu0 0.0
    %2660 = vmatprep.subr.mxu0 0.0
    %2661 = vmatpush1.msra.mxu0 0.0
    %2662 = vmatprep.subr.mxu0 0.0
    %2663 = vmatpush1.msra.mxu0 0.0
    %2664 = vmatprep.subr.mxu0 0.0
    %2665 = vmatpush1.msra.mxu0 0.0
    %2666 = vmatprep.subr.mxu0 0.0
    %2667 = vmatpush1.msra.mxu0 0.0
    %2668 = vmatprep.subr.mxu0 0.0
    %2669 = vmatpush1.msra.mxu0 0.0
    %2670 = vmatprep.subr.mxu0 0.0
    %2671 = vmatpush1.msra.mxu0 0.0
    %2672 = vmatprep.subr.mxu0 0.0
    %2673 = vmatpush1.msra.mxu0 0.0
    %2674 = vmatprep.subr.mxu0 0.0
    %2675 = vmatpush1.msra.mxu0 %v2634
    %2676 = vmatprep.subr.mxu0 0.0
    %2677 = vmatpush1.msra.mxu0 %v2633
    %2678 = vmatprep.subr.mxu0 0.0
    %2679 = vmatpush1.msra.mxu0 %v2632
    %2680 = vmatprep.subr.mxu0 0.0
    %2681 = vmatpush1.msra.mxu0 %v2631
    %2682 = vmatprep.subr.mxu0 0.0
    %2683 = vmatpush2.msra.mxu0 0.0
    %2684 = vmatprep.subr.mxu0 0.0
    %2685 = vmatpush2.msra.mxu0 0.0
    %2686 = vmatprep.subr.mxu0 0.0
    %2687 = vmatpush2.msra.mxu0 0.0
    %2688 = vmatprep.subr.mxu0 0.0
    %2689 = vmatpush2.msra.mxu0 0.0
    %2690 = vmatprep.subr.mxu0 0.0
    %2691 = vmatpush2.msra.mxu0 0.0
    %2692 = vmatprep.subr.mxu0 0.0
    %2693 = vmatpush2.msra.mxu0 0.0
    %2694 = vmatprep.subr.mxu0 0.0
    %2695 = vmatpush2.msra.mxu0 0.0
    %2696 = vmatprep.subr.mxu0 0.0
    %2697 = vmatpush2.msra.mxu0 0.0
    %2698 = vmatprep.subr.mxu0 0.0
    %2699 = vmatpush2.msra.mxu0 0.0
    %2700 = vmatprep.subr.mxu0 0.0
    %2701 = vmatpush2.msra.mxu0 0.0
    %2702 = vmatprep.subr.mxu0 0.0
    %2703 = vmatpush2.msra.mxu0 0.0
    %2704 = vmatprep.subr.mxu0 0.0
    %2705 = vmatpush2.msra.mxu0 0.0
    %2706 = vmatprep.subr.mxu0 0.0
    %2707 = vmatpush2.msra.mxu0 0.0
    %2708 = vmatprep.subr.mxu0 0.0
    %2709 = vmatpush2.msra.mxu0 0.0
    %2710 = vmatprep.subr.mxu0 0.0
    %2711 = vmatpush2.msra.mxu0 0.0
    %2712 = vmatprep.subr.mxu0 0.0
    %2713 = vmatpush2.msra.mxu0 0.0
    %2714 = vmatprep.mubr.f32.mxu0 0.0
    %2715 = vmatmul.mubr.f32.gmra.mxu0 %v2648
    %v2716 = vpop.f32.mrf.mxu0
    %v2717 = vadd.f32 0.0, %v2716
    %v2718 = vpop.f32.mrf.mxu0
    %2719 = vdwg.mxu0
    %2720 = vmatprep.subr.mxu0 0.0
    %2721 = vmatpush1.msra.mxu0 0.0
    %2722 = vmatprep.subr.mxu0 0.0
    %2723 = vmatpush1.msra.mxu0 0.0
    %2724 = vmatprep.subr.mxu0 0.0
    %2725 = vmatpush1.msra.mxu0 0.0
    %2726 = vmatprep.subr.mxu0 0.0
    %2727 = vmatpush1.msra.mxu0 0.0
    %2728 = vmatprep.subr.mxu0 0.0
    %2729 = vmatpush1.msra.mxu0 0.0
    %2730 = vmatprep.subr.mxu0 0.0
    %2731 = vmatpush1.msra.mxu0 0.0
    %2732 = vmatprep.subr.mxu0 0.0
    %2733 = vmatpush1.msra.mxu0 0.0
    %2734 = vmatprep.subr.mxu0 0.0
    %2735 = vmatpush1.msra.mxu0 0.0
    %2736 = vmatprep.subr.mxu0 0.0
    %2737 = vmatpush1.msra.mxu0 0.0
    %2738 = vmatprep.subr.mxu0 0.0
    %2739 = vmatpush1.msra.mxu0 0.0
    %2740 = vmatprep.subr.mxu0 0.0
    %2741 = vmatpush1.msra.mxu0 0.0
    %2742 = vmatprep.subr.mxu0 0.0
    %2743 = vmatpush1.msra.mxu0 0.0
    %2744 = vmatprep.subr.mxu0 0.0
    %2745 = vmatpush1.msra.mxu0 %v2638
    %2746 = vmatprep.subr.mxu0 0.0
    %2747 = vmatpush1.msra.mxu0 %v2637
    %2748 = vmatprep.subr.mxu0 0.0
    %2749 = vmatpush1.msra.mxu0 %v2636
    %2750 = vmatprep.subr.mxu0 0.0
    %2751 = vmatpush1.msra.mxu0 %v2635
    %2752 = vmatprep.subr.mxu0 0.0
    %2753 = vmatpush2.msra.mxu0 0.0
    %2754 = vmatprep.subr.mxu0 0.0
    %2755 = vmatpush2.msra.mxu0 0.0
    %2756 = vmatprep.subr.mxu0 0.0
    %2757 = vmatpush2.msra.mxu0 0.0
    %2758 = vmatprep.subr.mxu0 0.0
    %2759 = vmatpush2.msra.mxu0 0.0
    %2760 = vmatprep.subr.mxu0 0.0
    %2761 = vmatpush2.msra.mxu0 0.0
    %2762 = vmatprep.subr.mxu0 0.0
    %2763 = vmatpush2.msra.mxu0 0.0
    %2764 = vmatprep.subr.mxu0 0.0
    %2765 = vmatpush2.msra.mxu0 0.0
    %2766 = vmatprep.subr.mxu0 0.0
    %2767 = vmatpush2.msra.mxu0 0.0
    %2768 = vmatprep.subr.mxu0 0.0
    %2769 = vmatpush2.msra.mxu0 0.0
    %2770 = vmatprep.subr.mxu0 0.0
    %2771 = vmatpush2.msra.mxu0 0.0
    %2772 = vmatprep.subr.mxu0 0.0
    %2773 = vmatpush2.msra.mxu0 0.0
    %2774 = vmatprep.subr.mxu0 0.0
    %2775 = vmatpush2.msra.mxu0 0.0
    %2776 = vmatprep.subr.mxu0 0.0
    %2777 = vmatpush2.msra.mxu0 0.0
    %2778 = vmatprep.subr.mxu0 0.0
    %2779 = vmatpush2.msra.mxu0 0.0
    %2780 = vmatprep.subr.mxu0 0.0
    %2781 = vmatpush2.msra.mxu0 0.0
    %2782 = vmatprep.subr.mxu0 0.0
    %2783 = vmatpush2.msra.mxu0 0.0
    %2784 = vmatprep.mubr.f32.mxu0 0.0
    %2785 = vmatmul.mubr.f32.gmra.mxu0 %v2648
    %v2786 = vpop.f32.mrf.mxu0
    %v2787 = vadd.f32 0.0, %v2786
    %v2788 = vpop.f32.mrf.mxu0
    %2789 = vdwg.mxu0
    %2790 = vmatprep.subr.mxu0 0.0
    %2791 = vmatpush1.msra.mxu0 0.0
    %2792 = vmatprep.subr.mxu0 0.0
    %2793 = vmatpush1.msra.mxu0 0.0
    %2794 = vmatprep.subr.mxu0 0.0
    %2795 = vmatpush1.msra.mxu0 0.0
    %2796 = vmatprep.subr.mxu0 0.0
    %2797 = vmatpush1.msra.mxu0 0.0
    %2798 = vmatprep.subr.mxu0 0.0
    %2799 = vmatpush1.msra.mxu0 0.0
    %2800 = vmatprep.subr.mxu0 0.0
    %2801 = vmatpush1.msra.mxu0 0.0
    %2802 = vmatprep.subr.mxu0 0.0
    %2803 = vmatpush1.msra.mxu0 0.0
    %2804 = vmatprep.subr.mxu0 0.0
    %2805 = vmatpush1.msra.mxu0 0.0
    %2806 = vmatprep.subr.mxu0 0.0
    %2807 = vmatpush1.msra.mxu0 0.0
    %2808 = vmatprep.subr.mxu0 0.0
    %2809 = vmatpush1.msra.mxu0 0.0
    %2810 = vmatprep.subr.mxu0 0.0
    %2811 = vmatpush1.msra.mxu0 0.0
    %2812 = vmatprep.subr.mxu0 0.0
    %2813 = vmatpush1.msra.mxu0 0.0
    %2814 = vmatprep.subr.mxu0 0.0
    %2815 = vmatpush1.msra.mxu0 %v2642
    %2816 = vmatprep.subr.mxu0 0.0
    %2817 = vmatpush1.msra.mxu0 %v2641
    %2818 = vmatprep.subr.mxu0 0.0
    %2819 = vmatpush1.msra.mxu0 %v2640
    %2820 = vmatprep.subr.mxu0 0.0
    %2821 = vmatpush1.msra.mxu0 %v2639
    %2822 = vmatprep.subr.mxu0 0.0
    %2823 = vmatpush2.msra.mxu0 0.0
    %2824 = vmatprep.subr.mxu0 0.0
    %2825 = vmatpush2.msra.mxu0 0.0
    %2826 = vmatprep.subr.mxu0 0.0
    %2827 = vmatpush2.msra.mxu0 0.0
    %2828 = vmatprep.subr.mxu0 0.0
    %2829 = vmatpush2.msra.mxu0 0.0
    %2830 = vmatprep.subr.mxu0 0.0
    %2831 = vmatpush2.msra.mxu0 0.0
    %2832 = vmatprep.subr.mxu0 0.0
    %2833 = vmatpush2.msra.mxu0 0.0
    %2834 = vmatprep.subr.mxu0 0.0
    %2835 = vmatpush2.msra.mxu0 0.0
    %2836 = vmatprep.subr.mxu0 0.0
    %2837 = vmatpush2.msra.mxu0 0.0
    %2838 = vmatprep.subr.mxu0 0.0
    %2839 = vmatpush2.msra.mxu0 0.0
    %2840 = vmatprep.subr.mxu0 0.0
    %2841 = vmatpush2.msra.mxu0 0.0
    %2842 = vmatprep.subr.mxu0 0.0
    %2843 = vmatpush2.msra.mxu0 0.0
    %2844 = vmatprep.subr.mxu0 0.0
    %2845 = vmatpush2.msra.mxu0 0.0
    %2846 = vmatprep.subr.mxu0 0.0
    %2847 = vmatpush2.msra.mxu0 0.0
    %2848 = vmatprep.subr.mxu0 0.0
    %2849 = vmatpush2.msra.mxu0 0.0
    %2850 = vmatprep.subr.mxu0 0.0
    %2851 = vmatpush2.msra.mxu0 0.0
    %2852 = vmatprep.subr.mxu0 0.0
    %2853 = vmatpush2.msra.mxu0 0.0
    %2854 = vmatprep.mubr.f32.mxu0 0.0
    %2855 = vmatmul.mubr.f32.gmra.mxu0 %v2648
    %v2856 = vpop.f32.mrf.mxu0
    %v2857 = vadd.f32 0.0, %v2856
    %v2858 = vpop.f32.mrf.mxu0
    %2859 = vdwg.mxu0
    %2860 = vmatprep.subr.mxu0 0.0
    %2861 = vmatpush1.msra.mxu0 0.0
    %2862 = vmatprep.subr.mxu0 0.0
    %2863 = vmatpush1.msra.mxu0 0.0
    %2864 = vmatprep.subr.mxu0 0.0
    %2865 = vmatpush1.msra.mxu0 0.0
    %2866 = vmatprep.subr.mxu0 0.0
    %2867 = vmatpush1.msra.mxu0 0.0
    %2868 = vmatprep.subr.mxu0 0.0
    %2869 = vmatpush1.msra.mxu0 0.0
    %2870 = vmatprep.subr.mxu0 0.0
    %2871 = vmatpush1.msra.mxu0 0.0
    %2872 = vmatprep.subr.mxu0 0.0
    %2873 = vmatpush1.msra.mxu0 0.0
    %2874 = vmatprep.subr.mxu0 0.0
    %2875 = vmatpush1.msra.mxu0 0.0
    %2876 = vmatprep.subr.mxu0 0.0
    %2877 = vmatpush1.msra.mxu0 0.0
    %2878 = vmatprep.subr.mxu0 0.0
    %2879 = vmatpush1.msra.mxu0 0.0
    %2880 = vmatprep.subr.mxu0 0.0
    %2881 = vmatpush1.msra.mxu0 0.0
    %2882 = vmatprep.subr.mxu0 0.0
    %2883 = vmatpush1.msra.mxu0 0.0
    %2884 = vmatprep.subr.mxu0 0.0
    %2885 = vmatpush1.msra.mxu0 %v2646
    %2886 = vmatprep.subr.mxu0 0.0
    %2887 = vmatpush1.msra.mxu0 %v2645
    %2888 = vmatprep.subr.mxu0 0.0
    %2889 = vmatpush1.msra.mxu0 %v2644
    %2890 = vmatprep.subr.mxu0 0.0
    %2891 = vmatpush1.msra.mxu0 %v2643
    %2892 = vmatprep.subr.mxu0 0.0
    %2893 = vmatpush2.msra.mxu0 0.0
    %2894 = vmatprep.subr.mxu0 0.0
    %2895 = vmatpush2.msra.mxu0 0.0
    %2896 = vmatprep.subr.mxu0 0.0
    %2897 = vmatpush2.msra.mxu0 0.0
    %2898 = vmatprep.subr.mxu0 0.0
    %2899 = vmatpush2.msra.mxu0 0.0
    %2900 = vmatprep.subr.mxu0 0.0
    %2901 = vmatpush2.msra.mxu0 0.0
    %2902 = vmatprep.subr.mxu0 0.0
    %2903 = vmatpush2.msra.mxu0 0.0
    %2904 = vmatprep.subr.mxu0 0.0
    %2905 = vmatpush2.msra.mxu0 0.0
    %2906 = vmatprep.subr.mxu0 0.0
    %2907 = vmatpush2.msra.mxu0 0.0
    %2908 = vmatprep.subr.mxu0 0.0
    %2909 = vmatpush2.msra.mxu0 0.0
    %2910 = vmatprep.subr.mxu0 0.0
    %2911 = vmatpush2.msra.mxu0 0.0
    %2912 = vmatprep.subr.mxu0 0.0
    %2913 = vmatpush2.msra.mxu0 0.0
    %2914 = vmatprep.subr.mxu0 0.0
    %2915 = vmatpush2.msra.mxu0 0.0
    %2916 = vmatprep.subr.mxu0 0.0
    %2917 = vmatpush2.msra.mxu0 0.0
    %2918 = vmatprep.subr.mxu0 0.0
    %2919 = vmatpush2.msra.mxu0 0.0
    %2920 = vmatprep.subr.mxu0 0.0
    %2921 = vmatpush2.msra.mxu0 0.0
    %2922 = vmatprep.subr.mxu0 0.0
    %2923 = vmatpush2.msra.mxu0 0.0
    %2924 = vmatprep.mubr.f32.mxu0 0.0
    %2925 = vmatmul.mubr.f32.gmra.mxu0 %v2648
    %v2926 = vpop.f32.mrf.mxu0
    %v2927 = vadd.f32 0.0, %v2926
    %v2928 = vpop.f32.mrf.mxu0
    %2929 = vdwg.mxu0
    %v2930 = vmul.f32 %v2717, 0.35355338
    %v2931 = vmul.f32 %v2787, 0.35355338
    %v2932 = vmul.f32 %v2857, 0.35355338
    %v2933 = vmul.f32 %v2927, 0.35355338
    %s2934 = scalar_lea.vmem %s9, 128
    %v2935 = vld [vmem:[%s2934] sm:$0xff]
    %v2936 = vld [vmem:[%s2934 + $0x8] sm:$0xff]
    %v2937 = vld [vmem:[%s2934 + $0x10] sm:$0xff]
    %v2938 = vld [vmem:[%s2934 + $0x18] sm:$0xff]
    %v2939 = vld [vmem:[%s2934 + $0x20] sm:$0xff]
    %v2940 = vld [vmem:[%s2934 + $0x28] sm:$0xff]
    %v2941 = vld [vmem:[%s2934 + $0x30] sm:$0xff]
    %v2942 = vld [vmem:[%s2934 + $0x38] sm:$0xff]
    %v2943 = vld [vmem:[%s2934 + $0x40] sm:$0xff]
    %v2944 = vld [vmem:[%s2934 + $0x48] sm:$0xff]
    %v2945 = vld [vmem:[%s2934 + $0x50] sm:$0xff]
    %v2946 = vld [vmem:[%s2934 + $0x58] sm:$0xff]
    %v2947 = vld [vmem:[%s2934 + $0x60] sm:$0xff]
    %v2948 = vld [vmem:[%s2934 + $0x68] sm:$0xff]
    %v2949 = vld [vmem:[%s2934 + $0x70] sm:$0xff]
    %v2950 = vld [vmem:[%s2934 + $0x78] sm:$0xff]
    %2951 = vmatprep.subr.mxu0 0.0
    %2952 = vmatpush1.msra.mxu0 0.0
    %2953 = vmatprep.subr.mxu0 0.0
    %2954 = vmatpush1.msra.mxu0 0.0
    %2955 = vmatprep.subr.mxu0 0.0
    %2956 = vmatpush1.msra.mxu0 0.0
    %2957 = vmatprep.subr.mxu0 0.0
    %2958 = vmatpush1.msra.mxu0 0.0
    %2959 = vmatprep.subr.mxu0 0.0
    %2960 = vmatpush1.msra.mxu0 0.0
    %2961 = vmatprep.subr.mxu0 0.0
    %2962 = vmatpush1.msra.mxu0 0.0
    %2963 = vmatprep.subr.mxu0 0.0
    %2964 = vmatpush1.msra.mxu0 0.0
    %2965 = vmatprep.subr.mxu0 0.0
    %2966 = vmatpush1.msra.mxu0 0.0
    %2967 = vmatprep.subr.mxu0 0.0
    %2968 = vmatpush1.msra.mxu0 0.0
    %2969 = vmatprep.subr.mxu0 0.0
    %2970 = vmatpush1.msra.mxu0 0.0
    %2971 = vmatprep.subr.mxu0 0.0
    %2972 = vmatpush1.msra.mxu0 0.0
    %2973 = vmatprep.subr.mxu0 0.0
    %2974 = vmatpush1.msra.mxu0 0.0
    %2975 = vmatprep.subr.mxu0 0.0
    %2976 = vmatpush1.msra.mxu0 %v2938
    %2977 = vmatprep.subr.mxu0 0.0
    %2978 = vmatpush1.msra.mxu0 %v2937
    %2979 = vmatprep.subr.mxu0 0.0
    %2980 = vmatpush1.msra.mxu0 %v2936
    %2981 = vmatprep.subr.mxu0 0.0
    %2982 = vmatpush1.msra.mxu0 %v2935
    %2983 = vmatprep.subr.mxu0 0.0
    %2984 = vmatpush2.msra.mxu0 0.0
    %2985 = vmatprep.subr.mxu0 0.0
    %2986 = vmatpush2.msra.mxu0 0.0
    %2987 = vmatprep.subr.mxu0 0.0
    %2988 = vmatpush2.msra.mxu0 0.0
    %2989 = vmatprep.subr.mxu0 0.0
    %2990 = vmatpush2.msra.mxu0 0.0
    %2991 = vmatprep.subr.mxu0 0.0
    %2992 = vmatpush2.msra.mxu0 0.0
    %2993 = vmatprep.subr.mxu0 0.0
    %2994 = vmatpush2.msra.mxu0 0.0
    %2995 = vmatprep.subr.mxu0 0.0
    %2996 = vmatpush2.msra.mxu0 0.0
    %2997 = vmatprep.subr.mxu0 0.0
    %2998 = vmatpush2.msra.mxu0 0.0
    %2999 = vmatprep.subr.mxu0 0.0
    %3000 = vmatpush2.msra.mxu0 0.0
    %3001 = vmatprep.subr.mxu0 0.0
    %3002 = vmatpush2.msra.mxu0 0.0
    %3003 = vmatprep.subr.mxu0 0.0
    %3004 = vmatpush2.msra.mxu0 0.0
    %3005 = vmatprep.subr.mxu0 0.0
    %3006 = vmatpush2.msra.mxu0 0.0
    %3007 = vmatprep.subr.mxu0 0.0
    %3008 = vmatpush2.msra.mxu0 0.0
    %3009 = vmatprep.subr.mxu0 0.0
    %3010 = vmatpush2.msra.mxu0 0.0
    %3011 = vmatprep.subr.mxu0 0.0
    %3012 = vmatpush2.msra.mxu0 0.0
    %3013 = vmatprep.subr.mxu0 0.0
    %3014 = vmatpush2.msra.mxu0 0.0
    %3015 = vmatprep.mubr.f32.mxu0 0.0
    %3016 = vmatmul.mubr.f32.gmra.mxu0 %v2648
    %v3017 = vpop.f32.mrf.mxu0
    %v3018 = vadd.f32 0.0, %v3017
    %v3019 = vpop.f32.mrf.mxu0
    %3020 = vdwg.mxu0
    %3021 = vmatprep.subr.mxu0 0.0
    %3022 = vmatpush1.msra.mxu0 0.0
    %3023 = vmatprep.subr.mxu0 0.0
    %3024 = vmatpush1.msra.mxu0 0.0
    %3025 = vmatprep.subr.mxu0 0.0
    %3026 = vmatpush1.msra.mxu0 0.0
    %3027 = vmatprep.subr.mxu0 0.0
    %3028 = vmatpush1.msra.mxu0 0.0
    %3029 = vmatprep.subr.mxu0 0.0
    %3030 = vmatpush1.msra.mxu0 0.0
    %3031 = vmatprep.subr.mxu0 0.0
    %3032 = vmatpush1.msra.mxu0 0.0
    %3033 = vmatprep.subr.mxu0 0.0
    %3034 = vmatpush1.msra.mxu0 0.0
    %3035 = vmatprep.subr.mxu0 0.0
    %3036 = vmatpush1.msra.mxu0 0.0
    %3037 = vmatprep.subr.mxu0 0.0
    %3038 = vmatpush1.msra.mxu0 0.0
    %3039 = vmatprep.subr.mxu0 0.0
    %3040 = vmatpush1.msra.mxu0 0.0
    %3041 = vmatprep.subr.mxu0 0.0
    %3042 = vmatpush1.msra.mxu0 0.0
    %3043 = vmatprep.subr.mxu0 0.0
    %3044 = vmatpush1.msra.mxu0 0.0
    %3045 = vmatprep.subr.mxu0 0.0
    %3046 = vmatpush1.msra.mxu0 %v2942
    %3047 = vmatprep.subr.mxu0 0.0
    %3048 = vmatpush1.msra.mxu0 %v2941
    %3049 = vmatprep.subr.mxu0 0.0
    %3050 = vmatpush1.msra.mxu0 %v2940
    %3051 = vmatprep.subr.mxu0 0.0
    %3052 = vmatpush1.msra.mxu0 %v2939
    %3053 = vmatprep.subr.mxu0 0.0
    %3054 = vmatpush2.msra.mxu0 0.0
    %3055 = vmatprep.subr.mxu0 0.0
    %3056 = vmatpush2.msra.mxu0 0.0
    %3057 = vmatprep.subr.mxu0 0.0
    %3058 = vmatpush2.msra.mxu0 0.0
    %3059 = vmatprep.subr.mxu0 0.0
    %3060 = vmatpush2.msra.mxu0 0.0
    %3061 = vmatprep.subr.mxu0 0.0
    %3062 = vmatpush2.msra.mxu0 0.0
    %3063 = vmatprep.subr.mxu0 0.0
    %3064 = vmatpush2.msra.mxu0 0.0
    %3065 = vmatprep.subr.mxu0 0.0
    %3066 = vmatpush2.msra.mxu0 0.0
    %3067 = vmatprep.subr.mxu0 0.0
    %3068 = vmatpush2.msra.mxu0 0.0
    %3069 = vmatprep.subr.mxu0 0.0
    %3070 = vmatpush2.msra.mxu0 0.0
    %3071 = vmatprep.subr.mxu0 0.0
    %3072 = vmatpush2.msra.mxu0 0.0
    %3073 = vmatprep.subr.mxu0 0.0
    %3074 = vmatpush2.msra.mxu0 0.0
    %3075 = vmatprep.subr.mxu0 0.0
    %3076 = vmatpush2.msra.mxu0 0.0
    %3077 = vmatprep.subr.mxu0 0.0
    %3078 = vmatpush2.msra.mxu0 0.0
    %3079 = vmatprep.subr.mxu0 0.0
    %3080 = vmatpush2.msra.mxu0 0.0
    %3081 = vmatprep.subr.mxu0 0.0
    %3082 = vmatpush2.msra.mxu0 0.0
    %3083 = vmatprep.subr.mxu0 0.0
    %3084 = vmatpush2.msra.mxu0 0.0
    %3085 = vmatprep.mubr.f32.mxu0 0.0
    %3086 = vmatmul.mubr.f32.gmra.mxu0 %v2648
    %v3087 = vpop.f32.mrf.mxu0
    %v3088 = vadd.f32 0.0, %v3087
    %v3089 = vpop.f32.mrf.mxu0
    %3090 = vdwg.mxu0
    %3091 = vmatprep.subr.mxu0 0.0
    %3092 = vmatpush1.msra.mxu0 0.0
    %3093 = vmatprep.subr.mxu0 0.0
    %3094 = vmatpush1.msra.mxu0 0.0
    %3095 = vmatprep.subr.mxu0 0.0
    %3096 = vmatpush1.msra.mxu0 0.0
    %3097 = vmatprep.subr.mxu0 0.0
    %3098 = vmatpush1.msra.mxu0 0.0
    %3099 = vmatprep.subr.mxu0 0.0
    %3100 = vmatpush1.msra.mxu0 0.0
    %3101 = vmatprep.subr.mxu0 0.0
    %3102 = vmatpush1.msra.mxu0 0.0
    %3103 = vmatprep.subr.mxu0 0.0
    %3104 = vmatpush1.msra.mxu0 0.0
    %3105 = vmatprep.subr.mxu0 0.0
    %3106 = vmatpush1.msra.mxu0 0.0
    %3107 = vmatprep.subr.mxu0 0.0
    %3108 = vmatpush1.msra.mxu0 0.0
    %3109 = vmatprep.subr.mxu0 0.0
    %3110 = vmatpush1.msra.mxu0 0.0
    %3111 = vmatprep.subr.mxu0 0.0
    %3112 = vmatpush1.msra.mxu0 0.0
    %3113 = vmatprep.subr.mxu0 0.0
    %3114 = vmatpush1.msra.mxu0 0.0
    %3115 = vmatprep.subr.mxu0 0.0
    %3116 = vmatpush1.msra.mxu0 %v2946
    %3117 = vmatprep.subr.mxu0 0.0
    %3118 = vmatpush1.msra.mxu0 %v2945
    %3119 = vmatprep.subr.mxu0 0.0
    %3120 = vmatpush1.msra.mxu0 %v2944
    %3121 = vmatprep.subr.mxu0 0.0
    %3122 = vmatpush1.msra.mxu0 %v2943
    %3123 = vmatprep.subr.mxu0 0.0
    %3124 = vmatpush2.msra.mxu0 0.0
    %3125 = vmatprep.subr.mxu0 0.0
    %3126 = vmatpush2.msra.mxu0 0.0
    %3127 = vmatprep.subr.mxu0 0.0
    %3128 = vmatpush2.msra.mxu0 0.0
    %3129 = vmatprep.subr.mxu0 0.0
    %3130 = vmatpush2.msra.mxu0 0.0
    %3131 = vmatprep.subr.mxu0 0.0
    %3132 = vmatpush2.msra.mxu0 0.0
    %3133 = vmatprep.subr.mxu0 0.0
    %3134 = vmatpush2.msra.mxu0 0.0
    %3135 = vmatprep.subr.mxu0 0.0
    %3136 = vmatpush2.msra.mxu0 0.0
    %3137 = vmatprep.subr.mxu0 0.0
    %3138 = vmatpush2.msra.mxu0 0.0
    %3139 = vmatprep.subr.mxu0 0.0
    %3140 = vmatpush2.msra.mxu0 0.0
    %3141 = vmatprep.subr.mxu0 0.0
    %3142 = vmatpush2.msra.mxu0 0.0
    %3143 = vmatprep.subr.mxu0 0.0
    %3144 = vmatpush2.msra.mxu0 0.0
    %3145 = vmatprep.subr.mxu0 0.0
    %3146 = vmatpush2.msra.mxu0 0.0
    %3147 = vmatprep.subr.mxu0 0.0
    %3148 = vmatpush2.msra.mxu0 0.0
    %3149 = vmatprep.subr.mxu0 0.0
    %3150 = vmatpush2.msra.mxu0 0.0
    %3151 = vmatprep.subr.mxu0 0.0
    %3152 = vmatpush2.msra.mxu0 0.0
    %3153 = vmatprep.subr.mxu0 0.0
    %3154 = vmatpush2.msra.mxu0 0.0
    %3155 = vmatprep.mubr.f32.mxu0 0.0
    %3156 = vmatmul.mubr.f32.gmra.mxu0 %v2648
    %v3157 = vpop.f32.mrf.mxu0
    %v3158 = vadd.f32 0.0, %v3157
    %v3159 = vpop.f32.mrf.mxu0
    %3160 = vdwg.mxu0
    %3161 = vmatprep.subr.mxu0 0.0
    %3162 = vmatpush1.msra.mxu0 0.0
    %3163 = vmatprep.subr.mxu0 0.0
    %3164 = vmatpush1.msra.mxu0 0.0
    %3165 = vmatprep.subr.mxu0 0.0
    %3166 = vmatpush1.msra.mxu0 0.0
    %3167 = vmatprep.subr.mxu0 0.0
    %3168 = vmatpush1.msra.mxu0 0.0
    %3169 = vmatprep.subr.mxu0 0.0
    %3170 = vmatpush1.msra.mxu0 0.0
    %3171 = vmatprep.subr.mxu0 0.0
    %3172 = vmatpush1.msra.mxu0 0.0
    %3173 = vmatprep.subr.mxu0 0.0
    %3174 = vmatpush1.msra.mxu0 0.0
    %3175 = vmatprep.subr.mxu0 0.0
    %3176 = vmatpush1.msra.mxu0 0.0
    %3177 = vmatprep.subr.mxu0 0.0
    %3178 = vmatpush1.msra.mxu0 0.0
    %3179 = vmatprep.subr.mxu0 0.0
    %3180 = vmatpush1.msra.mxu0 0.0
    %3181 = vmatprep.subr.mxu0 0.0
    %3182 = vmatpush1.msra.mxu0 0.0
    %3183 = vmatprep.subr.mxu0 0.0
    %3184 = vmatpush1.msra.mxu0 0.0
    %3185 = vmatprep.subr.mxu0 0.0
    %3186 = vmatpush1.msra.mxu0 %v2950
    %3187 = vmatprep.subr.mxu0 0.0
    %3188 = vmatpush1.msra.mxu0 %v2949
    %3189 = vmatprep.subr.mxu0 0.0
    %3190 = vmatpush1.msra.mxu0 %v2948
    %3191 = vmatprep.subr.mxu0 0.0
    %3192 = vmatpush1.msra.mxu0 %v2947
    %3193 = vmatprep.subr.mxu0 0.0
    %3194 = vmatpush2.msra.mxu0 0.0
    %3195 = vmatprep.subr.mxu0 0.0
    %3196 = vmatpush2.msra.mxu0 0.0
    %3197 = vmatprep.subr.mxu0 0.0
    %3198 = vmatpush2.msra.mxu0 0.0
    %3199 = vmatprep.subr.mxu0 0.0
    %3200 = vmatpush2.msra.mxu0 0.0
    %3201 = vmatprep.subr.mxu0 0.0
    %3202 = vmatpush2.msra.mxu0 0.0
    %3203 = vmatprep.subr.mxu0 0.0
    %3204 = vmatpush2.msra.mxu0 0.0
    %3205 = vmatprep.subr.mxu0 0.0
    %3206 = vmatpush2.msra.mxu0 0.0
    %3207 = vmatprep.subr.mxu0 0.0
    %3208 = vmatpush2.msra.mxu0 0.0
    %3209 = vmatprep.subr.mxu0 0.0
    %3210 = vmatpush2.msra.mxu0 0.0
    %3211 = vmatprep.subr.mxu0 0.0
    %3212 = vmatpush2.msra.mxu0 0.0
    %3213 = vmatprep.subr.mxu0 0.0
    %3214 = vmatpush2.msra.mxu0 0.0
    %3215 = vmatprep.subr.mxu0 0.0
    %3216 = vmatpush2.msra.mxu0 0.0
    %3217 = vmatprep.subr.mxu0 0.0
    %3218 = vmatpush2.msra.mxu0 0.0
    %3219 = vmatprep.subr.mxu0 0.0
    %3220 = vmatpush2.msra.mxu0 0.0
    %3221 = vmatprep.subr.mxu0 0.0
    %3222 = vmatpush2.msra.mxu0 0.0
    %3223 = vmatprep.subr.mxu0 0.0
    %3224 = vmatpush2.msra.mxu0 0.0
    %3225 = vmatprep.mubr.f32.mxu0 0.0
    %3226 = vmatmul.mubr.f32.gmra.mxu0 %v2648
    %v3227 = vpop.f32.mrf.mxu0
    %v3228 = vadd.f32 0.0, %v3227
    %v3229 = vpop.f32.mrf.mxu0
    %3230 = vdwg.mxu0
    %s3231 = scalar_lea.vmem %s10, 128
    %v3232 = vld [vmem:[%s3231] sm:$0xff]
    %v3233 = vld [vmem:[%s3231 + $0x8] sm:$0xff]
    %v3234 = vld [vmem:[%s3231 + $0x10] sm:$0xff]
    %v3235 = vld [vmem:[%s3231 + $0x18] sm:$0xff]
    %v3236 = vld [vmem:[%s3231 + $0x20] sm:$0xff]
    %v3237 = vld [vmem:[%s3231 + $0x28] sm:$0xff]
    %v3238 = vld [vmem:[%s3231 + $0x30] sm:$0xff]
    %v3239 = vld [vmem:[%s3231 + $0x38] sm:$0xff]
    %v3240 = vld [vmem:[%s3231 + $0x40] sm:$0xff]
    %v3241 = vld [vmem:[%s3231 + $0x48] sm:$0xff]
    %v3242 = vld [vmem:[%s3231 + $0x50] sm:$0xff]
    %v3243 = vld [vmem:[%s3231 + $0x58] sm:$0xff]
    %v3244 = vld [vmem:[%s3231 + $0x60] sm:$0xff]
    %v3245 = vld [vmem:[%s3231 + $0x68] sm:$0xff]
    %v3246 = vld [vmem:[%s3231 + $0x70] sm:$0xff]
    %v3247 = vld [vmem:[%s3231 + $0x78] sm:$0xff]
    %3248 = vmatprep.subr.mxu0 0.0
    %3249 = vmatpush1.msra.mxu0 0.0
    %3250 = vmatprep.subr.mxu0 0.0
    %3251 = vmatpush1.msra.mxu0 0.0
    %3252 = vmatprep.subr.mxu0 0.0
    %3253 = vmatpush1.msra.mxu0 0.0
    %3254 = vmatprep.subr.mxu0 0.0
    %3255 = vmatpush1.msra.mxu0 0.0
    %3256 = vmatprep.subr.mxu0 0.0
    %3257 = vmatpush1.msra.mxu0 0.0
    %3258 = vmatprep.subr.mxu0 0.0
    %3259 = vmatpush1.msra.mxu0 0.0
    %3260 = vmatprep.subr.mxu0 0.0
    %3261 = vmatpush1.msra.mxu0 0.0
    %3262 = vmatprep.subr.mxu0 0.0
    %3263 = vmatpush1.msra.mxu0 0.0
    %3264 = vmatprep.subr.mxu0 0.0
    %3265 = vmatpush1.msra.mxu0 0.0
    %3266 = vmatprep.subr.mxu0 0.0
    %3267 = vmatpush1.msra.mxu0 0.0
    %3268 = vmatprep.subr.mxu0 0.0
    %3269 = vmatpush1.msra.mxu0 0.0
    %3270 = vmatprep.subr.mxu0 0.0
    %3271 = vmatpush1.msra.mxu0 0.0
    %3272 = vmatprep.subr.mxu0 0.0
    %3273 = vmatpush1.msra.mxu0 %v3235
    %3274 = vmatprep.subr.mxu0 0.0
    %3275 = vmatpush1.msra.mxu0 %v3234
    %3276 = vmatprep.subr.mxu0 0.0
    %3277 = vmatpush1.msra.mxu0 %v3233
    %3278 = vmatprep.subr.mxu0 0.0
    %3279 = vmatpush1.msra.mxu0 %v3232
    %3280 = vmatprep.subr.mxu0 0.0
    %3281 = vmatpush2.msra.mxu0 0.0
    %3282 = vmatprep.subr.mxu0 0.0
    %3283 = vmatpush2.msra.mxu0 0.0
    %3284 = vmatprep.subr.mxu0 0.0
    %3285 = vmatpush2.msra.mxu0 0.0
    %3286 = vmatprep.subr.mxu0 0.0
    %3287 = vmatpush2.msra.mxu0 0.0
    %3288 = vmatprep.subr.mxu0 0.0
    %3289 = vmatpush2.msra.mxu0 0.0
    %3290 = vmatprep.subr.mxu0 0.0
    %3291 = vmatpush2.msra.mxu0 0.0
    %3292 = vmatprep.subr.mxu0 0.0
    %3293 = vmatpush2.msra.mxu0 0.0
    %3294 = vmatprep.subr.mxu0 0.0
    %3295 = vmatpush2.msra.mxu0 0.0
    %3296 = vmatprep.subr.mxu0 0.0
    %3297 = vmatpush2.msra.mxu0 0.0
    %3298 = vmatprep.subr.mxu0 0.0
    %3299 = vmatpush2.msra.mxu0 0.0
    %3300 = vmatprep.subr.mxu0 0.0
    %3301 = vmatpush2.msra.mxu0 0.0
    %3302 = vmatprep.subr.mxu0 0.0
    %3303 = vmatpush2.msra.mxu0 0.0
    %3304 = vmatprep.subr.mxu0 0.0
    %3305 = vmatpush2.msra.mxu0 0.0
    %3306 = vmatprep.subr.mxu0 0.0
    %3307 = vmatpush2.msra.mxu0 0.0
    %3308 = vmatprep.subr.mxu0 0.0
    %3309 = vmatpush2.msra.mxu0 0.0
    %3310 = vmatprep.subr.mxu0 0.0
    %3311 = vmatpush2.msra.mxu0 0.0
    %3312 = vmatprep.mubr.f32.mxu0 0.0
    %3313 = vmatmul.mubr.f32.gmra.mxu0 %v2648
    %v3314 = vpop.f32.mrf.mxu0
    %v3315 = vadd.f32 0.0, %v3314
    %v3316 = vpop.f32.mrf.mxu0
    %3317 = vdwg.mxu0
    %3318 = vmatprep.subr.mxu0 0.0
    %3319 = vmatpush1.msra.mxu0 0.0
    %3320 = vmatprep.subr.mxu0 0.0
    %3321 = vmatpush1.msra.mxu0 0.0
    %3322 = vmatprep.subr.mxu0 0.0
    %3323 = vmatpush1.msra.mxu0 0.0
    %3324 = vmatprep.subr.mxu0 0.0
    %3325 = vmatpush1.msra.mxu0 0.0
    %3326 = vmatprep.subr.mxu0 0.0
    %3327 = vmatpush1.msra.mxu0 0.0
    %3328 = vmatprep.subr.mxu0 0.0
    %3329 = vmatpush1.msra.mxu0 0.0
    %3330 = vmatprep.subr.mxu0 0.0
    %3331 = vmatpush1.msra.mxu0 0.0
    %3332 = vmatprep.subr.mxu0 0.0
    %3333 = vmatpush1.msra.mxu0 0.0
    %3334 = vmatprep.subr.mxu0 0.0
    %3335 = vmatpush1.msra.mxu0 0.0
    %3336 = vmatprep.subr.mxu0 0.0
    %3337 = vmatpush1.msra.mxu0 0.0
    %3338 = vmatprep.subr.mxu0 0.0
    %3339 = vmatpush1.msra.mxu0 0.0
    %3340 = vmatprep.subr.mxu0 0.0
    %3341 = vmatpush1.msra.mxu0 0.0
    %3342 = vmatprep.subr.mxu0 0.0
    %3343 = vmatpush1.msra.mxu0 %v3239
    %3344 = vmatprep.subr.mxu0 0.0
    %3345 = vmatpush1.msra.mxu0 %v3238
    %3346 = vmatprep.subr.mxu0 0.0
    %3347 = vmatpush1.msra.mxu0 %v3237
    %3348 = vmatprep.subr.mxu0 0.0
    %3349 = vmatpush1.msra.mxu0 %v3236
    %3350 = vmatprep.subr.mxu0 0.0
    %3351 = vmatpush2.msra.mxu0 0.0
    %3352 = vmatprep.subr.mxu0 0.0
    %3353 = vmatpush2.msra.mxu0 0.0
    %3354 = vmatprep.subr.mxu0 0.0
    %3355 = vmatpush2.msra.mxu0 0.0
    %3356 = vmatprep.subr.mxu0 0.0
    %3357 = vmatpush2.msra.mxu0 0.0
    %3358 = vmatprep.subr.mxu0 0.0
    %3359 = vmatpush2.msra.mxu0 0.0
    %3360 = vmatprep.subr.mxu0 0.0
    %3361 = vmatpush2.msra.mxu0 0.0
    %3362 = vmatprep.subr.mxu0 0.0
    %3363 = vmatpush2.msra.mxu0 0.0
    %3364 = vmatprep.subr.mxu0 0.0
    %3365 = vmatpush2.msra.mxu0 0.0
    %3366 = vmatprep.subr.mxu0 0.0
    %3367 = vmatpush2.msra.mxu0 0.0
    %3368 = vmatprep.subr.mxu0 0.0
    %3369 = vmatpush2.msra.mxu0 0.0
    %3370 = vmatprep.subr.mxu0 0.0
    %3371 = vmatpush2.msra.mxu0 0.0
    %3372 = vmatprep.subr.mxu0 0.0
    %3373 = vmatpush2.msra.mxu0 0.0
    %3374 = vmatprep.subr.mxu0 0.0
    %3375 = vmatpush2.msra.mxu0 0.0
    %3376 = vmatprep.subr.mxu0 0.0
    %3377 = vmatpush2.msra.mxu0 0.0
    %3378 = vmatprep.subr.mxu0 0.0
    %3379 = vmatpush2.msra.mxu0 0.0
    %3380 = vmatprep.subr.mxu0 0.0
    %3381 = vmatpush2.msra.mxu0 0.0
    %3382 = vmatprep.mubr.f32.mxu0 0.0
    %3383 = vmatmul.mubr.f32.gmra.mxu0 %v2648
    %v3384 = vpop.f32.mrf.mxu0
    %v3385 = vadd.f32 0.0, %v3384
    %v3386 = vpop.f32.mrf.mxu0
    %3387 = vdwg.mxu0
    %3388 = vmatprep.subr.mxu0 0.0
    %3389 = vmatpush1.msra.mxu0 0.0
    %3390 = vmatprep.subr.mxu0 0.0
    %3391 = vmatpush1.msra.mxu0 0.0
    %3392 = vmatprep.subr.mxu0 0.0
    %3393 = vmatpush1.msra.mxu0 0.0
    %3394 = vmatprep.subr.mxu0 0.0
    %3395 = vmatpush1.msra.mxu0 0.0
    %3396 = vmatprep.subr.mxu0 0.0
    %3397 = vmatpush1.msra.mxu0 0.0
    %3398 = vmatprep.subr.mxu0 0.0
    %3399 = vmatpush1.msra.mxu0 0.0
    %3400 = vmatprep.subr.mxu0 0.0
    %3401 = vmatpush1.msra.mxu0 0.0
    %3402 = vmatprep.subr.mxu0 0.0
    %3403 = vmatpush1.msra.mxu0 0.0
    %3404 = vmatprep.subr.mxu0 0.0
    %3405 = vmatpush1.msra.mxu0 0.0
    %3406 = vmatprep.subr.mxu0 0.0
    %3407 = vmatpush1.msra.mxu0 0.0
    %3408 = vmatprep.subr.mxu0 0.0
    %3409 = vmatpush1.msra.mxu0 0.0
    %3410 = vmatprep.subr.mxu0 0.0
    %3411 = vmatpush1.msra.mxu0 0.0
    %3412 = vmatprep.subr.mxu0 0.0
    %3413 = vmatpush1.msra.mxu0 %v3243
    %3414 = vmatprep.subr.mxu0 0.0
    %3415 = vmatpush1.msra.mxu0 %v3242
    %3416 = vmatprep.subr.mxu0 0.0
    %3417 = vmatpush1.msra.mxu0 %v3241
    %3418 = vmatprep.subr.mxu0 0.0
    %3419 = vmatpush1.msra.mxu0 %v3240
    %3420 = vmatprep.subr.mxu0 0.0
    %3421 = vmatpush2.msra.mxu0 0.0
    %3422 = vmatprep.subr.mxu0 0.0
    %3423 = vmatpush2.msra.mxu0 0.0
    %3424 = vmatprep.subr.mxu0 0.0
    %3425 = vmatpush2.msra.mxu0 0.0
    %3426 = vmatprep.subr.mxu0 0.0
    %3427 = vmatpush2.msra.mxu0 0.0
    %3428 = vmatprep.subr.mxu0 0.0
    %3429 = vmatpush2.msra.mxu0 0.0
    %3430 = vmatprep.subr.mxu0 0.0
    %3431 = vmatpush2.msra.mxu0 0.0
    %3432 = vmatprep.subr.mxu0 0.0
    %3433 = vmatpush2.msra.mxu0 0.0
    %3434 = vmatprep.subr.mxu0 0.0
    %3435 = vmatpush2.msra.mxu0 0.0
    %3436 = vmatprep.subr.mxu0 0.0
    %3437 = vmatpush2.msra.mxu0 0.0
    %3438 = vmatprep.subr.mxu0 0.0
    %3439 = vmatpush2.msra.mxu0 0.0
    %3440 = vmatprep.subr.mxu0 0.0
    %3441 = vmatpush2.msra.mxu0 0.0
    %3442 = vmatprep.subr.mxu0 0.0
    %3443 = vmatpush2.msra.mxu0 0.0
    %3444 = vmatprep.subr.mxu0 0.0
    %3445 = vmatpush2.msra.mxu0 0.0
    %3446 = vmatprep.subr.mxu0 0.0
    %3447 = vmatpush2.msra.mxu0 0.0
    %3448 = vmatprep.subr.mxu0 0.0
    %3449 = vmatpush2.msra.mxu0 0.0
    %3450 = vmatprep.subr.mxu0 0.0
    %3451 = vmatpush2.msra.mxu0 0.0
    %3452 = vmatprep.mubr.f32.mxu0 0.0
    %3453 = vmatmul.mubr.f32.gmra.mxu0 %v2648
    %v3454 = vpop.f32.mrf.mxu0
    %v3455 = vadd.f32 0.0, %v3454
    %v3456 = vpop.f32.mrf.mxu0
    %3457 = vdwg.mxu0
    %3458 = vmatprep.subr.mxu0 0.0
    %3459 = vmatpush1.msra.mxu0 0.0
    %3460 = vmatprep.subr.mxu0 0.0
    %3461 = vmatpush1.msra.mxu0 0.0
    %3462 = vmatprep.subr.mxu0 0.0
    %3463 = vmatpush1.msra.mxu0 0.0
    %3464 = vmatprep.subr.mxu0 0.0
    %3465 = vmatpush1.msra.mxu0 0.0
    %3466 = vmatprep.subr.mxu0 0.0
    %3467 = vmatpush1.msra.mxu0 0.0
    %3468 = vmatprep.subr.mxu0 0.0
    %3469 = vmatpush1.msra.mxu0 0.0
    %3470 = vmatprep.subr.mxu0 0.0
    %3471 = vmatpush1.msra.mxu0 0.0
    %3472 = vmatprep.subr.mxu0 0.0
    %3473 = vmatpush1.msra.mxu0 0.0
    %3474 = vmatprep.subr.mxu0 0.0
    %3475 = vmatpush1.msra.mxu0 0.0
    %3476 = vmatprep.subr.mxu0 0.0
    %3477 = vmatpush1.msra.mxu0 0.0
    %3478 = vmatprep.subr.mxu0 0.0
    %3479 = vmatpush1.msra.mxu0 0.0
    %3480 = vmatprep.subr.mxu0 0.0
    %3481 = vmatpush1.msra.mxu0 0.0
    %3482 = vmatprep.subr.mxu0 0.0
    %3483 = vmatpush1.msra.mxu0 %v3247
    %3484 = vmatprep.subr.mxu0 0.0
    %3485 = vmatpush1.msra.mxu0 %v3246
    %3486 = vmatprep.subr.mxu0 0.0
    %3487 = vmatpush1.msra.mxu0 %v3245
    %3488 = vmatprep.subr.mxu0 0.0
    %3489 = vmatpush1.msra.mxu0 %v3244
    %3490 = vmatprep.subr.mxu0 0.0
    %3491 = vmatpush2.msra.mxu0 0.0
    %3492 = vmatprep.subr.mxu0 0.0
    %3493 = vmatpush2.msra.mxu0 0.0
    %3494 = vmatprep.subr.mxu0 0.0
    %3495 = vmatpush2.msra.mxu0 0.0
    %3496 = vmatprep.subr.mxu0 0.0
    %3497 = vmatpush2.msra.mxu0 0.0
    %3498 = vmatprep.subr.mxu0 0.0
    %3499 = vmatpush2.msra.mxu0 0.0
    %3500 = vmatprep.subr.mxu0 0.0
    %3501 = vmatpush2.msra.mxu0 0.0
    %3502 = vmatprep.subr.mxu0 0.0
    %3503 = vmatpush2.msra.mxu0 0.0
    %3504 = vmatprep.subr.mxu0 0.0
    %3505 = vmatpush2.msra.mxu0 0.0
    %3506 = vmatprep.subr.mxu0 0.0
    %3507 = vmatpush2.msra.mxu0 0.0
    %3508 = vmatprep.subr.mxu0 0.0
    %3509 = vmatpush2.msra.mxu0 0.0
    %3510 = vmatprep.subr.mxu0 0.0
    %3511 = vmatpush2.msra.mxu0 0.0
    %3512 = vmatprep.subr.mxu0 0.0
    %3513 = vmatpush2.msra.mxu0 0.0
    %3514 = vmatprep.subr.mxu0 0.0
    %3515 = vmatpush2.msra.mxu0 0.0
    %3516 = vmatprep.subr.mxu0 0.0
    %3517 = vmatpush2.msra.mxu0 0.0
    %3518 = vmatprep.subr.mxu0 0.0
    %3519 = vmatpush2.msra.mxu0 0.0
    %3520 = vmatprep.subr.mxu0 0.0
    %3521 = vmatpush2.msra.mxu0 0.0
    %3522 = vmatprep.mubr.f32.mxu0 0.0
    %3523 = vmatmul.mubr.f32.gmra.mxu0 %v2648
    %v3524 = vpop.f32.mrf.mxu0
    %v3525 = vadd.f32 0.0, %v3524
    %v3526 = vpop.f32.mrf.mxu0
    %3527 = vdwg.mxu0
    %v3529 = vsel %vm1412, %v2930, 0
    %v3532 = vsel %vm1412, %v3018, 0
    %3534 = vmatprep.subr.mxu0 0.0
    %3535 = vmatpush1.xpose.msra.mxu0 0.0
    %3536 = vmatprep.subr.mxu0 0.0
    %3537 = vmatpush1.xpose.msra.mxu0 0.0
    %3538 = vmatprep.subr.mxu0 0.0
    %3539 = vmatpush1.xpose.msra.mxu0 0.0
    %3540 = vmatprep.subr.mxu0 0.0
    %3541 = vmatpush1.xpose.msra.mxu0 0.0
    %3542 = vmatprep.subr.mxu0 0.0
    %3543 = vmatpush1.xpose.msra.mxu0 0.0
    %3544 = vmatprep.subr.mxu0 0.0
    %3545 = vmatpush1.xpose.msra.mxu0 0.0
    %3546 = vmatprep.subr.mxu0 0.0
    %3547 = vmatpush1.xpose.msra.mxu0 0.0
    %3548 = vmatprep.subr.mxu0 0.0
    %3549 = vmatpush1.xpose.msra.mxu0 0.0
    %3550 = vmatprep.subr.mxu0 0.0
    %3551 = vmatpush1.xpose.msra.mxu0 0.0
    %3552 = vmatprep.subr.mxu0 0.0
    %3553 = vmatpush1.xpose.msra.mxu0 0.0
    %3554 = vmatprep.subr.mxu0 0.0
    %3555 = vmatpush1.xpose.msra.mxu0 0.0
    %3556 = vmatprep.subr.mxu0 0.0
    %3557 = vmatpush1.xpose.msra.mxu0 0.0
    %3558 = vmatprep.subr.mxu0 0.0
    %3559 = vmatpush1.xpose.msra.mxu0 0.0
    %3560 = vmatprep.subr.mxu0 0.0
    %3561 = vmatpush1.xpose.msra.mxu0 0.0
    %3562 = vmatprep.subr.mxu0 0.0
    %3563 = vmatpush1.xpose.msra.mxu0 0.0
    %3564 = vmatprep.subr.mxu0 0.0
    %3565 = vmatpush1.xpose.msra.mxu0 %v3532
    %3566 = vmatprep.subr.mxu0 0.0
    %3567 = vmatpush2.xpose.msra.mxu0 0.0
    %3568 = vmatprep.subr.mxu0 0.0
    %3569 = vmatpush2.xpose.msra.mxu0 0.0
    %3570 = vmatprep.subr.mxu0 0.0
    %3571 = vmatpush2.xpose.msra.mxu0 0.0
    %3572 = vmatprep.subr.mxu0 0.0
    %3573 = vmatpush2.xpose.msra.mxu0 0.0
    %3574 = vmatprep.subr.mxu0 0.0
    %3575 = vmatpush2.xpose.msra.mxu0 0.0
    %3576 = vmatprep.subr.mxu0 0.0
    %3577 = vmatpush2.xpose.msra.mxu0 0.0
    %3578 = vmatprep.subr.mxu0 0.0
    %3579 = vmatpush2.xpose.msra.mxu0 0.0
    %3580 = vmatprep.subr.mxu0 0.0
    %3581 = vmatpush2.xpose.msra.mxu0 0.0
    %3582 = vmatprep.subr.mxu0 0.0
    %3583 = vmatpush2.xpose.msra.mxu0 0.0
    %3584 = vmatprep.subr.mxu0 0.0
    %3585 = vmatpush2.xpose.msra.mxu0 0.0
    %3586 = vmatprep.subr.mxu0 0.0
    %3587 = vmatpush2.xpose.msra.mxu0 0.0
    %3588 = vmatprep.subr.mxu0 0.0
    %3589 = vmatpush2.xpose.msra.mxu0 0.0
    %3590 = vmatprep.subr.mxu0 0.0
    %3591 = vmatpush2.xpose.msra.mxu0 0.0
    %3592 = vmatprep.subr.mxu0 0.0
    %3593 = vmatpush2.xpose.msra.mxu0 0.0
    %3594 = vmatprep.subr.mxu0 0.0
    %3595 = vmatpush2.xpose.msra.mxu0 0.0
    %3596 = vmatprep.subr.mxu0 0.0
    %3597 = vmatpush2.xpose.msra.mxu0 0.0
    %3598 = vmatprep.mubr.f32.mxu0 0.0
    %3599 = vmatmul.mubr.f32.gmra.mxu0 %v3529
    %v3600 = vpop.f32.mrf.mxu0
    %v3601 = vadd.f32 %v486, %v3600
    %v3602 = vpop.f32.mrf.mxu0
    %3603 = vdwg.mxu0
    %v3605 = vsel %vm1412, %v2931, 0
    %v3608 = vsel %vm1412, %v3088, 0
    %3610 = vmatprep.subr.mxu0 0.0
    %3611 = vmatpush1.xpose.msra.mxu0 0.0
    %3612 = vmatprep.subr.mxu0 0.0
    %3613 = vmatpush1.xpose.msra.mxu0 0.0
    %3614 = vmatprep.subr.mxu0 0.0
    %3615 = vmatpush1.xpose.msra.mxu0 0.0
    %3616 = vmatprep.subr.mxu0 0.0
    %3617 = vmatpush1.xpose.msra.mxu0 0.0
    %3618 = vmatprep.subr.mxu0 0.0
    %3619 = vmatpush1.xpose.msra.mxu0 0.0
    %3620 = vmatprep.subr.mxu0 0.0
    %3621 = vmatpush1.xpose.msra.mxu0 0.0
    %3622 = vmatprep.subr.mxu0 0.0
    %3623 = vmatpush1.xpose.msra.mxu0 0.0
    %3624 = vmatprep.subr.mxu0 0.0
    %3625 = vmatpush1.xpose.msra.mxu0 0.0
    %3626 = vmatprep.subr.mxu0 0.0
    %3627 = vmatpush1.xpose.msra.mxu0 0.0
    %3628 = vmatprep.subr.mxu0 0.0
    %3629 = vmatpush1.xpose.msra.mxu0 0.0
    %3630 = vmatprep.subr.mxu0 0.0
    %3631 = vmatpush1.xpose.msra.mxu0 0.0
    %3632 = vmatprep.subr.mxu0 0.0
    %3633 = vmatpush1.xpose.msra.mxu0 0.0
    %3634 = vmatprep.subr.mxu0 0.0
    %3635 = vmatpush1.xpose.msra.mxu0 0.0
    %3636 = vmatprep.subr.mxu0 0.0
    %3637 = vmatpush1.xpose.msra.mxu0 0.0
    %3638 = vmatprep.subr.mxu0 0.0
    %3639 = vmatpush1.xpose.msra.mxu0 0.0
    %3640 = vmatprep.subr.mxu0 0.0
    %3641 = vmatpush1.xpose.msra.mxu0 %v3608
    %3642 = vmatprep.subr.mxu0 0.0
    %3643 = vmatpush2.xpose.msra.mxu0 0.0
    %3644 = vmatprep.subr.mxu0 0.0
    %3645 = vmatpush2.xpose.msra.mxu0 0.0
    %3646 = vmatprep.subr.mxu0 0.0
    %3647 = vmatpush2.xpose.msra.mxu0 0.0
    %3648 = vmatprep.subr.mxu0 0.0
    %3649 = vmatpush2.xpose.msra.mxu0 0.0
    %3650 = vmatprep.subr.mxu0 0.0
    %3651 = vmatpush2.xpose.msra.mxu0 0.0
    %3652 = vmatprep.subr.mxu0 0.0
    %3653 = vmatpush2.xpose.msra.mxu0 0.0
    %3654 = vmatprep.subr.mxu0 0.0
    %3655 = vmatpush2.xpose.msra.mxu0 0.0
    %3656 = vmatprep.subr.mxu0 0.0
    %3657 = vmatpush2.xpose.msra.mxu0 0.0
    %3658 = vmatprep.subr.mxu0 0.0
    %3659 = vmatpush2.xpose.msra.mxu0 0.0
    %3660 = vmatprep.subr.mxu0 0.0
    %3661 = vmatpush2.xpose.msra.mxu0 0.0
    %3662 = vmatprep.subr.mxu0 0.0
    %3663 = vmatpush2.xpose.msra.mxu0 0.0
    %3664 = vmatprep.subr.mxu0 0.0
    %3665 = vmatpush2.xpose.msra.mxu0 0.0
    %3666 = vmatprep.subr.mxu0 0.0
    %3667 = vmatpush2.xpose.msra.mxu0 0.0
    %3668 = vmatprep.subr.mxu0 0.0
    %3669 = vmatpush2.xpose.msra.mxu0 0.0
    %3670 = vmatprep.subr.mxu0 0.0
    %3671 = vmatpush2.xpose.msra.mxu0 0.0
    %3672 = vmatprep.subr.mxu0 0.0
    %3673 = vmatpush2.xpose.msra.mxu0 0.0
    %3674 = vmatprep.mubr.f32.mxu0 0.0
    %3675 = vmatmul.mubr.f32.gmra.mxu0 %v3605
    %v3676 = vpop.f32.mrf.mxu0
    %v3677 = vadd.f32 %v486, %v3676
    %v3678 = vpop.f32.mrf.mxu0
    %3679 = vdwg.mxu0
    %v3681 = vsel %vm1412, %v2932, 0
    %v3684 = vsel %vm1412, %v3158, 0
    %3686 = vmatprep.subr.mxu0 0.0
    %3687 = vmatpush1.xpose.msra.mxu0 0.0
    %3688 = vmatprep.subr.mxu0 0.0
    %3689 = vmatpush1.xpose.msra.mxu0 0.0
    %3690 = vmatprep.subr.mxu0 0.0
    %3691 = vmatpush1.xpose.msra.mxu0 0.0
    %3692 = vmatprep.subr.mxu0 0.0
    %3693 = vmatpush1.xpose.msra.mxu0 0.0
    %3694 = vmatprep.subr.mxu0 0.0
    %3695 = vmatpush1.xpose.msra.mxu0 0.0
    %3696 = vmatprep.subr.mxu0 0.0
    %3697 = vmatpush1.xpose.msra.mxu0 0.0
    %3698 = vmatprep.subr.mxu0 0.0
    %3699 = vmatpush1.xpose.msra.mxu0 0.0
    %3700 = vmatprep.subr.mxu0 0.0
    %3701 = vmatpush1.xpose.msra.mxu0 0.0
    %3702 = vmatprep.subr.mxu0 0.0
    %3703 = vmatpush1.xpose.msra.mxu0 0.0
    %3704 = vmatprep.subr.mxu0 0.0
    %3705 = vmatpush1.xpose.msra.mxu0 0.0
    %3706 = vmatprep.subr.mxu0 0.0
    %3707 = vmatpush1.xpose.msra.mxu0 0.0
    %3708 = vmatprep.subr.mxu0 0.0
    %3709 = vmatpush1.xpose.msra.mxu0 0.0
    %3710 = vmatprep.subr.mxu0 0.0
    %3711 = vmatpush1.xpose.msra.mxu0 0.0
    %3712 = vmatprep.subr.mxu0 0.0
    %3713 = vmatpush1.xpose.msra.mxu0 0.0
    %3714 = vmatprep.subr.mxu0 0.0
    %3715 = vmatpush1.xpose.msra.mxu0 0.0
    %3716 = vmatprep.subr.mxu0 0.0
    %3717 = vmatpush1.xpose.msra.mxu0 %v3684
    %3718 = vmatprep.subr.mxu0 0.0
    %3719 = vmatpush2.xpose.msra.mxu0 0.0
    %3720 = vmatprep.subr.mxu0 0.0
    %3721 = vmatpush2.xpose.msra.mxu0 0.0
    %3722 = vmatprep.subr.mxu0 0.0
    %3723 = vmatpush2.xpose.msra.mxu0 0.0
    %3724 = vmatprep.subr.mxu0 0.0
    %3725 = vmatpush2.xpose.msra.mxu0 0.0
    %3726 = vmatprep.subr.mxu0 0.0
    %3727 = vmatpush2.xpose.msra.mxu0 0.0
    %3728 = vmatprep.subr.mxu0 0.0
    %3729 = vmatpush2.xpose.msra.mxu0 0.0
    %3730 = vmatprep.subr.mxu0 0.0
    %3731 = vmatpush2.xpose.msra.mxu0 0.0
    %3732 = vmatprep.subr.mxu0 0.0
    %3733 = vmatpush2.xpose.msra.mxu0 0.0
    %3734 = vmatprep.subr.mxu0 0.0
    %3735 = vmatpush2.xpose.msra.mxu0 0.0
    %3736 = vmatprep.subr.mxu0 0.0
    %3737 = vmatpush2.xpose.msra.mxu0 0.0
    %3738 = vmatprep.subr.mxu0 0.0
    %3739 = vmatpush2.xpose.msra.mxu0 0.0
    %3740 = vmatprep.subr.mxu0 0.0
    %3741 = vmatpush2.xpose.msra.mxu0 0.0
    %3742 = vmatprep.subr.mxu0 0.0
    %3743 = vmatpush2.xpose.msra.mxu0 0.0
    %3744 = vmatprep.subr.mxu0 0.0
    %3745 = vmatpush2.xpose.msra.mxu0 0.0
    %3746 = vmatprep.subr.mxu0 0.0
    %3747 = vmatpush2.xpose.msra.mxu0 0.0
    %3748 = vmatprep.subr.mxu0 0.0
    %3749 = vmatpush2.xpose.msra.mxu0 0.0
    %3750 = vmatprep.mubr.f32.mxu0 0.0
    %3751 = vmatmul.mubr.f32.gmra.mxu0 %v3681
    %v3752 = vpop.f32.mrf.mxu0
    %v3753 = vadd.f32 %v486, %v3752
    %v3754 = vpop.f32.mrf.mxu0
    %3755 = vdwg.mxu0
    %v3757 = vsel %vm1412, %v2933, 0
    %v3760 = vsel %vm1412, %v3228, 0
    %3762 = vmatprep.subr.mxu0 0.0
    %3763 = vmatpush1.xpose.msra.mxu0 0.0
    %3764 = vmatprep.subr.mxu0 0.0
    %3765 = vmatpush1.xpose.msra.mxu0 0.0
    %3766 = vmatprep.subr.mxu0 0.0
    %3767 = vmatpush1.xpose.msra.mxu0 0.0
    %3768 = vmatprep.subr.mxu0 0.0
    %3769 = vmatpush1.xpose.msra.mxu0 0.0
    %3770 = vmatprep.subr.mxu0 0.0
    %3771 = vmatpush1.xpose.msra.mxu0 0.0
    %3772 = vmatprep.subr.mxu0 0.0
    %3773 = vmatpush1.xpose.msra.mxu0 0.0
    %3774 = vmatprep.subr.mxu0 0.0
    %3775 = vmatpush1.xpose.msra.mxu0 0.0
    %3776 = vmatprep.subr.mxu0 0.0
    %3777 = vmatpush1.xpose.msra.mxu0 0.0
    %3778 = vmatprep.subr.mxu0 0.0
    %3779 = vmatpush1.xpose.msra.mxu0 0.0
    %3780 = vmatprep.subr.mxu0 0.0
    %3781 = vmatpush1.xpose.msra.mxu0 0.0
    %3782 = vmatprep.subr.mxu0 0.0
    %3783 = vmatpush1.xpose.msra.mxu0 0.0
    %3784 = vmatprep.subr.mxu0 0.0
    %3785 = vmatpush1.xpose.msra.mxu0 0.0
    %3786 = vmatprep.subr.mxu0 0.0
    %3787 = vmatpush1.xpose.msra.mxu0 0.0
    %3788 = vmatprep.subr.mxu0 0.0
    %3789 = vmatpush1.xpose.msra.mxu0 0.0
    %3790 = vmatprep.subr.mxu0 0.0
    %3791 = vmatpush1.xpose.msra.mxu0 0.0
    %3792 = vmatprep.subr.mxu0 0.0
    %3793 = vmatpush1.xpose.msra.mxu0 %v3760
    %3794 = vmatprep.subr.mxu0 0.0
    %3795 = vmatpush2.xpose.msra.mxu0 0.0
    %3796 = vmatprep.subr.mxu0 0.0
    %3797 = vmatpush2.xpose.msra.mxu0 0.0
    %3798 = vmatprep.subr.mxu0 0.0
    %3799 = vmatpush2.xpose.msra.mxu0 0.0
    %3800 = vmatprep.subr.mxu0 0.0
    %3801 = vmatpush2.xpose.msra.mxu0 0.0
    %3802 = vmatprep.subr.mxu0 0.0
    %3803 = vmatpush2.xpose.msra.mxu0 0.0
    %3804 = vmatprep.subr.mxu0 0.0
    %3805 = vmatpush2.xpose.msra.mxu0 0.0
    %3806 = vmatprep.subr.mxu0 0.0
    %3807 = vmatpush2.xpose.msra.mxu0 0.0
    %3808 = vmatprep.subr.mxu0 0.0
    %3809 = vmatpush2.xpose.msra.mxu0 0.0
    %3810 = vmatprep.subr.mxu0 0.0
    %3811 = vmatpush2.xpose.msra.mxu0 0.0
    %3812 = vmatprep.subr.mxu0 0.0
    %3813 = vmatpush2.xpose.msra.mxu0 0.0
    %3814 = vmatprep.subr.mxu0 0.0
    %3815 = vmatpush2.xpose.msra.mxu0 0.0
    %3816 = vmatprep.subr.mxu0 0.0
    %3817 = vmatpush2.xpose.msra.mxu0 0.0
    %3818 = vmatprep.subr.mxu0 0.0
    %3819 = vmatpush2.xpose.msra.mxu0 0.0
    %3820 = vmatprep.subr.mxu0 0.0
    %3821 = vmatpush2.xpose.msra.mxu0 0.0
    %3822 = vmatprep.subr.mxu0 0.0
    %3823 = vmatpush2.xpose.msra.mxu0 0.0
    %3824 = vmatprep.subr.mxu0 0.0
    %3825 = vmatpush2.xpose.msra.mxu0 0.0
    %3826 = vmatprep.mubr.f32.mxu0 0.0
    %3827 = vmatmul.mubr.f32.gmra.mxu0 %v3757
    %v3828 = vpop.f32.mrf.mxu0
    %v3829 = vadd.f32 %v486, %v3828
    %v3830 = vpop.f32.mrf.mxu0
    %3831 = vdwg.mxu0
    %v3832 = vsel %vm1412, %v3601, -inf
    %3833 = vmax.xlane.f32.xlu0 %v3832
    %v3834 = vpop.xlane.xlu0 %3833
    %v3835 = vsel %vm1412, %v3677, -inf
    %3836 = vmax.xlane.f32.xlu0 %v3835
    %v3837 = vpop.xlane.xlu0 %3836
    %v3838 = vsel %vm1412, %v3753, -inf
    %3839 = vmax.xlane.f32.xlu0 %v3838
    %v3840 = vpop.xlane.xlu0 %3839
    %v3841 = vsel %vm1412, %v3829, -inf
    %3842 = vmax.xlane.f32.xlu0 %v3841
    %v3843 = vpop.xlane.xlu0 %3842
    %v3844 = vsub.f32 %v3601, %v3834
    %v3845 = vsub.f32 %v3677, %v3837
    %v3846 = vsub.f32 %v3753, %v3840
    %v3847 = vsub.f32 %v3829, %v3843
    %v3848 = vmul.f32 %v3844, 1.442695
    %v3849 = vpow.pop %v3848
    %v3850 = vmul.f32 %v3845, 1.442695
    %v3851 = vpow.pop %v3850
    %v3852 = vmul.f32 %v3846, 1.442695
    %v3853 = vpow.pop %v3852
    %v3854 = vmul.f32 %v3847, 1.442695
    %v3855 = vpow.pop %v3854
    %v3856 = vsel %vm1412, %v3849, 0.0
    %3857 = vadd.xlane.f32.xlu0 %v3856
    %v3858 = vpop.xlane.xlu0 %3857
    %v3859 = vsel %vm1412, %v3851, 0.0
    %3860 = vadd.xlane.f32.xlu0 %v3859
    %v3861 = vpop.xlane.xlu0 %3860
    %v3862 = vsel %vm1412, %v3853, 0.0
    %3863 = vadd.xlane.f32.xlu0 %v3862
    %v3864 = vpop.xlane.xlu0 %3863
    %v3865 = vsel %vm1412, %v3855, 0.0
    %3866 = vadd.xlane.f32.xlu0 %v3865
    %v3867 = vpop.xlane.xlu0 %3866
    %v3868 = vrcp.pop %v3858
    %v3869 = vrcp.pop %v3861
    %v3870 = vrcp.pop %v3864
    %v3871 = vrcp.pop %v3867
    %v3872 = vmul.f32 %v3849, %v3868
    %v3873 = vmul.f32 %v3851, %v3869
    %v3874 = vmul.f32 %v3853, %v3870
    %v3875 = vmul.f32 %v3855, %v3871
    %v3877 = vsel %vm1412, %v3872, 0
    %3879 = vmatprep.subr.mxu0 0.0
    %3880 = vmatpush1.msra.mxu0 0.0
    %3881 = vmatprep.subr.mxu0 0.0
    %3882 = vmatpush1.msra.mxu0 0.0
    %3883 = vmatprep.subr.mxu0 0.0
    %3884 = vmatpush1.msra.mxu0 0.0
    %3885 = vmatprep.subr.mxu0 0.0
    %3886 = vmatpush1.msra.mxu0 0.0
    %3887 = vmatprep.subr.mxu0 0.0
    %3888 = vmatpush1.msra.mxu0 0.0
    %3889 = vmatprep.subr.mxu0 0.0
    %3890 = vmatpush1.msra.mxu0 0.0
    %3891 = vmatprep.subr.mxu0 0.0
    %3892 = vmatpush1.msra.mxu0 0.0
    %3893 = vmatprep.subr.mxu0 0.0
    %3894 = vmatpush1.msra.mxu0 0.0
    %3895 = vmatprep.subr.mxu0 0.0
    %3896 = vmatpush1.msra.mxu0 0.0
    %3897 = vmatprep.subr.mxu0 0.0
    %3898 = vmatpush1.msra.mxu0 0.0
    %3899 = vmatprep.subr.mxu0 0.0
    %3900 = vmatpush1.msra.mxu0 0.0
    %3901 = vmatprep.subr.mxu0 0.0
    %3902 = vmatpush1.msra.mxu0 0.0
    %3903 = vmatprep.subr.mxu0 0.0
    %3904 = vmatpush1.msra.mxu0 0.0
    %3905 = vmatprep.subr.mxu0 0.0
    %3906 = vmatpush1.msra.mxu0 0.0
    %3907 = vmatprep.subr.mxu0 0.0
    %3908 = vmatpush1.msra.mxu0 0.0
    %3909 = vmatprep.subr.mxu0 0.0
    %3910 = vmatpush1.msra.mxu0 %v3315
    %3911 = vmatprep.subr.mxu0 0.0
    %3912 = vmatpush2.msra.mxu0 0.0
    %3913 = vmatprep.subr.mxu0 0.0
    %3914 = vmatpush2.msra.mxu0 0.0
    %3915 = vmatprep.subr.mxu0 0.0
    %3916 = vmatpush2.msra.mxu0 0.0
    %3917 = vmatprep.subr.mxu0 0.0
    %3918 = vmatpush2.msra.mxu0 0.0
    %3919 = vmatprep.subr.mxu0 0.0
    %3920 = vmatpush2.msra.mxu0 0.0
    %3921 = vmatprep.subr.mxu0 0.0
    %3922 = vmatpush2.msra.mxu0 0.0
    %3923 = vmatprep.subr.mxu0 0.0
    %3924 = vmatpush2.msra.mxu0 0.0
    %3925 = vmatprep.subr.mxu0 0.0
    %3926 = vmatpush2.msra.mxu0 0.0
    %3927 = vmatprep.subr.mxu0 0.0
    %3928 = vmatpush2.msra.mxu0 0.0
    %3929 = vmatprep.subr.mxu0 0.0
    %3930 = vmatpush2.msra.mxu0 0.0
    %3931 = vmatprep.subr.mxu0 0.0
    %3932 = vmatpush2.msra.mxu0 0.0
    %3933 = vmatprep.subr.mxu0 0.0
    %3934 = vmatpush2.msra.mxu0 0.0
    %3935 = vmatprep.subr.mxu0 0.0
    %3936 = vmatpush2.msra.mxu0 0.0
    %3937 = vmatprep.subr.mxu0 0.0
    %3938 = vmatpush2.msra.mxu0 0.0
    %3939 = vmatprep.subr.mxu0 0.0
    %3940 = vmatpush2.msra.mxu0 0.0
    %3941 = vmatprep.subr.mxu0 0.0
    %3942 = vmatpush2.msra.mxu0 0.0
    %3943 = vmatprep.mubr.f32.mxu0 0.0
    %3944 = vmatmul.mubr.f32.gmra.mxu0 %v3877
    %v3945 = vpop.f32.mrf.mxu0
    %v3946 = vadd.f32 0.0, %v3945
    %v3947 = vpop.f32.mrf.mxu0
    %3948 = vdwg.mxu0
    %v3950 = vsel %vm1412, %v3873, 0
    %3952 = vmatprep.subr.mxu0 0.0
    %3953 = vmatpush1.msra.mxu0 0.0
    %3954 = vmatprep.subr.mxu0 0.0
    %3955 = vmatpush1.msra.mxu0 0.0
    %3956 = vmatprep.subr.mxu0 0.0
    %3957 = vmatpush1.msra.mxu0 0.0
    %3958 = vmatprep.subr.mxu0 0.0
    %3959 = vmatpush1.msra.mxu0 0.0
    %3960 = vmatprep.subr.mxu0 0.0
    %3961 = vmatpush1.msra.mxu0 0.0
    %3962 = vmatprep.subr.mxu0 0.0
    %3963 = vmatpush1.msra.mxu0 0.0
    %3964 = vmatprep.subr.mxu0 0.0
    %3965 = vmatpush1.msra.mxu0 0.0
    %3966 = vmatprep.subr.mxu0 0.0
    %3967 = vmatpush1.msra.mxu0 0.0
    %3968 = vmatprep.subr.mxu0 0.0
    %3969 = vmatpush1.msra.mxu0 0.0
    %3970 = vmatprep.subr.mxu0 0.0
    %3971 = vmatpush1.msra.mxu0 0.0
    %3972 = vmatprep.subr.mxu0 0.0
    %3973 = vmatpush1.msra.mxu0 0.0
    %3974 = vmatprep.subr.mxu0 0.0
    %3975 = vmatpush1.msra.mxu0 0.0
    %3976 = vmatprep.subr.mxu0 0.0
    %3977 = vmatpush1.msra.mxu0 0.0
    %3978 = vmatprep.subr.mxu0 0.0
    %3979 = vmatpush1.msra.mxu0 0.0
    %3980 = vmatprep.subr.mxu0 0.0
    %3981 = vmatpush1.msra.mxu0 0.0
    %3982 = vmatprep.subr.mxu0 0.0
    %3983 = vmatpush1.msra.mxu0 %v3385
    %3984 = vmatprep.subr.mxu0 0.0
    %3985 = vmatpush2.msra.mxu0 0.0
    %3986 = vmatprep.subr.mxu0 0.0
    %3987 = vmatpush2.msra.mxu0 0.0
    %3988 = vmatprep.subr.mxu0 0.0
    %3989 = vmatpush2.msra.mxu0 0.0
    %3990 = vmatprep.subr.mxu0 0.0
    %3991 = vmatpush2.msra.mxu0 0.0
    %3992 = vmatprep.subr.mxu0 0.0
    %3993 = vmatpush2.msra.mxu0 0.0
    %3994 = vmatprep.subr.mxu0 0.0
    %3995 = vmatpush2.msra.mxu0 0.0
    %3996 = vmatprep.subr.mxu0 0.0
    %3997 = vmatpush2.msra.mxu0 0.0
    %3998 = vmatprep.subr.mxu0 0.0
    %3999 = vmatpush2.msra.mxu0 0.0
    %4000 = vmatprep.subr.mxu0 0.0
    %4001 = vmatpush2.msra.mxu0 0.0
    %4002 = vmatprep.subr.mxu0 0.0
    %4003 = vmatpush2.msra.mxu0 0.0
    %4004 = vmatprep.subr.mxu0 0.0
    %4005 = vmatpush2.msra.mxu0 0.0
    %4006 = vmatprep.subr.mxu0 0.0
    %4007 = vmatpush2.msra.mxu0 0.0
    %4008 = vmatprep.subr.mxu0 0.0
    %4009 = vmatpush2.msra.mxu0 0.0
    %4010 = vmatprep.subr.mxu0 0.0
    %4011 = vmatpush2.msra.mxu0 0.0
    %4012 = vmatprep.subr.mxu0 0.0
    %4013 = vmatpush2.msra.mxu0 0.0
    %4014 = vmatprep.subr.mxu0 0.0
    %4015 = vmatpush2.msra.mxu0 0.0
    %4016 = vmatprep.mubr.f32.mxu0 0.0
    %4017 = vmatmul.mubr.f32.gmra.mxu0 %v3950
    %v4018 = vpop.f32.mrf.mxu0
    %v4019 = vadd.f32 0.0, %v4018
    %v4020 = vpop.f32.mrf.mxu0
    %4021 = vdwg.mxu0
    %v4023 = vsel %vm1412, %v3874, 0
    %4025 = vmatprep.subr.mxu0 0.0
    %4026 = vmatpush1.msra.mxu0 0.0
    %4027 = vmatprep.subr.mxu0 0.0
    %4028 = vmatpush1.msra.mxu0 0.0
    %4029 = vmatprep.subr.mxu0 0.0
    %4030 = vmatpush1.msra.mxu0 0.0
    %4031 = vmatprep.subr.mxu0 0.0
    %4032 = vmatpush1.msra.mxu0 0.0
    %4033 = vmatprep.subr.mxu0 0.0
    %4034 = vmatpush1.msra.mxu0 0.0
    %4035 = vmatprep.subr.mxu0 0.0
    %4036 = vmatpush1.msra.mxu0 0.0
    %4037 = vmatprep.subr.mxu0 0.0
    %4038 = vmatpush1.msra.mxu0 0.0
    %4039 = vmatprep.subr.mxu0 0.0
    %4040 = vmatpush1.msra.mxu0 0.0
    %4041 = vmatprep.subr.mxu0 0.0
    %4042 = vmatpush1.msra.mxu0 0.0
    %4043 = vmatprep.subr.mxu0 0.0
    %4044 = vmatpush1.msra.mxu0 0.0
    %4045 = vmatprep.subr.mxu0 0.0
    %4046 = vmatpush1.msra.mxu0 0.0
    %4047 = vmatprep.subr.mxu0 0.0
    %4048 = vmatpush1.msra.mxu0 0.0
    %4049 = vmatprep.subr.mxu0 0.0
    %4050 = vmatpush1.msra.mxu0 0.0
    %4051 = vmatprep.subr.mxu0 0.0
    %4052 = vmatpush1.msra.mxu0 0.0
    %4053 = vmatprep.subr.mxu0 0.0
    %4054 = vmatpush1.msra.mxu0 0.0
    %4055 = vmatprep.subr.mxu0 0.0
    %4056 = vmatpush1.msra.mxu0 %v3455
    %4057 = vmatprep.subr.mxu0 0.0
    %4058 = vmatpush2.msra.mxu0 0.0
    %4059 = vmatprep.subr.mxu0 0.0
    %4060 = vmatpush2.msra.mxu0 0.0
    %4061 = vmatprep.subr.mxu0 0.0
    %4062 = vmatpush2.msra.mxu0 0.0
    %4063 = vmatprep.subr.mxu0 0.0
    %4064 = vmatpush2.msra.mxu0 0.0
    %4065 = vmatprep.subr.mxu0 0.0
    %4066 = vmatpush2.msra.mxu0 0.0
    %4067 = vmatprep.subr.mxu0 0.0
    %4068 = vmatpush2.msra.mxu0 0.0
    %4069 = vmatprep.subr.mxu0 0.0
    %4070 = vmatpush2.msra.mxu0 0.0
    %4071 = vmatprep.subr.mxu0 0.0
    %4072 = vmatpush2.msra.mxu0 0.0
    %4073 = vmatprep.subr.mxu0 0.0
    %4074 = vmatpush2.msra.mxu0 0.0
    %4075 = vmatprep.subr.mxu0 0.0
    %4076 = vmatpush2.msra.mxu0 0.0
    %4077 = vmatprep.subr.mxu0 0.0
    %4078 = vmatpush2.msra.mxu0 0.0
    %4079 = vmatprep.subr.mxu0 0.0
    %4080 = vmatpush2.msra.mxu0 0.0
    %4081 = vmatprep.subr.mxu0 0.0
    %4082 = vmatpush2.msra.mxu0 0.0
    %4083 = vmatprep.subr.mxu0 0.0
    %4084 = vmatpush2.msra.mxu0 0.0
    %4085 = vmatprep.subr.mxu0 0.0
    %4086 = vmatpush2.msra.mxu0 0.0
    %4087 = vmatprep.subr.mxu0 0.0
    %4088 = vmatpush2.msra.mxu0 0.0
    %4089 = vmatprep.mubr.f32.mxu0 0.0
    %4090 = vmatmul.mubr.f32.gmra.mxu0 %v4023
    %v4091 = vpop.f32.mrf.mxu0
    %v4092 = vadd.f32 0.0, %v4091
    %v4093 = vpop.f32.mrf.mxu0
    %4094 = vdwg.mxu0
    %v4096 = vsel %vm1412, %v3875, 0
    %4098 = vmatprep.subr.mxu0 0.0
    %4099 = vmatpush1.msra.mxu0 0.0
    %4100 = vmatprep.subr.mxu0 0.0
    %4101 = vmatpush1.msra.mxu0 0.0
    %4102 = vmatprep.subr.mxu0 0.0
    %4103 = vmatpush1.msra.mxu0 0.0
    %4104 = vmatprep.subr.mxu0 0.0
    %4105 = vmatpush1.msra.mxu0 0.0
    %4106 = vmatprep.subr.mxu0 0.0
    %4107 = vmatpush1.msra.mxu0 0.0
    %4108 = vmatprep.subr.mxu0 0.0
    %4109 = vmatpush1.msra.mxu0 0.0
    %4110 = vmatprep.subr.mxu0 0.0
    %4111 = vmatpush1.msra.mxu0 0.0
    %4112 = vmatprep.subr.mxu0 0.0
    %4113 = vmatpush1.msra.mxu0 0.0
    %4114 = vmatprep.subr.mxu0 0.0
    %4115 = vmatpush1.msra.mxu0 0.0
    %4116 = vmatprep.subr.mxu0 0.0
    %4117 = vmatpush1.msra.mxu0 0.0
    %4118 = vmatprep.subr.mxu0 0.0
    %4119 = vmatpush1.msra.mxu0 0.0
    %4120 = vmatprep.subr.mxu0 0.0
    %4121 = vmatpush1.msra.mxu0 0.0
    %4122 = vmatprep.subr.mxu0 0.0
    %4123 = vmatpush1.msra.mxu0 0.0
    %4124 = vmatprep.subr.mxu0 0.0
    %4125 = vmatpush1.msra.mxu0 0.0
    %4126 = vmatprep.subr.mxu0 0.0
    %4127 = vmatpush1.msra.mxu0 0.0
    %4128 = vmatprep.subr.mxu0 0.0
    %4129 = vmatpush1.msra.mxu0 %v3525
    %4130 = vmatprep.subr.mxu0 0.0
    %4131 = vmatpush2.msra.mxu0 0.0
    %4132 = vmatprep.subr.mxu0 0.0
    %4133 = vmatpush2.msra.mxu0 0.0
    %4134 = vmatprep.subr.mxu0 0.0
    %4135 = vmatpush2.msra.mxu0 0.0
    %4136 = vmatprep.subr.mxu0 0.0
    %4137 = vmatpush2.msra.mxu0 0.0
    %4138 = vmatprep.subr.mxu0 0.0
    %4139 = vmatpush2.msra.mxu0 0.0
    %4140 = vmatprep.subr.mxu0 0.0
    %4141 = vmatpush2.msra.mxu0 0.0
    %4142 = vmatprep.subr.mxu0 0.0
    %4143 = vmatpush2.msra.mxu0 0.0
    %4144 = vmatprep.subr.mxu0 0.0
    %4145 = vmatpush2.msra.mxu0 0.0
    %4146 = vmatprep.subr.mxu0 0.0
    %4147 = vmatpush2.msra.mxu0 0.0
    %4148 = vmatprep.subr.mxu0 0.0
    %4149 = vmatpush2.msra.mxu0 0.0
    %4150 = vmatprep.subr.mxu0 0.0
    %4151 = vmatpush2.msra.mxu0 0.0
    %4152 = vmatprep.subr.mxu0 0.0
    %4153 = vmatpush2.msra.mxu0 0.0
    %4154 = vmatprep.subr.mxu0 0.0
    %4155 = vmatpush2.msra.mxu0 0.0
    %4156 = vmatprep.subr.mxu0 0.0
    %4157 = vmatpush2.msra.mxu0 0.0
    %4158 = vmatprep.subr.mxu0 0.0
    %4159 = vmatpush2.msra.mxu0 0.0
    %4160 = vmatprep.subr.mxu0 0.0
    %4161 = vmatpush2.msra.mxu0 0.0
    %4162 = vmatprep.mubr.f32.mxu0 0.0
    %4163 = vmatmul.mubr.f32.gmra.mxu0 %v4096
    %v4164 = vpop.f32.mrf.mxu0
    %v4165 = vadd.f32 0.0, %v4164
    %v4166 = vpop.f32.mrf.mxu0
    %4167 = vdwg.mxu0
    %s4168 = scalar_lea.vmem %s11, 32
    %v4169 = vld [vmem:[%s4168] sm:$0xff]
    %v4170 = vld [vmem:[%s4168 + $0x8] sm:$0xff]
    %v4171 = vld [vmem:[%s4168 + $0x10] sm:$0xff]
    %v4172 = vld [vmem:[%s4168 + $0x18] sm:$0xff]
    %v4174 = vsel %vm1412, %v3946, 0
    %4176 = vmatprep.subr.mxu0 0.0
    %4177 = vmatpush1.msra.mxu0 0.0
    %4178 = vmatprep.subr.mxu0 0.0
    %4179 = vmatpush1.msra.mxu0 0.0
    %4180 = vmatprep.subr.mxu0 0.0
    %4181 = vmatpush1.msra.mxu0 0.0
    %4182 = vmatprep.subr.mxu0 0.0
    %4183 = vmatpush1.msra.mxu0 0.0
    %4184 = vmatprep.subr.mxu0 0.0
    %4185 = vmatpush1.msra.mxu0 0.0
    %4186 = vmatprep.subr.mxu0 0.0
    %4187 = vmatpush1.msra.mxu0 0.0
    %4188 = vmatprep.subr.mxu0 0.0
    %4189 = vmatpush1.msra.mxu0 0.0
    %4190 = vmatprep.subr.mxu0 0.0
    %4191 = vmatpush1.msra.mxu0 0.0
    %4192 = vmatprep.subr.mxu0 0.0
    %4193 = vmatpush1.msra.mxu0 0.0
    %4194 = vmatprep.subr.mxu0 0.0
    %4195 = vmatpush1.msra.mxu0 0.0
    %4196 = vmatprep.subr.mxu0 0.0
    %4197 = vmatpush1.msra.mxu0 0.0
    %4198 = vmatprep.subr.mxu0 0.0
    %4199 = vmatpush1.msra.mxu0 0.0
    %4200 = vmatprep.subr.mxu0 0.0
    %4201 = vmatpush1.msra.mxu0 0.0
    %4202 = vmatprep.subr.mxu0 0.0
    %4203 = vmatpush1.msra.mxu0 0.0
    %4204 = vmatprep.subr.mxu0 0.0
    %4205 = vmatpush1.msra.mxu0 0.0
    %4206 = vmatprep.subr.mxu0 0.0
    %4207 = vmatpush1.msra.mxu0 %v4169
    %4208 = vmatprep.subr.mxu0 0.0
    %4209 = vmatpush2.msra.mxu0 0.0
    %4210 = vmatprep.subr.mxu0 0.0
    %4211 = vmatpush2.msra.mxu0 0.0
    %4212 = vmatprep.subr.mxu0 0.0
    %4213 = vmatpush2.msra.mxu0 0.0
    %4214 = vmatprep.subr.mxu0 0.0
    %4215 = vmatpush2.msra.mxu0 0.0
    %4216 = vmatprep.subr.mxu0 0.0
    %4217 = vmatpush2.msra.mxu0 0.0
    %4218 = vmatprep.subr.mxu0 0.0
    %4219 = vmatpush2.msra.mxu0 0.0
    %4220 = vmatprep.subr.mxu0 0.0
    %4221 = vmatpush2.msra.mxu0 0.0
    %4222 = vmatprep.subr.mxu0 0.0
    %4223 = vmatpush2.msra.mxu0 0.0
    %4224 = vmatprep.subr.mxu0 0.0
    %4225 = vmatpush2.msra.mxu0 0.0
    %4226 = vmatprep.subr.mxu0 0.0
    %4227 = vmatpush2.msra.mxu0 0.0
    %4228 = vmatprep.subr.mxu0 0.0
    %4229 = vmatpush2.msra.mxu0 0.0
    %4230 = vmatprep.subr.mxu0 0.0
    %4231 = vmatpush2.msra.mxu0 0.0
    %4232 = vmatprep.subr.mxu0 0.0
    %4233 = vmatpush2.msra.mxu0 0.0
    %4234 = vmatprep.subr.mxu0 0.0
    %4235 = vmatpush2.msra.mxu0 0.0
    %4236 = vmatprep.subr.mxu0 0.0
    %4237 = vmatpush2.msra.mxu0 0.0
    %4238 = vmatprep.subr.mxu0 0.0
    %4239 = vmatpush2.msra.mxu0 0.0
    %4240 = vmatprep.mubr.f32.mxu0 0.0
    %4241 = vmatmul.mubr.f32.gmra.mxu0 %v4174
    %v4242 = vpop.f32.mrf.mxu0
    %v4243 = vadd.f32 0.0, %v4242
    %v4244 = vpop.f32.mrf.mxu0
    %4245 = vdwg.mxu0
    %v4247 = vsel %vm1412, %v4019, 0
    %4249 = vmatprep.subr.mxu0 0.0
    %4250 = vmatpush1.msra.mxu0 0.0
    %4251 = vmatprep.subr.mxu0 0.0
    %4252 = vmatpush1.msra.mxu0 0.0
    %4253 = vmatprep.subr.mxu0 0.0
    %4254 = vmatpush1.msra.mxu0 0.0
    %4255 = vmatprep.subr.mxu0 0.0
    %4256 = vmatpush1.msra.mxu0 0.0
    %4257 = vmatprep.subr.mxu0 0.0
    %4258 = vmatpush1.msra.mxu0 0.0
    %4259 = vmatprep.subr.mxu0 0.0
    %4260 = vmatpush1.msra.mxu0 0.0
    %4261 = vmatprep.subr.mxu0 0.0
    %4262 = vmatpush1.msra.mxu0 0.0
    %4263 = vmatprep.subr.mxu0 0.0
    %4264 = vmatpush1.msra.mxu0 0.0
    %4265 = vmatprep.subr.mxu0 0.0
    %4266 = vmatpush1.msra.mxu0 0.0
    %4267 = vmatprep.subr.mxu0 0.0
    %4268 = vmatpush1.msra.mxu0 0.0
    %4269 = vmatprep.subr.mxu0 0.0
    %4270 = vmatpush1.msra.mxu0 0.0
    %4271 = vmatprep.subr.mxu0 0.0
    %4272 = vmatpush1.msra.mxu0 0.0
    %4273 = vmatprep.subr.mxu0 0.0
    %4274 = vmatpush1.msra.mxu0 0.0
    %4275 = vmatprep.subr.mxu0 0.0
    %4276 = vmatpush1.msra.mxu0 0.0
    %4277 = vmatprep.subr.mxu0 0.0
    %4278 = vmatpush1.msra.mxu0 0.0
    %4279 = vmatprep.subr.mxu0 0.0
    %4280 = vmatpush1.msra.mxu0 %v4170
    %4281 = vmatprep.subr.mxu0 0.0
    %4282 = vmatpush2.msra.mxu0 0.0
    %4283 = vmatprep.subr.mxu0 0.0
    %4284 = vmatpush2.msra.mxu0 0.0
    %4285 = vmatprep.subr.mxu0 0.0
    %4286 = vmatpush2.msra.mxu0 0.0
    %4287 = vmatprep.subr.mxu0 0.0
    %4288 = vmatpush2.msra.mxu0 0.0
    %4289 = vmatprep.subr.mxu0 0.0
    %4290 = vmatpush2.msra.mxu0 0.0
    %4291 = vmatprep.subr.mxu0 0.0
    %4292 = vmatpush2.msra.mxu0 0.0
    %4293 = vmatprep.subr.mxu0 0.0
    %4294 = vmatpush2.msra.mxu0 0.0
    %4295 = vmatprep.subr.mxu0 0.0
    %4296 = vmatpush2.msra.mxu0 0.0
    %4297 = vmatprep.subr.mxu0 0.0
    %4298 = vmatpush2.msra.mxu0 0.0
    %4299 = vmatprep.subr.mxu0 0.0
    %4300 = vmatpush2.msra.mxu0 0.0
    %4301 = vmatprep.subr.mxu0 0.0
    %4302 = vmatpush2.msra.mxu0 0.0
    %4303 = vmatprep.subr.mxu0 0.0
    %4304 = vmatpush2.msra.mxu0 0.0
    %4305 = vmatprep.subr.mxu0 0.0
    %4306 = vmatpush2.msra.mxu0 0.0
    %4307 = vmatprep.subr.mxu0 0.0
    %4308 = vmatpush2.msra.mxu0 0.0
    %4309 = vmatprep.subr.mxu0 0.0
    %4310 = vmatpush2.msra.mxu0 0.0
    %4311 = vmatprep.subr.mxu0 0.0
    %4312 = vmatpush2.msra.mxu0 0.0
    %4313 = vmatprep.mubr.f32.mxu0 0.0
    %4314 = vmatmul.mubr.f32.gmra.mxu0 %v4247
    %v4315 = vpop.f32.mrf.mxu0
    %v4316 = vadd.f32 0.0, %v4315
    %v4317 = vpop.f32.mrf.mxu0
    %4318 = vdwg.mxu0
    %v4320 = vsel %vm1412, %v4092, 0
    %4322 = vmatprep.subr.mxu0 0.0
    %4323 = vmatpush1.msra.mxu0 0.0
    %4324 = vmatprep.subr.mxu0 0.0
    %4325 = vmatpush1.msra.mxu0 0.0
    %4326 = vmatprep.subr.mxu0 0.0
    %4327 = vmatpush1.msra.mxu0 0.0
    %4328 = vmatprep.subr.mxu0 0.0
    %4329 = vmatpush1.msra.mxu0 0.0
    %4330 = vmatprep.subr.mxu0 0.0
    %4331 = vmatpush1.msra.mxu0 0.0
    %4332 = vmatprep.subr.mxu0 0.0
    %4333 = vmatpush1.msra.mxu0 0.0
    %4334 = vmatprep.subr.mxu0 0.0
    %4335 = vmatpush1.msra.mxu0 0.0
    %4336 = vmatprep.subr.mxu0 0.0
    %4337 = vmatpush1.msra.mxu0 0.0
    %4338 = vmatprep.subr.mxu0 0.0
    %4339 = vmatpush1.msra.mxu0 0.0
    %4340 = vmatprep.subr.mxu0 0.0
    %4341 = vmatpush1.msra.mxu0 0.0
    %4342 = vmatprep.subr.mxu0 0.0
    %4343 = vmatpush1.msra.mxu0 0.0
    %4344 = vmatprep.subr.mxu0 0.0
    %4345 = vmatpush1.msra.mxu0 0.0
    %4346 = vmatprep.subr.mxu0 0.0
    %4347 = vmatpush1.msra.mxu0 0.0
    %4348 = vmatprep.subr.mxu0 0.0
    %4349 = vmatpush1.msra.mxu0 0.0
    %4350 = vmatprep.subr.mxu0 0.0
    %4351 = vmatpush1.msra.mxu0 0.0
    %4352 = vmatprep.subr.mxu0 0.0
    %4353 = vmatpush1.msra.mxu0 %v4171
    %4354 = vmatprep.subr.mxu0 0.0
    %4355 = vmatpush2.msra.mxu0 0.0
    %4356 = vmatprep.subr.mxu0 0.0
    %4357 = vmatpush2.msra.mxu0 0.0
    %4358 = vmatprep.subr.mxu0 0.0
    %4359 = vmatpush2.msra.mxu0 0.0
    %4360 = vmatprep.subr.mxu0 0.0
    %4361 = vmatpush2.msra.mxu0 0.0
    %4362 = vmatprep.subr.mxu0 0.0
    %4363 = vmatpush2.msra.mxu0 0.0
    %4364 = vmatprep.subr.mxu0 0.0
    %4365 = vmatpush2.msra.mxu0 0.0
    %4366 = vmatprep.subr.mxu0 0.0
    %4367 = vmatpush2.msra.mxu0 0.0
    %4368 = vmatprep.subr.mxu0 0.0
    %4369 = vmatpush2.msra.mxu0 0.0
    %4370 = vmatprep.subr.mxu0 0.0
    %4371 = vmatpush2.msra.mxu0 0.0
    %4372 = vmatprep.subr.mxu0 0.0
    %4373 = vmatpush2.msra.mxu0 0.0
    %4374 = vmatprep.subr.mxu0 0.0
    %4375 = vmatpush2.msra.mxu0 0.0
    %4376 = vmatprep.subr.mxu0 0.0
    %4377 = vmatpush2.msra.mxu0 0.0
    %4378 = vmatprep.subr.mxu0 0.0
    %4379 = vmatpush2.msra.mxu0 0.0
    %4380 = vmatprep.subr.mxu0 0.0
    %4381 = vmatpush2.msra.mxu0 0.0
    %4382 = vmatprep.subr.mxu0 0.0
    %4383 = vmatpush2.msra.mxu0 0.0
    %4384 = vmatprep.subr.mxu0 0.0
    %4385 = vmatpush2.msra.mxu0 0.0
    %4386 = vmatprep.mubr.f32.mxu0 0.0
    %4387 = vmatmul.mubr.f32.gmra.mxu0 %v4320
    %v4388 = vpop.f32.mrf.mxu0
    %v4389 = vadd.f32 0.0, %v4388
    %v4390 = vpop.f32.mrf.mxu0
    %4391 = vdwg.mxu0
    %v4393 = vsel %vm1412, %v4165, 0
    %4395 = vmatprep.subr.mxu0 0.0
    %4396 = vmatpush1.msra.mxu0 0.0
    %4397 = vmatprep.subr.mxu0 0.0
    %4398 = vmatpush1.msra.mxu0 0.0
    %4399 = vmatprep.subr.mxu0 0.0
    %4400 = vmatpush1.msra.mxu0 0.0
    %4401 = vmatprep.subr.mxu0 0.0
    %4402 = vmatpush1.msra.mxu0 0.0
    %4403 = vmatprep.subr.mxu0 0.0
    %4404 = vmatpush1.msra.mxu0 0.0
    %4405 = vmatprep.subr.mxu0 0.0
    %4406 = vmatpush1.msra.mxu0 0.0
    %4407 = vmatprep.subr.mxu0 0.0
    %4408 = vmatpush1.msra.mxu0 0.0
    %4409 = vmatprep.subr.mxu0 0.0
    %4410 = vmatpush1.msra.mxu0 0.0
    %4411 = vmatprep.subr.mxu0 0.0
    %4412 = vmatpush1.msra.mxu0 0.0
    %4413 = vmatprep.subr.mxu0 0.0
    %4414 = vmatpush1.msra.mxu0 0.0
    %4415 = vmatprep.subr.mxu0 0.0
    %4416 = vmatpush1.msra.mxu0 0.0
    %4417 = vmatprep.subr.mxu0 0.0
    %4418 = vmatpush1.msra.mxu0 0.0
    %4419 = vmatprep.subr.mxu0 0.0
    %4420 = vmatpush1.msra.mxu0 0.0
    %4421 = vmatprep.subr.mxu0 0.0
    %4422 = vmatpush1.msra.mxu0 0.0
    %4423 = vmatprep.subr.mxu0 0.0
    %4424 = vmatpush1.msra.mxu0 0.0
    %4425 = vmatprep.subr.mxu0 0.0
    %4426 = vmatpush1.msra.mxu0 %v4172
    %4427 = vmatprep.subr.mxu0 0.0
    %4428 = vmatpush2.msra.mxu0 0.0
    %4429 = vmatprep.subr.mxu0 0.0
    %4430 = vmatpush2.msra.mxu0 0.0
    %4431 = vmatprep.subr.mxu0 0.0
    %4432 = vmatpush2.msra.mxu0 0.0
    %4433 = vmatprep.subr.mxu0 0.0
    %4434 = vmatpush2.msra.mxu0 0.0
    %4435 = vmatprep.subr.mxu0 0.0
    %4436 = vmatpush2.msra.mxu0 0.0
    %4437 = vmatprep.subr.mxu0 0.0
    %4438 = vmatpush2.msra.mxu0 0.0
    %4439 = vmatprep.subr.mxu0 0.0
    %4440 = vmatpush2.msra.mxu0 0.0
    %4441 = vmatprep.subr.mxu0 0.0
    %4442 = vmatpush2.msra.mxu0 0.0
    %4443 = vmatprep.subr.mxu0 0.0
    %4444 = vmatpush2.msra.mxu0 0.0
    %4445 = vmatprep.subr.mxu0 0.0
    %4446 = vmatpush2.msra.mxu0 0.0
    %4447 = vmatprep.subr.mxu0 0.0
    %4448 = vmatpush2.msra.mxu0 0.0
    %4449 = vmatprep.subr.mxu0 0.0
    %4450 = vmatpush2.msra.mxu0 0.0
    %4451 = vmatprep.subr.mxu0 0.0
    %4452 = vmatpush2.msra.mxu0 0.0
    %4453 = vmatprep.subr.mxu0 0.0
    %4454 = vmatpush2.msra.mxu0 0.0
    %4455 = vmatprep.subr.mxu0 0.0
    %4456 = vmatpush2.msra.mxu0 0.0
    %4457 = vmatprep.subr.mxu0 0.0
    %4458 = vmatpush2.msra.mxu0 0.0
    %4459 = vmatprep.mubr.f32.mxu0 0.0
    %4460 = vmatmul.mubr.f32.gmra.mxu0 %v4393
    %v4461 = vpop.f32.mrf.mxu0
    %v4462 = vadd.f32 0.0, %v4461
    %v4463 = vpop.f32.mrf.mxu0
    %4464 = vdwg.mxu0
    %v4465 = vsel %vm283, %v4243, 0.0
    %v4466 = vsel %vm283, %v4316, 0.0
    %v4467 = vadd.f32 %v4465, %v4466
    %v4468 = vsel %vm283, %v4389, 0.0
    %v4469 = vadd.f32 %v4467, %v4468
    %v4470 = vsel %vm283, %v4462, 0.0
    %v4471 = vadd.f32 %v4469, %v4470
    %v4472 = vadd.f32 %v2598, %v4471
    %s4473 = scalar_lea.vmem %s12, 1
    %v4474 = vld [vmem:[%s4473] sm:$0x1]
    %v4476 = vlaneseq
    %v4477 = vshrl.u32 %v4476, 7
    %v4478 = vsub.s32 0, %v4477
    %v4479 = vrot.slane %v4474, %v4478
    %v4481 = vadd.f32 %v4472, %v4479
    %s4482 = scalar_lea.vmem %s13, 1
    %v4483 = vld [vmem:[%s4482] sm:$0x1]
    %s4484 = scalar_lea.vmem %s14, 1
    %v4485 = vld [vmem:[%s4484] sm:$0x1]
    %v4486 = vsel %vm283, %v4481, 0.0
    %4487 = vadd.xlane.f32.xlu0 %v4486
    %v4488 = vpop.xlane.xlu0 %4487
    %v4489 = vmul.f32 %v4488, %v492
    %v4490 = vsub.f32 %v4481, %v4489
    %v4491 = vmul.f32 %v4490, %v4490
    %v4492 = vsel %vm283, %v4491, 0.0
    %4493 = vadd.xlane.f32.xlu0 %v4492
    %v4494 = vpop.xlane.xlu0 %4493
    %v4495 = vmul.f32 %v4494, %v492
    %v4496 = vadd.f32 %v4495, 1e-05
    %v4497 = vrsqrt.pop %v4496
    %v4498 = vmul.f32 %v4490, %v4497
    %v4500 = vlaneseq
    %v4501 = vshrl.u32 %v4500, 7
    %v4502 = vsub.s32 0, %v4501
    %v4503 = vrot.slane %v4483, %v4502
    %v4505 = vmul.f32 %v4498, %v4503
    %v4507 = vlaneseq
    %v4508 = vshrl.u32 %v4507, 7
    %v4509 = vsub.s32 0, %v4508
    %v4510 = vrot.slane %v4485, %v4509
    %v4512 = vadd.f32 %v4505, %v4510
    %s4513 = scalar_lea.vmem %s15, 32
    %v4514 = vld [vmem:[%s4513] sm:$0xff]
    %v4515 = vld [vmem:[%s4513 + $0x8] sm:$0xff]
    %v4516 = vld [vmem:[%s4513 + $0x10] sm:$0xff]
    %v4517 = vld [vmem:[%s4513 + $0x18] sm:$0xff]
    %s4518 = scalar_lea.vmem %s16, 1
    %v4519 = vld [vmem:[%s4518] sm:$0x1]
    %v4521 = vlaneseq
    %v4522 = vshrl.u32 %v4521, 7
    %v4523 = vsub.s32 0, %v4522
    %v4524 = vrot.slane %v4519, %v4523
    %v4527 = vsel %vm283, %v4512, 0
    %4529 = vmatprep.subr.mxu0 0.0
    %4530 = vmatpush1.msra.mxu0 0.0
    %4531 = vmatprep.subr.mxu0 0.0
    %4532 = vmatpush1.msra.mxu0 0.0
    %4533 = vmatprep.subr.mxu0 0.0
    %4534 = vmatpush1.msra.mxu0 0.0
    %4535 = vmatprep.subr.mxu0 0.0
    %4536 = vmatpush1.msra.mxu0 0.0
    %4537 = vmatprep.subr.mxu0 0.0
    %4538 = vmatpush1.msra.mxu0 0.0
    %4539 = vmatprep.subr.mxu0 0.0
    %4540 = vmatpush1.msra.mxu0 0.0
    %4541 = vmatprep.subr.mxu0 0.0
    %4542 = vmatpush1.msra.mxu0 0.0
    %4543 = vmatprep.subr.mxu0 0.0
    %4544 = vmatpush1.msra.mxu0 0.0
    %4545 = vmatprep.subr.mxu0 0.0
    %4546 = vmatpush1.msra.mxu0 0.0
    %4547 = vmatprep.subr.mxu0 0.0
    %4548 = vmatpush1.msra.mxu0 0.0
    %4549 = vmatprep.subr.mxu0 0.0
    %4550 = vmatpush1.msra.mxu0 0.0
    %4551 = vmatprep.subr.mxu0 0.0
    %4552 = vmatpush1.msra.mxu0 0.0
    %4553 = vmatprep.subr.mxu0 0.0
    %4554 = vmatpush1.msra.mxu0 %v4517
    %4555 = vmatprep.subr.mxu0 0.0
    %4556 = vmatpush1.msra.mxu0 %v4516
    %4557 = vmatprep.subr.mxu0 0.0
    %4558 = vmatpush1.msra.mxu0 %v4515
    %4559 = vmatprep.subr.mxu0 0.0
    %4560 = vmatpush1.msra.mxu0 %v4514
    %4561 = vmatprep.subr.mxu0 0.0
    %4562 = vmatpush2.msra.mxu0 0.0
    %4563 = vmatprep.subr.mxu0 0.0
    %4564 = vmatpush2.msra.mxu0 0.0
    %4565 = vmatprep.subr.mxu0 0.0
    %4566 = vmatpush2.msra.mxu0 0.0
    %4567 = vmatprep.subr.mxu0 0.0
    %4568 = vmatpush2.msra.mxu0 0.0
    %4569 = vmatprep.subr.mxu0 0.0
    %4570 = vmatpush2.msra.mxu0 0.0
    %4571 = vmatprep.subr.mxu0 0.0
    %4572 = vmatpush2.msra.mxu0 0.0
    %4573 = vmatprep.subr.mxu0 0.0
    %4574 = vmatpush2.msra.mxu0 0.0
    %4575 = vmatprep.subr.mxu0 0.0
    %4576 = vmatpush2.msra.mxu0 0.0
    %4577 = vmatprep.subr.mxu0 0.0
    %4578 = vmatpush2.msra.mxu0 0.0
    %4579 = vmatprep.subr.mxu0 0.0
    %4580 = vmatpush2.msra.mxu0 0.0
    %4581 = vmatprep.subr.mxu0 0.0
    %4582 = vmatpush2.msra.mxu0 0.0
    %4583 = vmatprep.subr.mxu0 0.0
    %4584 = vmatpush2.msra.mxu0 0.0
    %4585 = vmatprep.subr.mxu0 0.0
    %4586 = vmatpush2.msra.mxu0 0.0
    %4587 = vmatprep.subr.mxu0 0.0
    %4588 = vmatpush2.msra.mxu0 0.0
    %4589 = vmatprep.subr.mxu0 0.0
    %4590 = vmatpush2.msra.mxu0 0.0
    %4591 = vmatprep.subr.mxu0 0.0
    %4592 = vmatpush2.msra.mxu0 0.0
    %4593 = vmatprep.mubr.f32.mxu0 0.0
    %4594 = vmatmul.mubr.f32.gmra.mxu0 %v4527
    %v4595 = vpop.f32.mrf.mxu0
    %v4596 = vadd.f32 %v4524, %v4595
    %v4597 = vpop.f32.mrf.mxu0
    %4598 = vdwg.mxu0
    %v4599 = vmul.f32 %v4596, 0.5
    %v4600 = vmul.f32 %v4596, 0.70710677
    %vm4601 = vcmp.ge.f32.partialorder %v4600, 0.0
    %v4602 = vsel %vm4601, 1.0, -1.0
    %v4603 = vand.u32 2147483647, %v4600
    %v4604 = vmul.f32 %v4603, 0.3275911
    %v4605 = vadd.f32 %v4604, 1.0
    %v4606 = vrcp.pop %v4605
    %v4607 = vmul.f32 1.0, %v4606
    %v4608 = vmul.f32 %v4607, 1.0614054
    %v4609 = vadd.f32 %v4608, -1.4531521
    %v4610 = vmul.f32 %v4609, %v4607
    %v4611 = vadd.f32 %v4610, 1.4214138
    %v4612 = vmul.f32 %v4611, %v4607
    %v4613 = vadd.f32 %v4612, -0.28449672
    %v4614 = vmul.f32 %v4613, %v4607
    %v4615 = vadd.f32 %v4614, 0.2548296
    %v4616 = vmul.f32 %v4615, %v4607
    %v4617 = vsub.f32 0.0, %v4603
    %v4618 = vmul.f32 %v4617, %v4603
    %v4619 = vmul.f32 %v4618, 1.442695
    %v4620 = vpow.pop %v4619
    %v4621 = vmul.f32 %v4616, %v4620
    %v4622 = vsub.f32 1.0, %v4621
    %v4623 = vmul.f32 %v4602, %v4622
    %v4624 = vadd.f32 %v4623, 1.0
    %v4625 = vmul.f32 %v4599, %v4624
    %s4626 = scalar_lea.vmem %s17, 128
    %v4627 = vld [vmem:[%s4626] sm:$0xff]
    %v4628 = vld [vmem:[%s4626 + $0x8] sm:$0xff]
    %v4629 = vld [vmem:[%s4626 + $0x10] sm:$0xff]
    %v4630 = vld [vmem:[%s4626 + $0x18] sm:$0xff]
    %v4631 = vld [vmem:[%s4626 + $0x20] sm:$0xff]
    %v4632 = vld [vmem:[%s4626 + $0x28] sm:$0xff]
    %v4633 = vld [vmem:[%s4626 + $0x30] sm:$0xff]
    %v4634 = vld [vmem:[%s4626 + $0x38] sm:$0xff]
    %v4635 = vld [vmem:[%s4626 + $0x40] sm:$0xff]
    %v4636 = vld [vmem:[%s4626 + $0x48] sm:$0xff]
    %v4637 = vld [vmem:[%s4626 + $0x50] sm:$0xff]
    %v4638 = vld [vmem:[%s4626 + $0x58] sm:$0xff]
    %v4639 = vld [vmem:[%s4626 + $0x60] sm:$0xff]
    %v4640 = vld [vmem:[%s4626 + $0x68] sm:$0xff]
    %v4641 = vld [vmem:[%s4626 + $0x70] sm:$0xff]
    %v4642 = vld [vmem:[%s4626 + $0x78] sm:$0xff]
    %s4643 = scalar_lea.vmem %s18, 1
    %v4644 = vld [vmem:[%s4643] sm:$0x1]
    %v4646 = vlaneseq
    %v4647 = vshrl.u32 %v4646, 7
    %v4648 = vsub.s32 0, %v4647
    %v4649 = vrot.slane %v4644, %v4648
    %4651 = vmatprep.subr.mxu0 0.0
    %4652 = vmatpush1.msra.mxu0 %v4642
    %4653 = vmatprep.subr.mxu0 0.0
    %4654 = vmatpush1.msra.mxu0 %v4641
    %4655 = vmatprep.subr.mxu0 0.0
    %4656 = vmatpush1.msra.mxu0 %v4640
    %4657 = vmatprep.subr.mxu0 0.0
    %4658 = vmatpush1.msra.mxu0 %v4639
    %4659 = vmatprep.subr.mxu0 0.0
    %4660 = vmatpush1.msra.mxu0 %v4638
    %4661 = vmatprep.subr.mxu0 0.0
    %4662 = vmatpush1.msra.mxu0 %v4637
    %4663 = vmatprep.subr.mxu0 0.0
    %4664 = vmatpush1.msra.mxu0 %v4636
    %4665 = vmatprep.subr.mxu0 0.0
    %4666 = vmatpush1.msra.mxu0 %v4635
    %4667 = vmatprep.subr.mxu0 0.0
    %4668 = vmatpush1.msra.mxu0 %v4634
    %4669 = vmatprep.subr.mxu0 0.0
    %4670 = vmatpush1.msra.mxu0 %v4633
    %4671 = vmatprep.subr.mxu0 0.0
    %4672 = vmatpush1.msra.mxu0 %v4632
    %4673 = vmatprep.subr.mxu0 0.0
    %4674 = vmatpush1.msra.mxu0 %v4631
    %4675 = vmatprep.subr.mxu0 0.0
    %4676 = vmatpush1.msra.mxu0 %v4630
    %4677 = vmatprep.subr.mxu0 0.0
    %4678 = vmatpush1.msra.mxu0 %v4629
    %4679 = vmatprep.subr.mxu0 0.0
    %4680 = vmatpush1.msra.mxu0 %v4628
    %4681 = vmatprep.subr.mxu0 0.0
    %4682 = vmatpush1.msra.mxu0 %v4627
    %4683 = vmatprep.subr.mxu0 0.0
    %4684 = vmatpush2.msra.mxu0 0.0
    %4685 = vmatprep.subr.mxu0 0.0
    %4686 = vmatpush2.msra.mxu0 0.0
    %4687 = vmatprep.subr.mxu0 0.0
    %4688 = vmatpush2.msra.mxu0 0.0
    %4689 = vmatprep.subr.mxu0 0.0
    %4690 = vmatpush2.msra.mxu0 0.0
    %4691 = vmatprep.subr.mxu0 0.0
    %4692 = vmatpush2.msra.mxu0 0.0
    %4693 = vmatprep.subr.mxu0 0.0
    %4694 = vmatpush2.msra.mxu0 0.0
    %4695 = vmatprep.subr.mxu0 0.0
    %4696 = vmatpush2.msra.mxu0 0.0
    %4697 = vmatprep.subr.mxu0 0.0
    %4698 = vmatpush2.msra.mxu0 0.0
    %4699 = vmatprep.subr.mxu0 0.0
    %4700 = vmatpush2.msra.mxu0 0.0
    %4701 = vmatprep.subr.mxu0 0.0
    %4702 = vmatpush2.msra.mxu0 0.0
    %4703 = vmatprep.subr.mxu0 0.0
    %4704 = vmatpush2.msra.mxu0 0.0
    %4705 = vmatprep.subr.mxu0 0.0
    %4706 = vmatpush2.msra.mxu0 0.0
    %4707 = vmatprep.subr.mxu0 0.0
    %4708 = vmatpush2.msra.mxu0 0.0
    %4709 = vmatprep.subr.mxu0 0.0
    %4710 = vmatpush2.msra.mxu0 0.0
    %4711 = vmatprep.subr.mxu0 0.0
    %4712 = vmatpush2.msra.mxu0 0.0
    %4713 = vmatprep.subr.mxu0 0.0
    %4714 = vmatpush2.msra.mxu0 0.0
    %4715 = vmatprep.mubr.f32.mxu0 0.0
    %4716 = vmatmul.mubr.f32.gmra.mxu0 %v4625
    %v4717 = vpop.f32.mrf.mxu0
    %v4718 = vadd.f32 %v4649, %v4717
    %v4719 = vpop.f32.mrf.mxu0
    %4720 = vdwg.mxu0
    %v4721 = vadd.f32 %v4481, %v4718
    %v4722 = vld [vmem:[%s19] sm:$0x1]
    %v4723 = vld [vmem:[%s20] sm:$0x1]
    %v4724 = vsel %vm283, %v4721, 0.0
    %4725 = vadd.xlane.f32.xlu0 %v4724
    %v4726 = vpop.xlane.xlu0 %4725
    %v4727 = vmul.f32 %v4726, %v492
    %v4728 = vsub.f32 %v4721, %v4727
    %v4729 = vmul.f32 %v4728, %v4728
    %v4730 = vsel %vm283, %v4729, 0.0
    %4731 = vadd.xlane.f32.xlu0 %v4730
    %v4732 = vpop.xlane.xlu0 %4731
    %v4733 = vmul.f32 %v4732, %v492
    %v4734 = vadd.f32 %v4733, 1e-05
    %v4735 = vrsqrt.pop %v4734
    %v4736 = vmul.f32 %v4728, %v4735
    %v4738 = vlaneseq
    %v4739 = vshrl.u32 %v4738, 7
    %v4740 = vsub.s32 0, %v4739
    %v4741 = vrot.slane %v4722, %v4740
    %v4743 = vmul.f32 %v4736, %v4741
    %v4745 = vlaneseq
    %v4746 = vshrl.u32 %v4745, 7
    %v4747 = vsub.s32 0, %v4746
    %v4748 = vrot.slane %v4723, %v4747
    %v4750 = vadd.f32 %v4743, %v4748
    %4751 = vst.msk [vmem:[#allocation2] sm:$0xff] %vm283, %v4750
    // Predicated region
    $region86: #{_lambda_.1} parent=1 // pred_check
      _
    $region87: #{_lambda_.1} parent=1 // pred_check_branch
      %4753 = sbr.rel (0) target = $region89
    $region88: #{_lambda_.1} parent=1 // pred_region
      %s4755 = ssub.s32 128, 128
      %4756 = vsyncadd [#allocation3], %s4755
      %s4758 = sshll.u32 [#allocation2], 4
      %s4759 = int_to_ptr.vmem [resolvable:$true] %s4758
      %4761 = dma.vmem_to_hbm [thread:$0]  %s4759, 128, %s21, [#allocation3]
    $region89: #{_lambda_.1} parent=1 // pred_fallthru
      _
    // Predicated region
    $region90: #{_lambda_.1} parent=1 // pred_check
      _
    $region91: #{_lambda_.1} parent=1 // pred_check_branch
      %4763 = sbr.rel (0) target = $region93
    $region92: #{_lambda_.1} parent=1 // pred_region
      %s4765 = ssub.s32 256, 256
      %4766 = vsyncadd [#allocation5], %s4765
      %s4767 = sshll.u32 [#allocation4], 4
      %s4768 = int_to_ptr.vmem [resolvable:$true] %s4767
      %4773 = dma.vmem_to_hbm [thread:$0]  %s4768, 256, %s22, [#allocation5], 128, 128, 8
    $region93: #{_lambda_.1} parent=1 // pred_fallthru
      _
    // Predicated region
    $region94: #{_lambda_.1} parent=1 // pred_check
      _
    $region95: #{_lambda_.1} parent=1 // pred_check_branch
      %4775 = sbr.rel (0) target = $region97
    $region96: #{_lambda_.1} parent=1 // pred_region
      %4776 = dma.done [#allocation3], 128
    $region97: #{_lambda_.1} parent=1 // pred_fallthru
      _
    // Predicated region
    $region98: #{_lambda_.1} parent=1 // pred_check
      _
    $region99: #{_lambda_.1} parent=1 // pred_check_branch
      %4778 = sbr.rel (0) target = $region101
    $region100: #{_lambda_.1} parent=1 // pred_region
      %4779 = dma.done [#allocation5], 256
    $region101: #{_lambda_.1} parent=1 // pred_fallthru
      _
    %4780 = vsyncpa [#allocation3], 1
    %4781 = vsyncpa [#allocation5], 1

</llo_original>
